<compile_context>
chip_gen: v5e
topology: v5e:2x2
jax: 0.10.0
libtpu: 0.0.40
codegen_flags: <defaults>
</compile_context>

<pallas_src>
from functools import partial

import jax
import jax.numpy as jnp
from jax.experimental import pallas as pl
from jax.experimental.pallas import tpu as pltpu


def _round_up(n, m):
    return (n + m - 1) // m * m


# ----------------------------------------------------------------------------
# Fused kernel: one batch element per grid step, everything stays in VMEM.
# ----------------------------------------------------------------------------
def _fused_mfcc_kernel(
    x_ref,      # (1, H*W, 1)          f32  one batch element, row-major h*W+w
    w1_ref,     # (9, 1, 32)           f32  conv1 taps (k = dy*3+dx, cin, cout)
    b1_ref,     # (1, 32)              f32
    w2_ref,     # (9, 32, 64)          bf16 conv2 taps
    b2_ref,     # (1, 64)              f32
    w3_ref,     # (9, 64, 128)         bf16 conv3 taps
    b3_ref,     # (1, 128)             f32
    sel1_ref,   # (HW/4, HW)           f32  pool-1 0/1 row selection
    sel2_ref,   # (HW/16, HW/4)        f32  pool-2 0/1 row selection
    wfc_ref,    # (128, E)             f32
    bfc_ref,    # (1, E)               f32
    out_ref,    # (1, 1, E)            f32
    xp_ref,     # (HW + 2*pad1, 1)     f32  scratch: padded input
    a1_ref,     # (HW + 2*pad1, 32)    f32  scratch: padded conv1 output
    a2_ref,     # (HW/4 + 2*pad2, 32)  f32  scratch: padded pool1 output
    a3_ref,     # (HW/4 + 2*pad2, 64)  f32  scratch: padded conv2 output
    a4_ref,     # (HW/16 + 2*pad3, 64) f32  scratch: padded pool2 output
    *,
    H, W, use_bf16,
):
    f32 = jnp.float32
    mxu_dtype = jnp.bfloat16 if use_bf16 else jnp.float32

    w1d, w2d, w3d = W, W // 2, W // 4
    hw1, hw2, hw3 = H * W, (H // 2) * w2d, (H // 4) * w3d
    pad1 = _round_up(w1d + 1, 8)
    pad2 = _round_up(w2d + 1, 8)
    pad3 = _round_up(w3d + 1, 8)

    def store_padded(dst_ref, value, pad, hw):
        # Zero the halo rows, then write the live rows at an 8-aligned offset.
        dst_ref[...] = jnp.zeros_like(dst_ref)
        dst_ref[pl.ds(pad, hw), :] = value

    def conv3x3(src_ref, pad, wk, hw, cin, w_taps_ref, cout, on_mxu):
        # w-coordinate of every flattened row; masks taps that would cross the
        # left/right image border (top/bottom is covered by the zero halo).
        wcol = jax.lax.broadcasted_iota(jnp.int32, (hw, cin), 0) % wk
        acc = jnp.zeros((hw, cout), f32)
        for k in range(9):
            dy, dx = k // 3, k % 3
            shift = (dy - 1) * wk + (dx - 1)
            slab = src_ref[pl.ds(pad + shift, hw), :]            # (hw, cin)
            if dx == 0:
                slab = jnp.where(wcol >= 1, slab, 0.0)
            elif dx == 2:
                slab = jnp.where(wcol <= wk - 2, slab, 0.0)
            if on_mxu:
                acc = acc + jnp.dot(slab.astype(mxu_dtype), w_taps_ref[k],
                                    preferred_element_type=f32)
            else:  # Cin == 1: VPU broadcast-FMA instead of a K=9 MXU matmul.
                acc = acc + slab * w_taps_ref[k]
        return acc

    def maxpool2x2(src_ref, pad, wk, hw, sel_ref):
        m = src_ref[pl.ds(pad, hw), :]
        for off in (1, wk, wk + 1):
            m = jnp.maximum(m, src_ref[pl.ds(pad + off, hw), :])
        # Exact 0/1 row selection compacts (hw, C) -> (hw // 4, C).
        return jnp.dot(sel_ref[...], m, preferred_element_type=f32)

    # ---- conv1 (1 -> 32) + ReLU --------------------------------------------
    store_padded(xp_ref, x_ref[0], pad1, hw1)
    act1 = conv3x3(xp_ref, pad1, w1d, hw1, 1, w1_ref, 32, on_mxu=False)
    act1 = jnp.maximum(act1 + b1_ref[...], 0.0)

    # ---- maxpool 2x2 -> conv2 (32 -> 64) + ReLU ----------------------------
    store_padded(a1_ref, act1, pad1, hw1)
    pool1 = maxpool2x2(a1_ref, pad1, w1d, hw1, sel1_ref)         # (hw2, 32)
    store_padded(a2_ref, pool1, pad2, hw2)
    act2 = conv3x3(a2_ref, pad2, w2d, hw2, 32, w2_ref, 64, on_mxu=True)
    act2 = jnp.maximum(act2 + b2_ref[...], 0.0)

    # ---- maxpool 2x2 -> conv3 (64 -> 128) + ReLU ---------------------------
    store_padded(a3_ref, act2, pad2, hw2)
    pool2 = maxpool2x2(a3_ref, pad2, w2d, hw2, sel2_ref)         # (hw3, 64)
    store_padded(a4_ref, pool2, pad3, hw3)
    act3 = conv3x3(a4_ref, pad3, w3d, hw3, 64, w3_ref, 128, on_mxu=True)
    act3 = jnp.maximum(act3 + b3_ref[...], 0.0)                  # (hw3, 128)

    # ---- head: global average pool -> linear -> L2-normalize ---------------
    pooled = jnp.sum(act3, axis=0, keepdims=True) * (1.0 / hw3)  # (1, 128)
    y = jnp.dot(pooled, wfc_ref[...], preferred_element_type=f32) + bfc_ref[...]
    norm = jnp.sqrt(jnp.sum(y * y, axis=-1, keepdims=True))
    out_ref[0] = (y / jnp.maximum(norm, 1e-12)).astype(out_ref.dtype)


# ----------------------------------------------------------------------------
# Wrapper / parameters / reference.
# ----------------------------------------------------------------------------
def _pool_select(h, w):
    """0/1 matrix (h//2*w//2, h*w) selecting the top-left element of each 2x2
    window of a row-major flattened (h, w) grid."""
    ho, wo = h // 2, w // 2
    j = jnp.arange(ho * wo)
    rep = 2 * (j // wo) * w + 2 * (j % wo)
    return jax.nn.one_hot(rep, h * w, dtype=jnp.float32)


def init_params(embed_dim=64, seed=0):
    keys = jax.random.split(jax.random.PRNGKey(seed), 8)

    def conv_w(k, cin, cout):
        std = (2.0 / (9 * cin)) ** 0.5
        return std * jax.random.normal(k, (3, 3, cin, cout), dtype=jnp.float32)

    return {
        "w1": conv_w(keys[0], 1, 32),
        "b1": 0.01 * jax.random.normal(keys[1], (32,), dtype=jnp.float32),
        "w2": conv_w(keys[2], 32, 64),
        "b2": 0.01 * jax.random.normal(keys[3], (64,), dtype=jnp.float32),
        "w3": conv_w(keys[4], 64, 128),
        "b3": 0.01 * jax.random.normal(keys[5], (128,), dtype=jnp.float32),
        "wfc": (1.0 / 128.0 ** 0.5)
        * jax.random.normal(keys[6], (128, embed_dim), dtype=jnp.float32),
        "bfc": 0.01 * jax.random.normal(keys[7], (embed_dim,), dtype=jnp.float32),
    }


@partial(jax.jit, static_argnames=("use_bf16",))
def mfcc_embedding_forward(params, x_nchw, use_bf16=True):
    """x_nchw: (B, 1, H, W) float32 (PyTorch input convention)."""
    B, Cin, H, W = x_nchw.shape
    assert Cin == 1, "MFCCEmbeddingNet expects a single input channel"
    # TODO(synk): odd H/W (PyTorch MaxPool2d silently floors) is not handled by
    # the fused kernel; MFCC grids here are multiples of 4.
    assert H % 4 == 0 and W % 4 == 0, (H, W)

    E = params["wfc"].shape[1]
    w1d, w2d, w3d = W, W // 2, W // 4
    hw1, hw2, hw3 = H * W, (H // 2) * w2d, (H // 4) * w3d
    pad1 = _round_up(w1d + 1, 8)
    pad2 = _round_up(w2d + 1, 8)
    pad3 = _round_up(w3d + 1, 8)
    mxu_dtype = jnp.bfloat16 if use_bf16 else jnp.float32

    x_rows = x_nchw.reshape(B, hw1, 1)                    # row-major (h*W + w)
    w1 = params["w1"].reshape(9, 1, 32)
    w2 = params["w2"].reshape(9, 32, 64).astype(mxu_dtype)
    w3 = params["w3"].reshape(9, 64, 128).astype(mxu_dtype)
    b1 = params["b1"].reshape(1, 32)
    b2 = params["b2"].reshape(1, 64)
    b3 = params["b3"].reshape(1, 128)
    wfc = params["wfc"]
    bfc = params["bfc"].reshape(1, E)
    sel1 = _pool_select(H, W)                             # (hw2, hw1)
    sel2 = _pool_select(H // 2, W // 2)                   # (hw3, hw2)

    pin2 = lambda b: (0, 0)
    pin3 = lambda b: (0, 0, 0)

    flops = 2 * B * (9 * hw1 * 1 * 32 + 9 * hw2 * 32 * 64 + 9 * hw3 * 64 * 128
                     + hw2 * hw1 * 32 + hw3 * hw2 * 64 + 128 * E)
    bytes_accessed = int(
        x_rows.size * 4 + B * E * 4 + w1.size * 4
        + w2.size * w2.dtype.itemsize + w3.size * w3.dtype.itemsize
        + sel1.size * 4 + sel2.size * 4 + wfc.size * 4
        + (b1.size + b2.size + b3.size + bfc.size) * 4)

    out = pl.pallas_call(
        partial(_fused_mfcc_kernel, H=H, W=W, use_bf16=use_bf16),
        out_shape=jax.ShapeDtypeStruct((B, 1, E), jnp.float32),
        grid=(B,),
        in_specs=[
            pl.BlockSpec((1, hw1, 1), lambda b: (b, 0, 0)),   # x (per batch)
            pl.BlockSpec((9, 1, 32), pin3),                   # w1 (pinned)
            pl.BlockSpec((1, 32), pin2),                      # b1
            pl.BlockSpec((9, 32, 64), pin3),                  # w2
            pl.BlockSpec((1, 64), pin2),                      # b2
            pl.BlockSpec((9, 64, 128), pin3),                 # w3
            pl.BlockSpec((1, 128), pin2),                     # b3
            pl.BlockSpec((hw2, hw1), pin2),                   # pool-1 select
            pl.BlockSpec((hw3, hw2), pin2),                   # pool-2 select
            pl.BlockSpec((128, E), pin2),                     # wfc
            pl.BlockSpec((1, E), pin2),                       # bfc
        ],
        out_specs=pl.BlockSpec((1, 1, E), lambda b: (b, 0, 0)),
        scratch_shapes=[
            pltpu.VMEM((hw1 + 2 * pad1, 1), jnp.float32),     # padded input
            pltpu.VMEM((hw1 + 2 * pad1, 32), jnp.float32),    # conv1 output
            pltpu.VMEM((hw2 + 2 * pad2, 32), jnp.float32),    # pool1 output
            pltpu.VMEM((hw2 + 2 * pad2, 64), jnp.float32),    # conv2 output
            pltpu.VMEM((hw3 + 2 * pad3, 64), jnp.float32),    # pool2 output
        ],
        compiler_params=pltpu.CompilerParams(
            dimension_semantics=("parallel",),
            vmem_limit_bytes=32 * 1024 * 1024,
        ),
        cost_estimate=pl.CostEstimate(
            flops=flops, transcendentals=B, bytes_accessed=bytes_accessed),
    )(x_rows, w1, b1, w2, b2, w3, b3, sel1, sel2, wfc, bfc)

    return out.reshape(B, E)


def reference_forward(params, x_nchw):
    """Pure-JAX (XLA) reference of MFCCEmbeddingNet.forward for validation."""
    x = jnp.transpose(x_nchw, (0, 2, 3, 1))                   # NCHW -> NHWC

    def conv_relu(x, w, b):
        y = jax.lax.conv_general_dilated(
            x, w, window_strides=(1, 1), padding="SAME",
            dimension_numbers=("NHWC", "HWIO", "NHWC"))
        return jnp.maximum(y + b, 0.0)

    def pool(x):
        return jax.lax.reduce_window(x, -jnp.inf, jax.lax.max,
                                     (1, 2, 2, 1), (1, 2, 2, 1), "VALID")

    x = pool(conv_relu(x, params["w1"], params["b1"]))
    x = pool(conv_relu(x, params["w2"], params["b2"]))
    x = conv_relu(x, params["w3"], params["b3"])
    y = jnp.mean(x, axis=(1, 2)) @ params["wfc"] + params["bfc"]
    n = jnp.sqrt(jnp.sum(y * y, axis=-1, keepdims=True))
    return y / jnp.maximum(n, 1e-12)


if __name__ == "__main__":
    embed_dim = 64
    params = init_params(embed_dim=embed_dim, seed=0)
    x = jax.random.normal(jax.random.PRNGKey(0), (2, 1, 16, 16), dtype=jnp.float32)

    out = mfcc_embedding_forward(params, x)
    out = jax.block_until_ready(out)

    assert out.shape == (2, embed_dim), out.shape
    # rows must be unit-norm after F.normalize
    norms = jnp.sum(out.astype(jnp.float32) ** 2, axis=-1)
    assert bool(jnp.all(jnp.abs(norms - 1.0) < 1e-3)), norms

    # check against the pure-JAX reference (bf16 MXU operands -> loose tol)
    ref = reference_forward(params, x)
    max_err = float(jnp.max(jnp.abs(out - ref)))
    assert max_err < 5e-2, f"kernel deviates from reference: {max_err}"

    print("KERNEL_OK")
</pallas_src>

<mosaic_0001>
module attributes {stable_mosaic.version = 11 : i64} {
  func.func @_fused_mfcc_kernel(%arg0: i32, %arg1: memref<1x256x1xf32, #tpu.memory_space<vmem>>, %arg2: memref<9x1x32xf32, #tpu.memory_space<vmem>>, %arg3: memref<1x32xf32, #tpu.memory_space<vmem>>, %arg4: memref<9x32x64xbf16, #tpu.memory_space<vmem>>, %arg5: memref<1x64xf32, #tpu.memory_space<vmem>>, %arg6: memref<9x64x128xbf16, #tpu.memory_space<vmem>>, %arg7: memref<1x128xf32, #tpu.memory_space<vmem>>, %arg8: memref<64x256xf32, #tpu.memory_space<vmem>>, %arg9: memref<16x64xf32, #tpu.memory_space<vmem>>, %arg10: memref<128x64xf32, #tpu.memory_space<vmem>>, %arg11: memref<1x64xf32, #tpu.memory_space<vmem>>, %arg12: memref<1x1x64xf32, #tpu.memory_space<vmem>>, %arg13: memref<304x1xf32, #tpu.memory_space<vmem>>, %arg14: memref<304x32xf32, #tpu.memory_space<vmem>>, %arg15: memref<96x32xf32, #tpu.memory_space<vmem>>, %arg16: memref<96x64xf32, #tpu.memory_space<vmem>>, %arg17: memref<32x64xf32, #tpu.memory_space<vmem>>) attributes {dimension_semantics = [#tpu.dimension_semantics<parallel>], iteration_bounds = array<i64: 2>, scalar_prefetch = 0 : i64, scratch_operands = 5 : i64, tpu.core_type = #tpu.core_type<tc>, window_params = [{transform_indices = @transform_0, window_bounds = array<i64: 1, 256, 1>}, {pipeline_mode = #tpu.pipeline_mode<synchronous>, transform_indices = @transform_1, window_bounds = array<i64: 9, 1, 32>}, {pipeline_mode = #tpu.pipeline_mode<synchronous>, transform_indices = @transform_2, window_bounds = array<i64: 1, 32>}, {pipeline_mode = #tpu.pipeline_mode<synchronous>, transform_indices = @transform_3, window_bounds = array<i64: 9, 32, 64>}, {pipeline_mode = #tpu.pipeline_mode<synchronous>, transform_indices = @transform_4, window_bounds = array<i64: 1, 64>}, {pipeline_mode = #tpu.pipeline_mode<synchronous>, transform_indices = @transform_5, window_bounds = array<i64: 9, 64, 128>}, {pipeline_mode = #tpu.pipeline_mode<synchronous>, transform_indices = @transform_6, window_bounds = array<i64: 1, 128>}, {pipeline_mode = #tpu.pipeline_mode<synchronous>, transform_indices = @transform_7, window_bounds = array<i64: 64, 256>}, {pipeline_mode = #tpu.pipeline_mode<synchronous>, transform_indices = @transform_8, window_bounds = array<i64: 16, 64>}, {pipeline_mode = #tpu.pipeline_mode<synchronous>, transform_indices = @transform_9, window_bounds = array<i64: 128, 64>}, {pipeline_mode = #tpu.pipeline_mode<synchronous>, transform_indices = @transform_10, window_bounds = array<i64: 1, 64>}, {transform_indices = @transform_11, window_bounds = array<i64: 1, 1, 64>}]} {
    %c0 = arith.constant 0 : index
    %c0_0 = arith.constant 0 : index
    %c0_1 = arith.constant 0 : index
    %0 = vector.load %arg1[%c0, %c0_0, %c0_1] : memref<1x256x1xf32, #tpu.memory_space<vmem>>, vector<1x256x1xf32>
    %1 = vector.shape_cast %0 : vector<1x256x1xf32> to vector<256x1xf32>
    %cst = arith.constant 0.000000e+00 : f32
    %2 = vector.broadcast %cst : f32 to vector<304x1xf32>
    %c0_2 = arith.constant 0 : index
    %c0_3 = arith.constant 0 : index
    %3 = vector.load %arg13[%c0_2, %c0_3] : memref<304x1xf32, #tpu.memory_space<vmem>>, vector<304x1xf32>
    tpu.vector_store %arg13[%c0_2, %c0_3], %2 {strides = array<i32>} : memref<304x1xf32, #tpu.memory_space<vmem>>, vector<304x1xf32>,
    %c24 = arith.constant 24 : index
    %c0_4 = arith.constant 0 : index
    %4 = vector.load %arg13[%c24, %c0_4] : memref<304x1xf32, #tpu.memory_space<vmem>>, vector<256x1xf32>
    tpu.vector_store %arg13[%c24, %c0_4], %1 {strides = array<i32>} : memref<304x1xf32, #tpu.memory_space<vmem>>, vector<256x1xf32>,
    %5 = tpu.iota {dimensions = array<i32: 0>} : vector<256x1xi32>
    %c16_i32 = arith.constant 16 : i32
    %c0_i32 = arith.constant 0 : i32
    %6 = arith.cmpi eq, %c16_i32, %c0_i32 : i32
    %c1_i32 = arith.constant 1 : i32
    %7 = arith.select %6, %c1_i32, %c16_i32 : i32
    %8 = vector.broadcast %7 : i32 to vector<256x1xi32>
    %9 = arith.remsi %5, %8 : vector<256x1xi32>
    %c0_i32_5 = arith.constant 0 : i32
    %10 = vector.broadcast %c0_i32_5 : i32 to vector<256x1xi32>
    %11 = arith.cmpi ne, %9, %10 : vector<256x1xi32>
    %c0_i32_6 = arith.constant 0 : i32
    %12 = vector.broadcast %c0_i32_6 : i32 to vector<256x1xi32>
    %13 = arith.cmpi slt, %9, %12 : vector<256x1xi32>
    %c0_i32_7 = arith.constant 0 : i32
    %14 = arith.cmpi slt, %7, %c0_i32_7 : i32
    %15 = vector.broadcast %14 : i1 to vector<256x1xi1>
    %16 = vector.broadcast %15 : vector<256x1xi1> to vector<256x1xi1>
    %17 = arith.xori %13, %16 : vector<256x1xi1>
    %18 = arith.andi %17, %11 : vector<256x1xi1>
    %19 = vector.broadcast %7 : i32 to vector<256x1xi32>
    %20 = arith.addi %9, %19 : vector<256x1xi32>
    %21 = arith.select %18, %20, %9 : vector<256x1xi1>, vector<256x1xi32>
    %cst_8 = arith.constant 0.000000e+00 : f32
    %22 = vector.broadcast %cst_8 : f32 to vector<256x32xf32>
    %c7 = arith.constant 7 : index
    %c0_9 = arith.constant 0 : index
    %23 = vector.load %arg13[%c7, %c0_9] : memref<304x1xf32, #tpu.memory_space<vmem>>, vector<256x1xf32>
    %c1_i32_10 = arith.constant 1 : i32
    %24 = vector.broadcast %c1_i32_10 : i32 to vector<256x1xi32>
    %25 = arith.cmpi sge, %21, %24 : vector<256x1xi32>
    %cst_11 = arith.constant 0.000000e+00 : f32
    %26 = vector.broadcast %cst_11 : f32 to vector<256x1xf32>
    %27 = arith.select %25, %23, %26 : vector<256x1xi1>, vector<256x1xf32>
    %c0_12 = arith.constant 0 : index
    %c0_13 = arith.constant 0 : index
    %c0_14 = arith.constant 0 : index
    %28 = vector.load %arg2[%c0_12, %c0_13, %c0_14] : memref<9x1x32xf32, #tpu.memory_space<vmem>>, vector<1x1x32xf32>
    %29 = vector.shape_cast %28 : vector<1x1x32xf32> to vector<1x32xf32>
    %30 = vector.broadcast %27 : vector<256x1xf32> to vector<256x32xf32>
    %31 = vector.broadcast %29 : vector<1x32xf32> to vector<256x32xf32>
    %32 = arith.mulf %30, %31 : vector<256x32xf32>
    %33 = arith.addf %22, %32 : vector<256x32xf32>
    %c8 = arith.constant 8 : index
    %c0_15 = arith.constant 0 : index
    %34 = vector.load %arg13[%c8, %c0_15] : memref<304x1xf32, #tpu.memory_space<vmem>>, vector<256x1xf32>
    %c1 = arith.constant 1 : index
    %c0_16 = arith.constant 0 : index
    %c0_17 = arith.constant 0 : index
    %35 = vector.load %arg2[%c1, %c0_16, %c0_17] : memref<9x1x32xf32, #tpu.memory_space<vmem>>, vector<1x1x32xf32>
    %36 = vector.shape_cast %35 : vector<1x1x32xf32> to vector<1x32xf32>
    %37 = vector.broadcast %34 : vector<256x1xf32> to vector<256x32xf32>
    %38 = vector.broadcast %36 : vector<1x32xf32> to vector<256x32xf32>
    %39 = arith.mulf %37, %38 : vector<256x32xf32>
    %40 = arith.addf %33, %39 : vector<256x32xf32>
    %c9 = arith.constant 9 : index
    %c0_18 = arith.constant 0 : index
    %41 = vector.load %arg13[%c9, %c0_18] : memref<304x1xf32, #tpu.memory_space<vmem>>, vector<256x1xf32>
    %c14_i32 = arith.constant 14 : i32
    %42 = vector.broadcast %c14_i32 : i32 to vector<256x1xi32>
    %43 = arith.cmpi sle, %21, %42 : vector<256x1xi32>
    %cst_19 = arith.constant 0.000000e+00 : f32
    %44 = vector.broadcast %cst_19 : f32 to vector<256x1xf32>
    %45 = arith.select %43, %41, %44 : vector<256x1xi1>, vector<256x1xf32>
    %c2 = arith.constant 2 : index
    %c0_20 = arith.constant 0 : index
    %c0_21 = arith.constant 0 : index
    %46 = vector.load %arg2[%c2, %c0_20, %c0_21] : memref<9x1x32xf32, #tpu.memory_space<vmem>>, vector<1x1x32xf32>
    %47 = vector.shape_cast %46 : vector<1x1x32xf32> to vector<1x32xf32>
    %48 = vector.broadcast %45 : vector<256x1xf32> to vector<256x32xf32>
    %49 = vector.broadcast %47 : vector<1x32xf32> to vector<256x32xf32>
    %50 = arith.mulf %48, %49 : vector<256x32xf32>
    %51 = arith.addf %40, %50 : vector<256x32xf32>
    %c23 = arith.constant 23 : index
    %c0_22 = arith.constant 0 : index
    %52 = vector.load %arg13[%c23, %c0_22] : memref<304x1xf32, #tpu.memory_space<vmem>>, vector<256x1xf32>
    %c1_i32_23 = arith.constant 1 : i32
    %53 = vector.broadcast %c1_i32_23 : i32 to vector<256x1xi32>
    %54 = arith.cmpi sge, %21, %53 : vector<256x1xi32>
    %cst_24 = arith.constant 0.000000e+00 : f32
    %55 = vector.broadcast %cst_24 : f32 to vector<256x1xf32>
    %56 = arith.select %54, %52, %55 : vector<256x1xi1>, vector<256x1xf32>
    %c3 = arith.constant 3 : index
    %c0_25 = arith.constant 0 : index
    %c0_26 = arith.constant 0 : index
    %57 = vector.load %arg2[%c3, %c0_25, %c0_26] : memref<9x1x32xf32, #tpu.memory_space<vmem>>, vector<1x1x32xf32>
    %58 = vector.shape_cast %57 : vector<1x1x32xf32> to vector<1x32xf32>
    %59 = vector.broadcast %56 : vector<256x1xf32> to vector<256x32xf32>
    %60 = vector.broadcast %58 : vector<1x32xf32> to vector<256x32xf32>
    %61 = arith.mulf %59, %60 : vector<256x32xf32>
    %62 = arith.addf %51, %61 : vector<256x32xf32>
    %c24_27 = arith.constant 24 : index
    %c0_28 = arith.constant 0 : index
    %63 = vector.load %arg13[%c24_27, %c0_28] : memref<304x1xf32, #tpu.memory_space<vmem>>, vector<256x1xf32>
    %c4 = arith.constant 4 : index
    %c0_29 = arith.constant 0 : index
    %c0_30 = arith.constant 0 : index
    %64 = vector.load %arg2[%c4, %c0_29, %c0_30] : memref<9x1x32xf32, #tpu.memory_space<vmem>>, vector<1x1x32xf32>
    %65 = vector.shape_cast %64 : vector<1x1x32xf32> to vector<1x32xf32>
    %66 = vector.broadcast %63 : vector<256x1xf32> to vector<256x32xf32>
    %67 = vector.broadcast %65 : vector<1x32xf32> to vector<256x32xf32>
    %68 = arith.mulf %66, %67 : vector<256x32xf32>
    %69 = arith.addf %62, %68 : vector<256x32xf32>
    %c25 = arith.constant 25 : index
    %c0_31 = arith.constant 0 : index
    %70 = vector.load %arg13[%c25, %c0_31] : memref<304x1xf32, #tpu.memory_space<vmem>>, vector<256x1xf32>
    %c14_i32_32 = arith.constant 14 : i32
    %71 = vector.broadcast %c14_i32_32 : i32 to vector<256x1xi32>
    %72 = arith.cmpi sle, %21, %71 : vector<256x1xi32>
    %cst_33 = arith.constant 0.000000e+00 : f32
    %73 = vector.broadcast %cst_33 : f32 to vector<256x1xf32>
    %74 = arith.select %72, %70, %73 : vector<256x1xi1>, vector<256x1xf32>
    %c5 = arith.constant 5 : index
    %c0_34 = arith.constant 0 : index
    %c0_35 = arith.constant 0 : index
    %75 = vector.load %arg2[%c5, %c0_34, %c0_35] : memref<9x1x32xf32, #tpu.memory_space<vmem>>, vector<1x1x32xf32>
    %76 = vector.shape_cast %75 : vector<1x1x32xf32> to vector<1x32xf32>
    %77 = vector.broadcast %74 : vector<256x1xf32> to vector<256x32xf32>
    %78 = vector.broadcast %76 : vector<1x32xf32> to vector<256x32xf32>
    %79 = arith.mulf %77, %78 : vector<256x32xf32>
    %80 = arith.addf %69, %79 : vector<256x32xf32>
    %c39 = arith.constant 39 : index
    %c0_36 = arith.constant 0 : index
    %81 = vector.load %arg13[%c39, %c0_36] : memref<304x1xf32, #tpu.memory_space<vmem>>, vector<256x1xf32>
    %c1_i32_37 = arith.constant 1 : i32
    %82 = vector.broadcast %c1_i32_37 : i32 to vector<256x1xi32>
    %83 = arith.cmpi sge, %21, %82 : vector<256x1xi32>
    %cst_38 = arith.constant 0.000000e+00 : f32
    %84 = vector.broadcast %cst_38 : f32 to vector<256x1xf32>
    %85 = arith.select %83, %81, %84 : vector<256x1xi1>, vector<256x1xf32>
    %c6 = arith.constant 6 : index
    %c0_39 = arith.constant 0 : index
    %c0_40 = arith.constant 0 : index
    %86 = vector.load %arg2[%c6, %c0_39, %c0_40] : memref<9x1x32xf32, #tpu.memory_space<vmem>>, vector<1x1x32xf32>
    %87 = vector.shape_cast %86 : vector<1x1x32xf32> to vector<1x32xf32>
    %88 = vector.broadcast %85 : vector<256x1xf32> to vector<256x32xf32>
    %89 = vector.broadcast %87 : vector<1x32xf32> to vector<256x32xf32>
    %90 = arith.mulf %88, %89 : vector<256x32xf32>
    %91 = arith.addf %80, %90 : vector<256x32xf32>
    %c40 = arith.constant 40 : index
    %c0_41 = arith.constant 0 : index
    %92 = vector.load %arg13[%c40, %c0_41] : memref<304x1xf32, #tpu.memory_space<vmem>>, vector<256x1xf32>
    %c7_42 = arith.constant 7 : index
    %c0_43 = arith.constant 0 : index
    %c0_44 = arith.constant 0 : index
    %93 = vector.load %arg2[%c7_42, %c0_43, %c0_44] : memref<9x1x32xf32, #tpu.memory_space<vmem>>, vector<1x1x32xf32>
    %94 = vector.shape_cast %93 : vector<1x1x32xf32> to vector<1x32xf32>
    %95 = vector.broadcast %92 : vector<256x1xf32> to vector<256x32xf32>
    %96 = vector.broadcast %94 : vector<1x32xf32> to vector<256x32xf32>
    %97 = arith.mulf %95, %96 : vector<256x32xf32>
    %98 = arith.addf %91, %97 : vector<256x32xf32>
    %c41 = arith.constant 41 : index
    %c0_45 = arith.constant 0 : index
    %99 = vector.load %arg13[%c41, %c0_45] : memref<304x1xf32, #tpu.memory_space<vmem>>, vector<256x1xf32>
    %c14_i32_46 = arith.constant 14 : i32
    %100 = vector.broadcast %c14_i32_46 : i32 to vector<256x1xi32>
    %101 = arith.cmpi sle, %21, %100 : vector<256x1xi32>
    %cst_47 = arith.constant 0.000000e+00 : f32
    %102 = vector.broadcast %cst_47 : f32 to vector<256x1xf32>
    %103 = arith.select %101, %99, %102 : vector<256x1xi1>, vector<256x1xf32>
    %c8_48 = arith.constant 8 : index
    %c0_49 = arith.constant 0 : index
    %c0_50 = arith.constant 0 : index
    %104 = vector.load %arg2[%c8_48, %c0_49, %c0_50] : memref<9x1x32xf32, #tpu.memory_space<vmem>>, vector<1x1x32xf32>
    %105 = vector.shape_cast %104 : vector<1x1x32xf32> to vector<1x32xf32>
    %106 = vector.broadcast %103 : vector<256x1xf32> to vector<256x32xf32>
    %107 = vector.broadcast %105 : vector<1x32xf32> to vector<256x32xf32>
    %108 = arith.mulf %106, %107 : vector<256x32xf32>
    %109 = arith.addf %98, %108 : vector<256x32xf32>
    %c0_51 = arith.constant 0 : index
    %c0_52 = arith.constant 0 : index
    %110 = vector.load %arg3[%c0_51, %c0_52] : memref<1x32xf32, #tpu.memory_space<vmem>>, vector<1x32xf32>
    %111 = vector.broadcast %110 : vector<1x32xf32> to vector<256x32xf32>
    %112 = arith.addf %109, %111 : vector<256x32xf32>
    %cst_53 = arith.constant 0.000000e+00 : f32
    %113 = vector.broadcast %cst_53 : f32 to vector<256x32xf32>
    %114 = arith.maximumf %112, %113 : vector<256x32xf32>
    %cst_54 = arith.constant 0.000000e+00 : f32
    %115 = vector.broadcast %cst_54 : f32 to vector<304x32xf32>
    %c0_55 = arith.constant 0 : index
    %c0_56 = arith.constant 0 : index
    %116 = vector.load %arg14[%c0_55, %c0_56] : memref<304x32xf32, #tpu.memory_space<vmem>>, vector<304x32xf32>
    tpu.vector_store %arg14[%c0_55, %c0_56], %115 {strides = array<i32>} : memref<304x32xf32, #tpu.memory_space<vmem>>, vector<304x32xf32>,
    %c24_57 = arith.constant 24 : index
    %c0_58 = arith.constant 0 : index
    %117 = vector.load %arg14[%c24_57, %c0_58] : memref<304x32xf32, #tpu.memory_space<vmem>>, vector<256x32xf32>
    tpu.vector_store %arg14[%c24_57, %c0_58], %114 {strides = array<i32>} : memref<304x32xf32, #tpu.memory_space<vmem>>, vector<256x32xf32>,
    %c24_59 = arith.constant 24 : index
    %c0_60 = arith.constant 0 : index
    %118 = vector.load %arg14[%c24_59, %c0_60] : memref<304x32xf32, #tpu.memory_space<vmem>>, vector<256x32xf32>
    %c25_61 = arith.constant 25 : index
    %c0_62 = arith.constant 0 : index
    %119 = vector.load %arg14[%c25_61, %c0_62] : memref<304x32xf32, #tpu.memory_space<vmem>>, vector<256x32xf32>
    %120 = arith.maximumf %118, %119 : vector<256x32xf32>
    %c40_63 = arith.constant 40 : index
    %c0_64 = arith.constant 0 : index
    %121 = vector.load %arg14[%c40_63, %c0_64] : memref<304x32xf32, #tpu.memory_space<vmem>>, vector<256x32xf32>
    %122 = arith.maximumf %120, %121 : vector<256x32xf32>
    %c41_65 = arith.constant 41 : index
    %c0_66 = arith.constant 0 : index
    %123 = vector.load %arg14[%c41_65, %c0_66] : memref<304x32xf32, #tpu.memory_space<vmem>>, vector<256x32xf32>
    %124 = arith.maximumf %122, %123 : vector<256x32xf32>
    %c0_67 = arith.constant 0 : index
    %c0_68 = arith.constant 0 : index
    %125 = vector.load %arg8[%c0_67, %c0_68] : memref<64x256xf32, #tpu.memory_space<vmem>>, vector<64x256xf32>
    %cst_69 = arith.constant dense<0.000000e+00> : vector<64x32xf32>
    %126 = tpu.matmul %125, %124, %cst_69 {dimension_numbers = #tpu.dot_dimension_numbers<[1], [0], [0], [1], [0, 0, 1, 1], [], []>} : vector<64x256xf32>, vector<256x32xf32>, vector<64x32xf32> -> vector<64x32xf32>
    %cst_70 = arith.constant 0.000000e+00 : f32
    %127 = vector.broadcast %cst_70 : f32 to vector<96x32xf32>
    %c0_71 = arith.constant 0 : index
    %c0_72 = arith.constant 0 : index
    %128 = vector.load %arg15[%c0_71, %c0_72] : memref<96x32xf32, #tpu.memory_space<vmem>>, vector<96x32xf32>
    tpu.vector_store %arg15[%c0_71, %c0_72], %127 {strides = array<i32>} : memref<96x32xf32, #tpu.memory_space<vmem>>, vector<96x32xf32>,
    %c16 = arith.constant 16 : index
    %c0_73 = arith.constant 0 : index
    %129 = vector.load %arg15[%c16, %c0_73] : memref<96x32xf32, #tpu.memory_space<vmem>>, vector<64x32xf32>
    tpu.vector_store %arg15[%c16, %c0_73], %126 {strides = array<i32>} : memref<96x32xf32, #tpu.memory_space<vmem>>, vector<64x32xf32>,
    %130 = tpu.iota {dimensions = array<i32: 0>} : vector<64x32xi32>
    %c8_i32 = arith.constant 8 : i32
    %c0_i32_74 = arith.constant 0 : i32
    %131 = arith.cmpi eq, %c8_i32, %c0_i32_74 : i32
    %c1_i32_75 = arith.constant 1 : i32
    %132 = arith.select %131, %c1_i32_75, %c8_i32 : i32
    %133 = vector.broadcast %132 : i32 to vector<64x32xi32>
    %134 = arith.remsi %130, %133 : vector<64x32xi32>
    %c0_i32_76 = arith.constant 0 : i32
    %135 = vector.broadcast %c0_i32_76 : i32 to vector<64x32xi32>
    %136 = arith.cmpi ne, %134, %135 : vector<64x32xi32>
    %c0_i32_77 = arith.constant 0 : i32
    %137 = vector.broadcast %c0_i32_77 : i32 to vector<64x32xi32>
    %138 = arith.cmpi slt, %134, %137 : vector<64x32xi32>
    %c0_i32_78 = arith.constant 0 : i32
    %139 = arith.cmpi slt, %132, %c0_i32_78 : i32
    %140 = vector.broadcast %139 : i1 to vector<64x32xi1>
    %141 = vector.broadcast %140 : vector<64x32xi1> to vector<64x32xi1>
    %142 = arith.xori %138, %141 : vector<64x32xi1>
    %143 = arith.andi %142, %136 : vector<64x32xi1>
    %144 = vector.broadcast %132 : i32 to vector<64x32xi32>
    %145 = arith.addi %134, %144 : vector<64x32xi32>
    %146 = arith.select %143, %145, %134 : vector<64x32xi1>, vector<64x32xi32>
    %cst_79 = arith.constant 0.000000e+00 : f32
    %147 = vector.broadcast %cst_79 : f32 to vector<64x64xf32>
    %c7_80 = arith.constant 7 : index
    %c0_81 = arith.constant 0 : index
    %148 = vector.load %arg15[%c7_80, %c0_81] : memref<96x32xf32, #tpu.memory_space<vmem>>, vector<64x32xf32>
    %c1_i32_82 = arith.constant 1 : i32
    %149 = vector.broadcast %c1_i32_82 : i32 to vector<64x32xi32>
    %150 = arith.cmpi sge, %146, %149 : vector<64x32xi32>
    %cst_83 = arith.constant 0.000000e+00 : f32
    %151 = vector.broadcast %cst_83 : f32 to vector<64x32xf32>
    %152 = arith.select %150, %148, %151 : vector<64x32xi1>, vector<64x32xf32>
    %153 = arith.truncf %152 : vector<64x32xf32> to vector<64x32xbf16>
    %c0_84 = arith.constant 0 : index
    %c0_85 = arith.constant 0 : index
    %c0_86 = arith.constant 0 : index
    %154 = vector.load %arg4[%c0_84, %c0_85, %c0_86] : memref<9x32x64xbf16, #tpu.memory_space<vmem>>, vector<1x32x64xbf16>
    %155 = vector.shape_cast %154 : vector<1x32x64xbf16> to vector<32x64xbf16>
    %cst_87 = arith.constant dense<0.000000e+00> : vector<64x64xf32>
    %156 = tpu.matmul %153, %155, %cst_87 {dimension_numbers = #tpu.dot_dimension_numbers<[1], [0], [0], [1], [0, 0, 1, 1], [], []>} : vector<64x32xbf16>, vector<32x64xbf16>, vector<64x64xf32> -> vector<64x64xf32>
    %157 = arith.addf %147, %156 : vector<64x64xf32>
    %c8_88 = arith.constant 8 : index
    %c0_89 = arith.constant 0 : index
    %158 = vector.load %arg15[%c8_88, %c0_89] : memref<96x32xf32, #tpu.memory_space<vmem>>, vector<64x32xf32>
    %159 = arith.truncf %158 : vector<64x32xf32> to vector<64x32xbf16>
    %c1_90 = arith.constant 1 : index
    %c0_91 = arith.constant 0 : index
    %c0_92 = arith.constant 0 : index
    %160 = vector.load %arg4[%c1_90, %c0_91, %c0_92] : memref<9x32x64xbf16, #tpu.memory_space<vmem>>, vector<1x32x64xbf16>
    %161 = vector.shape_cast %160 : vector<1x32x64xbf16> to vector<32x64xbf16>
    %cst_93 = arith.constant dense<0.000000e+00> : vector<64x64xf32>
    %162 = tpu.matmul %159, %161, %cst_93 {dimension_numbers = #tpu.dot_dimension_numbers<[1], [0], [0], [1], [0, 0, 1, 1], [], []>} : vector<64x32xbf16>, vector<32x64xbf16>, vector<64x64xf32> -> vector<64x64xf32>
    %163 = arith.addf %157, %162 : vector<64x64xf32>
    %c9_94 = arith.constant 9 : index
    %c0_95 = arith.constant 0 : index
    %164 = vector.load %arg15[%c9_94, %c0_95] : memref<96x32xf32, #tpu.memory_space<vmem>>, vector<64x32xf32>
    %c6_i32 = arith.constant 6 : i32
    %165 = vector.broadcast %c6_i32 : i32 to vector<64x32xi32>
    %166 = arith.cmpi sle, %146, %165 : vector<64x32xi32>
    %cst_96 = arith.constant 0.000000e+00 : f32
    %167 = vector.broadcast %cst_96 : f32 to vector<64x32xf32>
    %168 = arith.select %166, %164, %167 : vector<64x32xi1>, vector<64x32xf32>
    %169 = arith.truncf %168 : vector<64x32xf32> to vector<64x32xbf16>
    %c2_97 = arith.constant 2 : index
    %c0_98 = arith.constant 0 : index
    %c0_99 = arith.constant 0 : index
    %170 = vector.load %arg4[%c2_97, %c0_98, %c0_99] : memref<9x32x64xbf16, #tpu.memory_space<vmem>>, vector<1x32x64xbf16>
    %171 = vector.shape_cast %170 : vector<1x32x64xbf16> to vector<32x64xbf16>
    %cst_100 = arith.constant dense<0.000000e+00> : vector<64x64xf32>
    %172 = tpu.matmul %169, %171, %cst_100 {dimension_numbers = #tpu.dot_dimension_numbers<[1], [0], [0], [1], [0, 0, 1, 1], [], []>} : vector<64x32xbf16>, vector<32x64xbf16>, vector<64x64xf32> -> vector<64x64xf32>
    %173 = arith.addf %163, %172 : vector<64x64xf32>
    %c15 = arith.constant 15 : index
    %c0_101 = arith.constant 0 : index
    %174 = vector.load %arg15[%c15, %c0_101] : memref<96x32xf32, #tpu.memory_space<vmem>>, vector<64x32xf32>
    %c1_i32_102 = arith.constant 1 : i32
    %175 = vector.broadcast %c1_i32_102 : i32 to vector<64x32xi32>
    %176 = arith.cmpi sge, %146, %175 : vector<64x32xi32>
    %cst_103 = arith.constant 0.000000e+00 : f32
    %177 = vector.broadcast %cst_103 : f32 to vector<64x32xf32>
    %178 = arith.select %176, %174, %177 : vector<64x32xi1>, vector<64x32xf32>
    %179 = arith.truncf %178 : vector<64x32xf32> to vector<64x32xbf16>
    %c3_104 = arith.constant 3 : index
    %c0_105 = arith.constant 0 : index
    %c0_106 = arith.constant 0 : index
    %180 = vector.load %arg4[%c3_104, %c0_105, %c0_106] : memref<9x32x64xbf16, #tpu.memory_space<vmem>>, vector<1x32x64xbf16>
    %181 = vector.shape_cast %180 : vector<1x32x64xbf16> to vector<32x64xbf16>
    %cst_107 = arith.constant dense<0.000000e+00> : vector<64x64xf32>
    %182 = tpu.matmul %179, %181, %cst_107 {dimension_numbers = #tpu.dot_dimension_numbers<[1], [0], [0], [1], [0, 0, 1, 1], [], []>} : vector<64x32xbf16>, vector<32x64xbf16>, vector<64x64xf32> -> vector<64x64xf32>
    %183 = arith.addf %173, %182 : vector<64x64xf32>
    %c16_108 = arith.constant 16 : index
    %c0_109 = arith.constant 0 : index
    %184 = vector.load %arg15[%c16_108, %c0_109] : memref<96x32xf32, #tpu.memory_space<vmem>>, vector<64x32xf32>
    %185 = arith.truncf %184 : vector<64x32xf32> to vector<64x32xbf16>
    %c4_110 = arith.constant 4 : index
    %c0_111 = arith.constant 0 : index
    %c0_112 = arith.constant 0 : index
    %186 = vector.load %arg4[%c4_110, %c0_111, %c0_112] : memref<9x32x64xbf16, #tpu.memory_space<vmem>>, vector<1x32x64xbf16>
    %187 = vector.shape_cast %186 : vector<1x32x64xbf16> to vector<32x64xbf16>
    %cst_113 = arith.constant dense<0.000000e+00> : vector<64x64xf32>
    %188 = tpu.matmul %185, %187, %cst_113 {dimension_numbers = #tpu.dot_dimension_numbers<[1], [0], [0], [1], [0, 0, 1, 1], [], []>} : vector<64x32xbf16>, vector<32x64xbf16>, vector<64x64xf32> -> vector<64x64xf32>
    %189 = arith.addf %183, %188 : vector<64x64xf32>
    %c17 = arith.constant 17 : index
    %c0_114 = arith.constant 0 : index
    %190 = vector.load %arg15[%c17, %c0_114] : memref<96x32xf32, #tpu.memory_space<vmem>>, vector<64x32xf32>
    %c6_i32_115 = arith.constant 6 : i32
    %191 = vector.broadcast %c6_i32_115 : i32 to vector<64x32xi32>
    %192 = arith.cmpi sle, %146, %191 : vector<64x32xi32>
    %cst_116 = arith.constant 0.000000e+00 : f32
    %193 = vector.broadcast %cst_116 : f32 to vector<64x32xf32>
    %194 = arith.select %192, %190, %193 : vector<64x32xi1>, vector<64x32xf32>
    %195 = arith.truncf %194 : vector<64x32xf32> to vector<64x32xbf16>
    %c5_117 = arith.constant 5 : index
    %c0_118 = arith.constant 0 : index
    %c0_119 = arith.constant 0 : index
    %196 = vector.load %arg4[%c5_117, %c0_118, %c0_119] : memref<9x32x64xbf16, #tpu.memory_space<vmem>>, vector<1x32x64xbf16>
    %197 = vector.shape_cast %196 : vector<1x32x64xbf16> to vector<32x64xbf16>
    %cst_120 = arith.constant dense<0.000000e+00> : vector<64x64xf32>
    %198 = tpu.matmul %195, %197, %cst_120 {dimension_numbers = #tpu.dot_dimension_numbers<[1], [0], [0], [1], [0, 0, 1, 1], [], []>} : vector<64x32xbf16>, vector<32x64xbf16>, vector<64x64xf32> -> vector<64x64xf32>
    %199 = arith.addf %189, %198 : vector<64x64xf32>
    %c23_121 = arith.constant 23 : index
    %c0_122 = arith.constant 0 : index
    %200 = vector.load %arg15[%c23_121, %c0_122] : memref<96x32xf32, #tpu.memory_space<vmem>>, vector<64x32xf32>
    %c1_i32_123 = arith.constant 1 : i32
    %201 = vector.broadcast %c1_i32_123 : i32 to vector<64x32xi32>
    %202 = arith.cmpi sge, %146, %201 : vector<64x32xi32>
    %cst_124 = arith.constant 0.000000e+00 : f32
    %203 = vector.broadcast %cst_124 : f32 to vector<64x32xf32>
    %204 = arith.select %202, %200, %203 : vector<64x32xi1>, vector<64x32xf32>
    %205 = arith.truncf %204 : vector<64x32xf32> to vector<64x32xbf16>
    %c6_125 = arith.constant 6 : index
    %c0_126 = arith.constant 0 : index
    %c0_127 = arith.constant 0 : index
    %206 = vector.load %arg4[%c6_125, %c0_126, %c0_127] : memref<9x32x64xbf16, #tpu.memory_space<vmem>>, vector<1x32x64xbf16>
    %207 = vector.shape_cast %206 : vector<1x32x64xbf16> to vector<32x64xbf16>
    %cst_128 = arith.constant dense<0.000000e+00> : vector<64x64xf32>
    %208 = tpu.matmul %205, %207, %cst_128 {dimension_numbers = #tpu.dot_dimension_numbers<[1], [0], [0], [1], [0, 0, 1, 1], [], []>} : vector<64x32xbf16>, vector<32x64xbf16>, vector<64x64xf32> -> vector<64x64xf32>
    %209 = arith.addf %199, %208 : vector<64x64xf32>
    %c24_129 = arith.constant 24 : index
    %c0_130 = arith.constant 0 : index
    %210 = vector.load %arg15[%c24_129, %c0_130] : memref<96x32xf32, #tpu.memory_space<vmem>>, vector<64x32xf32>
    %211 = arith.truncf %210 : vector<64x32xf32> to vector<64x32xbf16>
    %c7_131 = arith.constant 7 : index
    %c0_132 = arith.constant 0 : index
    %c0_133 = arith.constant 0 : index
    %212 = vector.load %arg4[%c7_131, %c0_132, %c0_133] : memref<9x32x64xbf16, #tpu.memory_space<vmem>>, vector<1x32x64xbf16>
    %213 = vector.shape_cast %212 : vector<1x32x64xbf16> to vector<32x64xbf16>
    %cst_134 = arith.constant dense<0.000000e+00> : vector<64x64xf32>
    %214 = tpu.matmul %211, %213, %cst_134 {dimension_numbers = #tpu.dot_dimension_numbers<[1], [0], [0], [1], [0, 0, 1, 1], [], []>} : vector<64x32xbf16>, vector<32x64xbf16>, vector<64x64xf32> -> vector<64x64xf32>
    %215 = arith.addf %209, %214 : vector<64x64xf32>
    %c25_135 = arith.constant 25 : index
    %c0_136 = arith.constant 0 : index
    %216 = vector.load %arg15[%c25_135, %c0_136] : memref<96x32xf32, #tpu.memory_space<vmem>>, vector<64x32xf32>
    %c6_i32_137 = arith.constant 6 : i32
    %217 = vector.broadcast %c6_i32_137 : i32 to vector<64x32xi32>
    %218 = arith.cmpi sle, %146, %217 : vector<64x32xi32>
    %cst_138 = arith.constant 0.000000e+00 : f32
    %219 = vector.broadcast %cst_138 : f32 to vector<64x32xf32>
    %220 = arith.select %218, %216, %219 : vector<64x32xi1>, vector<64x32xf32>
    %221 = arith.truncf %220 : vector<64x32xf32> to vector<64x32xbf16>
    %c8_139 = arith.constant 8 : index
    %c0_140 = arith.constant 0 : index
    %c0_141 = arith.constant 0 : index
    %222 = vector.load %arg4[%c8_139, %c0_140, %c0_141] : memref<9x32x64xbf16, #tpu.memory_space<vmem>>, vector<1x32x64xbf16>
    %223 = vector.shape_cast %222 : vector<1x32x64xbf16> to vector<32x64xbf16>
    %cst_142 = arith.constant dense<0.000000e+00> : vector<64x64xf32>
    %224 = tpu.matmul %221, %223, %cst_142 {dimension_numbers = #tpu.dot_dimension_numbers<[1], [0], [0], [1], [0, 0, 1, 1], [], []>} : vector<64x32xbf16>, vector<32x64xbf16>, vector<64x64xf32> -> vector<64x64xf32>
    %225 = arith.addf %215, %224 : vector<64x64xf32>
    %c0_143 = arith.constant 0 : index
    %c0_144 = arith.constant 0 : index
    %226 = vector.load %arg5[%c0_143, %c0_144] : memref<1x64xf32, #tpu.memory_space<vmem>>, vector<1x64xf32>
    %227 = vector.broadcast %226 : vector<1x64xf32> to vector<64x64xf32>
    %228 = arith.addf %225, %227 : vector<64x64xf32>
    %cst_145 = arith.constant 0.000000e+00 : f32
    %229 = vector.broadcast %cst_145 : f32 to vector<64x64xf32>
    %230 = arith.maximumf %228, %229 : vector<64x64xf32>
    %cst_146 = arith.constant 0.000000e+00 : f32
    %231 = vector.broadcast %cst_146 : f32 to vector<96x64xf32>
    %c0_147 = arith.constant 0 : index
    %c0_148 = arith.constant 0 : index
    %232 = vector.load %arg16[%c0_147, %c0_148] : memref<96x64xf32, #tpu.memory_space<vmem>>, vector<96x64xf32>
    tpu.vector_store %arg16[%c0_147, %c0_148], %231 {strides = array<i32>} : memref<96x64xf32, #tpu.memory_space<vmem>>, vector<96x64xf32>,
    %c16_149 = arith.constant 16 : index
    %c0_150 = arith.constant 0 : index
    %233 = vector.load %arg16[%c16_149, %c0_150] : memref<96x64xf32, #tpu.memory_space<vmem>>, vector<64x64xf32>
    tpu.vector_store %arg16[%c16_149, %c0_150], %230 {strides = array<i32>} : memref<96x64xf32, #tpu.memory_space<vmem>>, vector<64x64xf32>,
    %c16_151 = arith.constant 16 : index
    %c0_152 = arith.constant 0 : index
    %234 = vector.load %arg16[%c16_151, %c0_152] : memref<96x64xf32, #tpu.memory_space<vmem>>, vector<64x64xf32>
    %c17_153 = arith.constant 17 : index
    %c0_154 = arith.constant 0 : index
    %235 = vector.load %arg16[%c17_153, %c0_154] : memref<96x64xf32, #tpu.memory_space<vmem>>, vector<64x64xf32>
    %236 = arith.maximumf %234, %235 : vector<64x64xf32>
    %c24_155 = arith.constant 24 : index
    %c0_156 = arith.constant 0 : index
    %237 = vector.load %arg16[%c24_155, %c0_156] : memref<96x64xf32, #tpu.memory_space<vmem>>, vector<64x64xf32>
    %238 = arith.maximumf %236, %237 : vector<64x64xf32>
    %c25_157 = arith.constant 25 : index
    %c0_158 = arith.constant 0 : index
    %239 = vector.load %arg16[%c25_157, %c0_158] : memref<96x64xf32, #tpu.memory_space<vmem>>, vector<64x64xf32>
    %240 = arith.maximumf %238, %239 : vector<64x64xf32>
    %c0_159 = arith.constant 0 : index
    %c0_160 = arith.constant 0 : index
    %241 = vector.load %arg9[%c0_159, %c0_160] : memref<16x64xf32, #tpu.memory_space<vmem>>, vector<16x64xf32>
    %cst_161 = arith.constant dense<0.000000e+00> : vector<16x64xf32>
    %242 = tpu.matmul %241, %240, %cst_161 {dimension_numbers = #tpu.dot_dimension_numbers<[1], [0], [0], [1], [0, 0, 1, 1], [], []>} : vector<16x64xf32>, vector<64x64xf32>, vector<16x64xf32> -> vector<16x64xf32>
    %cst_162 = arith.constant 0.000000e+00 : f32
    %243 = vector.broadcast %cst_162 : f32 to vector<32x64xf32>
    %c0_163 = arith.constant 0 : index
    %c0_164 = arith.constant 0 : index
    %244 = vector.load %arg17[%c0_163, %c0_164] : memref<32x64xf32, #tpu.memory_space<vmem>>, vector<32x64xf32>
    tpu.vector_store %arg17[%c0_163, %c0_164], %243 {strides = array<i32>} : memref<32x64xf32, #tpu.memory_space<vmem>>, vector<32x64xf32>,
    %c8_165 = arith.constant 8 : index
    %c0_166 = arith.constant 0 : index
    %245 = vector.load %arg17[%c8_165, %c0_166] : memref<32x64xf32, #tpu.memory_space<vmem>>, vector<16x64xf32>
    tpu.vector_store %arg17[%c8_165, %c0_166], %242 {strides = array<i32>} : memref<32x64xf32, #tpu.memory_space<vmem>>, vector<16x64xf32>,
    %246 = tpu.iota {dimensions = array<i32: 0>} : vector<16x64xi32>
    %c4_i32 = arith.constant 4 : i32
    %c0_i32_167 = arith.constant 0 : i32
    %247 = arith.cmpi eq, %c4_i32, %c0_i32_167 : i32
    %c1_i32_168 = arith.constant 1 : i32
    %248 = arith.select %247, %c1_i32_168, %c4_i32 : i32
    %249 = vector.broadcast %248 : i32 to vector<16x64xi32>
    %250 = arith.remsi %246, %249 : vector<16x64xi32>
    %c0_i32_169 = arith.constant 0 : i32
    %251 = vector.broadcast %c0_i32_169 : i32 to vector<16x64xi32>
    %252 = arith.cmpi ne, %250, %251 : vector<16x64xi32>
    %c0_i32_170 = arith.constant 0 : i32
    %253 = vector.broadcast %c0_i32_170 : i32 to vector<16x64xi32>
    %254 = arith.cmpi slt, %250, %253 : vector<16x64xi32>
    %c0_i32_171 = arith.constant 0 : i32
    %255 = arith.cmpi slt, %248, %c0_i32_171 : i32
    %256 = vector.broadcast %255 : i1 to vector<16x64xi1>
    %257 = vector.broadcast %256 : vector<16x64xi1> to vector<16x64xi1>
    %258 = arith.xori %254, %257 : vector<16x64xi1>
    %259 = arith.andi %258, %252 : vector<16x64xi1>
    %260 = vector.broadcast %248 : i32 to vector<16x64xi32>
    %261 = arith.addi %250, %260 : vector<16x64xi32>
    %262 = arith.select %259, %261, %250 : vector<16x64xi1>, vector<16x64xi32>
    %cst_172 = arith.constant 0.000000e+00 : f32
    %263 = vector.broadcast %cst_172 : f32 to vector<16x128xf32>
    %c3_173 = arith.constant 3 : index
    %c0_174 = arith.constant 0 : index
    %264 = vector.load %arg17[%c3_173, %c0_174] : memref<32x64xf32, #tpu.memory_space<vmem>>, vector<16x64xf32>
    %c1_i32_175 = arith.constant 1 : i32
    %265 = vector.broadcast %c1_i32_175 : i32 to vector<16x64xi32>
    %266 = arith.cmpi sge, %262, %265 : vector<16x64xi32>
    %cst_176 = arith.constant 0.000000e+00 : f32
    %267 = vector.broadcast %cst_176 : f32 to vector<16x64xf32>
    %268 = arith.select %266, %264, %267 : vector<16x64xi1>, vector<16x64xf32>
    %269 = arith.truncf %268 : vector<16x64xf32> to vector<16x64xbf16>
    %c0_177 = arith.constant 0 : index
    %c0_178 = arith.constant 0 : index
    %c0_179 = arith.constant 0 : index
    %270 = vector.load %arg6[%c0_177, %c0_178, %c0_179] : memref<9x64x128xbf16, #tpu.memory_space<vmem>>, vector<1x64x128xbf16>
    %271 = vector.shape_cast %270 : vector<1x64x128xbf16> to vector<64x128xbf16>
    %cst_180 = arith.constant dense<0.000000e+00> : vector<16x128xf32>
    %272 = tpu.matmul %269, %271, %cst_180 {dimension_numbers = #tpu.dot_dimension_numbers<[1], [0], [0], [1], [0, 0, 1, 1], [], []>} : vector<16x64xbf16>, vector<64x128xbf16>, vector<16x128xf32> -> vector<16x128xf32>
    %273 = arith.addf %263, %272 : vector<16x128xf32>
    %c4_181 = arith.constant 4 : index
    %c0_182 = arith.constant 0 : index
    %274 = vector.load %arg17[%c4_181, %c0_182] : memref<32x64xf32, #tpu.memory_space<vmem>>, vector<16x64xf32>
    %275 = arith.truncf %274 : vector<16x64xf32> to vector<16x64xbf16>
    %c1_183 = arith.constant 1 : index
    %c0_184 = arith.constant 0 : index
    %c0_185 = arith.constant 0 : index
    %276 = vector.load %arg6[%c1_183, %c0_184, %c0_185] : memref<9x64x128xbf16, #tpu.memory_space<vmem>>, vector<1x64x128xbf16>
    %277 = vector.shape_cast %276 : vector<1x64x128xbf16> to vector<64x128xbf16>
    %cst_186 = arith.constant dense<0.000000e+00> : vector<16x128xf32>
    %278 = tpu.matmul %275, %277, %cst_186 {dimension_numbers = #tpu.dot_dimension_numbers<[1], [0], [0], [1], [0, 0, 1, 1], [], []>} : vector<16x64xbf16>, vector<64x128xbf16>, vector<16x128xf32> -> vector<16x128xf32>
    %279 = arith.addf %273, %278 : vector<16x128xf32>
    %c5_187 = arith.constant 5 : index
    %c0_188 = arith.constant 0 : index
    %280 = vector.load %arg17[%c5_187, %c0_188] : memref<32x64xf32, #tpu.memory_space<vmem>>, vector<16x64xf32>
    %c2_i32 = arith.constant 2 : i32
    %281 = vector.broadcast %c2_i32 : i32 to vector<16x64xi32>
    %282 = arith.cmpi sle, %262, %281 : vector<16x64xi32>
    %cst_189 = arith.constant 0.000000e+00 : f32
    %283 = vector.broadcast %cst_189 : f32 to vector<16x64xf32>
    %284 = arith.select %282, %280, %283 : vector<16x64xi1>, vector<16x64xf32>
    %285 = arith.truncf %284 : vector<16x64xf32> to vector<16x64xbf16>
    %c2_190 = arith.constant 2 : index
    %c0_191 = arith.constant 0 : index
    %c0_192 = arith.constant 0 : index
    %286 = vector.load %arg6[%c2_190, %c0_191, %c0_192] : memref<9x64x128xbf16, #tpu.memory_space<vmem>>, vector<1x64x128xbf16>
    %287 = vector.shape_cast %286 : vector<1x64x128xbf16> to vector<64x128xbf16>
    %cst_193 = arith.constant dense<0.000000e+00> : vector<16x128xf32>
    %288 = tpu.matmul %285, %287, %cst_193 {dimension_numbers = #tpu.dot_dimension_numbers<[1], [0], [0], [1], [0, 0, 1, 1], [], []>} : vector<16x64xbf16>, vector<64x128xbf16>, vector<16x128xf32> -> vector<16x128xf32>
    %289 = arith.addf %279, %288 : vector<16x128xf32>
    %c7_194 = arith.constant 7 : index
    %c0_195 = arith.constant 0 : index
    %290 = vector.load %arg17[%c7_194, %c0_195] : memref<32x64xf32, #tpu.memory_space<vmem>>, vector<16x64xf32>
    %c1_i32_196 = arith.constant 1 : i32
    %291 = vector.broadcast %c1_i32_196 : i32 to vector<16x64xi32>
    %292 = arith.cmpi sge, %262, %291 : vector<16x64xi32>
    %cst_197 = arith.constant 0.000000e+00 : f32
    %293 = vector.broadcast %cst_197 : f32 to vector<16x64xf32>
    %294 = arith.select %292, %290, %293 : vector<16x64xi1>, vector<16x64xf32>
    %295 = arith.truncf %294 : vector<16x64xf32> to vector<16x64xbf16>
    %c3_198 = arith.constant 3 : index
    %c0_199 = arith.constant 0 : index
    %c0_200 = arith.constant 0 : index
    %296 = vector.load %arg6[%c3_198, %c0_199, %c0_200] : memref<9x64x128xbf16, #tpu.memory_space<vmem>>, vector<1x64x128xbf16>
    %297 = vector.shape_cast %296 : vector<1x64x128xbf16> to vector<64x128xbf16>
    %cst_201 = arith.constant dense<0.000000e+00> : vector<16x128xf32>
    %298 = tpu.matmul %295, %297, %cst_201 {dimension_numbers = #tpu.dot_dimension_numbers<[1], [0], [0], [1], [0, 0, 1, 1], [], []>} : vector<16x64xbf16>, vector<64x128xbf16>, vector<16x128xf32> -> vector<16x128xf32>
    %299 = arith.addf %289, %298 : vector<16x128xf32>
    %c8_202 = arith.constant 8 : index
    %c0_203 = arith.constant 0 : index
    %300 = vector.load %arg17[%c8_202, %c0_203] : memref<32x64xf32, #tpu.memory_space<vmem>>, vector<16x64xf32>
    %301 = arith.truncf %300 : vector<16x64xf32> to vector<16x64xbf16>
    %c4_204 = arith.constant 4 : index
    %c0_205 = arith.constant 0 : index
    %c0_206 = arith.constant 0 : index
    %302 = vector.load %arg6[%c4_204, %c0_205, %c0_206] : memref<9x64x128xbf16, #tpu.memory_space<vmem>>, vector<1x64x128xbf16>
    %303 = vector.shape_cast %302 : vector<1x64x128xbf16> to vector<64x128xbf16>
    %cst_207 = arith.constant dense<0.000000e+00> : vector<16x128xf32>
    %304 = tpu.matmul %301, %303, %cst_207 {dimension_numbers = #tpu.dot_dimension_numbers<[1], [0], [0], [1], [0, 0, 1, 1], [], []>} : vector<16x64xbf16>, vector<64x128xbf16>, vector<16x128xf32> -> vector<16x128xf32>
    %305 = arith.addf %299, %304 : vector<16x128xf32>
    %c9_208 = arith.constant 9 : index
    %c0_209 = arith.constant 0 : index
    %306 = vector.load %arg17[%c9_208, %c0_209] : memref<32x64xf32, #tpu.memory_space<vmem>>, vector<16x64xf32>
    %c2_i32_210 = arith.constant 2 : i32
    %307 = vector.broadcast %c2_i32_210 : i32 to vector<16x64xi32>
    %308 = arith.cmpi sle, %262, %307 : vector<16x64xi32>
    %cst_211 = arith.constant 0.000000e+00 : f32
    %309 = vector.broadcast %cst_211 : f32 to vector<16x64xf32>
    %310 = arith.select %308, %306, %309 : vector<16x64xi1>, vector<16x64xf32>
    %311 = arith.truncf %310 : vector<16x64xf32> to vector<16x64xbf16>
    %c5_212 = arith.constant 5 : index
    %c0_213 = arith.constant 0 : index
    %c0_214 = arith.constant 0 : index
    %312 = vector.load %arg6[%c5_212, %c0_213, %c0_214] : memref<9x64x128xbf16, #tpu.memory_space<vmem>>, vector<1x64x128xbf16>
    %313 = vector.shape_cast %312 : vector<1x64x128xbf16> to vector<64x128xbf16>
    %cst_215 = arith.constant dense<0.000000e+00> : vector<16x128xf32>
    %314 = tpu.matmul %311, %313, %cst_215 {dimension_numbers = #tpu.dot_dimension_numbers<[1], [0], [0], [1], [0, 0, 1, 1], [], []>} : vector<16x64xbf16>, vector<64x128xbf16>, vector<16x128xf32> -> vector<16x128xf32>
    %315 = arith.addf %305, %314 : vector<16x128xf32>
    %c11 = arith.constant 11 : index
    %c0_216 = arith.constant 0 : index
    %316 = vector.load %arg17[%c11, %c0_216] : memref<32x64xf32, #tpu.memory_space<vmem>>, vector<16x64xf32>
    %c1_i32_217 = arith.constant 1 : i32
    %317 = vector.broadcast %c1_i32_217 : i32 to vector<16x64xi32>
    %318 = arith.cmpi sge, %262, %317 : vector<16x64xi32>
    %cst_218 = arith.constant 0.000000e+00 : f32
    %319 = vector.broadcast %cst_218 : f32 to vector<16x64xf32>
    %320 = arith.select %318, %316, %319 : vector<16x64xi1>, vector<16x64xf32>
    %321 = arith.truncf %320 : vector<16x64xf32> to vector<16x64xbf16>
    %c6_219 = arith.constant 6 : index
    %c0_220 = arith.constant 0 : index
    %c0_221 = arith.constant 0 : index
    %322 = vector.load %arg6[%c6_219, %c0_220, %c0_221] : memref<9x64x128xbf16, #tpu.memory_space<vmem>>, vector<1x64x128xbf16>
    %323 = vector.shape_cast %322 : vector<1x64x128xbf16> to vector<64x128xbf16>
    %cst_222 = arith.constant dense<0.000000e+00> : vector<16x128xf32>
    %324 = tpu.matmul %321, %323, %cst_222 {dimension_numbers = #tpu.dot_dimension_numbers<[1], [0], [0], [1], [0, 0, 1, 1], [], []>} : vector<16x64xbf16>, vector<64x128xbf16>, vector<16x128xf32> -> vector<16x128xf32>
    %325 = arith.addf %315, %324 : vector<16x128xf32>
    %c12 = arith.constant 12 : index
    %c0_223 = arith.constant 0 : index
    %326 = vector.load %arg17[%c12, %c0_223] : memref<32x64xf32, #tpu.memory_space<vmem>>, vector<16x64xf32>
    %327 = arith.truncf %326 : vector<16x64xf32> to vector<16x64xbf16>
    %c7_224 = arith.constant 7 : index
    %c0_225 = arith.constant 0 : index
    %c0_226 = arith.constant 0 : index
    %328 = vector.load %arg6[%c7_224, %c0_225, %c0_226] : memref<9x64x128xbf16, #tpu.memory_space<vmem>>, vector<1x64x128xbf16>
    %329 = vector.shape_cast %328 : vector<1x64x128xbf16> to vector<64x128xbf16>
    %cst_227 = arith.constant dense<0.000000e+00> : vector<16x128xf32>
    %330 = tpu.matmul %327, %329, %cst_227 {dimension_numbers = #tpu.dot_dimension_numbers<[1], [0], [0], [1], [0, 0, 1, 1], [], []>} : vector<16x64xbf16>, vector<64x128xbf16>, vector<16x128xf32> -> vector<16x128xf32>
    %331 = arith.addf %325, %330 : vector<16x128xf32>
    %c13 = arith.constant 13 : index
    %c0_228 = arith.constant 0 : index
    %332 = vector.load %arg17[%c13, %c0_228] : memref<32x64xf32, #tpu.memory_space<vmem>>, vector<16x64xf32>
    %c2_i32_229 = arith.constant 2 : i32
    %333 = vector.broadcast %c2_i32_229 : i32 to vector<16x64xi32>
    %334 = arith.cmpi sle, %262, %333 : vector<16x64xi32>
    %cst_230 = arith.constant 0.000000e+00 : f32
    %335 = vector.broadcast %cst_230 : f32 to vector<16x64xf32>
    %336 = arith.select %334, %332, %335 : vector<16x64xi1>, vector<16x64xf32>
    %337 = arith.truncf %336 : vector<16x64xf32> to vector<16x64xbf16>
    %c8_231 = arith.constant 8 : index
    %c0_232 = arith.constant 0 : index
    %c0_233 = arith.constant 0 : index
    %338 = vector.load %arg6[%c8_231, %c0_232, %c0_233] : memref<9x64x128xbf16, #tpu.memory_space<vmem>>, vector<1x64x128xbf16>
    %339 = vector.shape_cast %338 : vector<1x64x128xbf16> to vector<64x128xbf16>
    %cst_234 = arith.constant dense<0.000000e+00> : vector<16x128xf32>
    %340 = tpu.matmul %337, %339, %cst_234 {dimension_numbers = #tpu.dot_dimension_numbers<[1], [0], [0], [1], [0, 0, 1, 1], [], []>} : vector<16x64xbf16>, vector<64x128xbf16>, vector<16x128xf32> -> vector<16x128xf32>
    %341 = arith.addf %331, %340 : vector<16x128xf32>
    %c0_235 = arith.constant 0 : index
    %c0_236 = arith.constant 0 : index
    %342 = vector.load %arg7[%c0_235, %c0_236] : memref<1x128xf32, #tpu.memory_space<vmem>>, vector<1x128xf32>
    %343 = vector.broadcast %342 : vector<1x128xf32> to vector<16x128xf32>
    %344 = arith.addf %341, %343 : vector<16x128xf32>
    %cst_237 = arith.constant 0.000000e+00 : f32
    %345 = vector.broadcast %cst_237 : f32 to vector<16x128xf32>
    %346 = arith.maximumf %344, %345 : vector<16x128xf32>
    %cst_238 = arith.constant dense<0.000000e+00> : vector<128xf32>
    %347 = vector.multi_reduction <add>, %346, %cst_238 [0] : vector<16x128xf32> to vector<128xf32>
    %348 = vector.shape_cast %347 : vector<128xf32> to vector<1x128xf32>
    %cst_239 = arith.constant 6.250000e-02 : f32
    %349 = vector.broadcast %cst_239 : f32 to vector<1x128xf32>
    %350 = arith.mulf %348, %349 : vector<1x128xf32>
    %c0_240 = arith.constant 0 : index
    %c0_241 = arith.constant 0 : index
    %351 = vector.load %arg10[%c0_240, %c0_241] : memref<128x64xf32, #tpu.memory_space<vmem>>, vector<128x64xf32>
    %cst_242 = arith.constant dense<0.000000e+00> : vector<1x64xf32>
    %352 = tpu.matmul %350, %351, %cst_242 {dimension_numbers = #tpu.dot_dimension_numbers<[1], [0], [0], [1], [0, 0, 1, 1], [], []>} : vector<1x128xf32>, vector<128x64xf32>, vector<1x64xf32> -> vector<1x64xf32>
    %c0_243 = arith.constant 0 : index
    %c0_244 = arith.constant 0 : index
    %353 = vector.load %arg11[%c0_243, %c0_244] : memref<1x64xf32, #tpu.memory_space<vmem>>, vector<1x64xf32>
    %354 = arith.addf %352, %353 : vector<1x64xf32>
    %355 = arith.mulf %354, %354 : vector<1x64xf32>
    %cst_245 = arith.constant dense<0.000000e+00> : vector<1xf32>
    %356 = vector.multi_reduction <add>, %355, %cst_245 [1] : vector<1x64xf32> to vector<1xf32>
    %357 = vector.shape_cast %356 : vector<1xf32> to vector<1x1xf32>
    %358 = math.sqrt %357 : vector<1x1xf32>
    %cst_246 = arith.constant 9.99999996E-13 : f32
    %359 = vector.broadcast %cst_246 : f32 to vector<1x1xf32>
    %360 = arith.maximumf %358, %359 : vector<1x1xf32>
    %361 = vector.broadcast %360 : vector<1x1xf32> to vector<1x64xf32>
    %362 = arith.divf %354, %361 : vector<1x64xf32>
    %c0_247 = arith.constant 0 : index
    %c0_248 = arith.constant 0 : index
    %c0_249 = arith.constant 0 : index
    %363 = vector.load %arg12[%c0_247, %c0_248, %c0_249] : memref<1x1x64xf32, #tpu.memory_space<vmem>>, vector<1x1x64xf32>
    %364 = vector.shape_cast %363 : vector<1x1x64xf32> to vector<1x64xf32>
    %365 = vector.shape_cast %362 : vector<1x64xf32> to vector<1x1x64xf32>
    tpu.vector_store %arg12[%c0_247, %c0_248, %c0_249], %365 {strides = array<i32>} : memref<1x1x64xf32, #tpu.memory_space<vmem>>, vector<1x1x64xf32>,
    return
  }
  func.func @transform_0(%arg0: i32) -> (i32, i32, i32) {
    %c0_i32 = arith.constant 0 : i32
    %c0_i32_0 = arith.constant 0 : i32
    %c0_i32_1 = arith.constant 0 : i32
    return %arg0, %c0_i32, %c0_i32_0 : i32, i32, i32
  }
  func.func @transform_1(%arg0: i32) -> (i32, i32, i32) {
    %c0_i32 = arith.constant 0 : i32
    %c0_i32_0 = arith.constant 0 : i32
    %c0_i32_1 = arith.constant 0 : i32
    %c0_i32_2 = arith.constant 0 : i32
    return %c0_i32, %c0_i32_0, %c0_i32_1 : i32, i32, i32
  }
  func.func @transform_2(%arg0: i32) -> (i32, i32) {
    %c0_i32 = arith.constant 0 : i32
    %c0_i32_0 = arith.constant 0 : i32
    %c0_i32_1 = arith.constant 0 : i32
    return %c0_i32, %c0_i32_0 : i32, i32
  }
  func.func @transform_3(%arg0: i32) -> (i32, i32, i32) {
    %c0_i32 = arith.constant 0 : i32
    %c0_i32_0 = arith.constant 0 : i32
    %c0_i32_1 = arith.constant 0 : i32
    %c0_i32_2 = arith.constant 0 : i32
    return %c0_i32, %c0_i32_0, %c0_i32_1 : i32, i32, i32
  }
  func.func @transform_4(%arg0: i32) -> (i32, i32) {
    %c0_i32 = arith.constant 0 : i32
    %c0_i32_0 = arith.constant 0 : i32
    %c0_i32_1 = arith.constant 0 : i32
    return %c0_i32, %c0_i32_0 : i32, i32
  }
  func.func @transform_5(%arg0: i32) -> (i32, i32, i32) {
    %c0_i32 = arith.constant 0 : i32
    %c0_i32_0 = arith.constant 0 : i32
    %c0_i32_1 = arith.constant 0 : i32
    %c0_i32_2 = arith.constant 0 : i32
    return %c0_i32, %c0_i32_0, %c0_i32_1 : i32, i32, i32
  }
  func.func @transform_6(%arg0: i32) -> (i32, i32) {
    %c0_i32 = arith.constant 0 : i32
    %c0_i32_0 = arith.constant 0 : i32
    %c0_i32_1 = arith.constant 0 : i32
    return %c0_i32, %c0_i32_0 : i32, i32
  }
  func.func @transform_7(%arg0: i32) -> (i32, i32) {
    %c0_i32 = arith.constant 0 : i32
    %c0_i32_0 = arith.constant 0 : i32
    %c0_i32_1 = arith.constant 0 : i32
    return %c0_i32, %c0_i32_0 : i32, i32
  }
  func.func @transform_8(%arg0: i32) -> (i32, i32) {
    %c0_i32 = arith.constant 0 : i32
    %c0_i32_0 = arith.constant 0 : i32
    %c0_i32_1 = arith.constant 0 : i32
    return %c0_i32, %c0_i32_0 : i32, i32
  }
  func.func @transform_9(%arg0: i32) -> (i32, i32) {
    %c0_i32 = arith.constant 0 : i32
    %c0_i32_0 = arith.constant 0 : i32
    %c0_i32_1 = arith.constant 0 : i32
    return %c0_i32, %c0_i32_0 : i32, i32
  }
  func.func @transform_10(%arg0: i32) -> (i32, i32) {
    %c0_i32 = arith.constant 0 : i32
    %c0_i32_0 = arith.constant 0 : i32
    %c0_i32_1 = arith.constant 0 : i32
    return %c0_i32, %c0_i32_0 : i32, i32
  }
  func.func @transform_11(%arg0: i32) -> (i32, i32, i32) {
    %c0_i32 = arith.constant 0 : i32
    %c0_i32_0 = arith.constant 0 : i32
    %c0_i32_1 = arith.constant 0 : i32
    return %arg0, %c0_i32, %c0_i32_0 : i32, i32, i32
  }
}

</mosaic_0001>

<llo_original>
// kernel: mfcc_embedding_forward.1
$region0: #{mfcc_embedding_forward.1}
  #allocation0 [shape = 'u32[]', space=smem, size = 0x4, offset = 0x4, fixed_abs, tag = 'smem constant byte address 0x4 - core index']
  #allocation1 [shape = 'u32[72,128]{1,0:T(1,128)}', space=vmem, size = 0x9000, scoped, tag = 'internal scratch']
  #allocation2 [shape = 'f32[304,1]{1,0:T(8,128)}', space=vmem, size = 0x26000, scoped, tag = 'scratch operand']
  #allocation3 [shape = 'f32[304,32]{1,0:T(8,128)}', space=vmem, size = 0x26000, scoped, tag = 'scratch operand']
  #allocation4 [shape = 'f32[96,32]{1,0:T(8,128)}', space=vmem, size = 0xc000, scoped, tag = 'scratch operand']
  #allocation5 [shape = 'f32[96,64]{1,0:T(8,128)}', space=vmem, size = 0xc000, scoped, tag = 'scratch operand']
  #allocation6 [shape = 'f32[32,64]{1,0:T(8,128)}', space=vmem, size = 0x4000, scoped, tag = 'scratch operand']
  %s0 = inlined_call_operand.vmem [shape: f32[2,256,1], index: 0, kind: input, shape index: {}]
  %s1 = inlined_call_operand.vmem [shape: f32[9,1,32], index: 1, kind: input, shape index: {}]
  %s2 = inlined_call_operand.vmem [shape: f32[1,32], index: 2, kind: input, shape index: {}]
  %s3 = inlined_call_operand.vmem [shape: bf16[9,32,64], index: 3, kind: input, shape index: {}]
  %s4 = inlined_call_operand.vmem [shape: f32[1,64], index: 4, kind: input, shape index: {}]
  %s5 = inlined_call_operand.vmem [shape: bf16[9,64,128], index: 5, kind: input, shape index: {}]
  %s6 = inlined_call_operand.vmem [shape: f32[1,128], index: 6, kind: input, shape index: {}]
  %s7 = inlined_call_operand.vmem [shape: f32[64,256], index: 7, kind: input, shape index: {}]
  %s8 = inlined_call_operand.vmem [shape: f32[16,64], index: 8, kind: input, shape index: {}]
  %s9 = inlined_call_operand.vmem [shape: f32[128,64], index: 9, kind: input, shape index: {}]
  %s10 = inlined_call_operand.vmem [shape: f32[1,64], index: 10, kind: input, shape index: {}]
  %s11 = inlined_call_operand.hbm [shape: f32[2,1,64], index: 11, kind: output, shape index: {}]
  %s12 = sld [smem:[#allocation0]]
  $region77: #{mfcc_embedding_forward.1} parent=0
    _
  %s14 = ssub.s32 1, %s12
  %s15 = scalar_select 0, %s14, %s12
  $region1: #{mfcc_embedding_forward.1} parent=0
    #allocation7 [shape = 'u8[1024]{0}', space=vmem, size = 0x400, scoped, tag = 'output window, operand 0']
    #allocation8 [shape = 's32[2]{0}', space=sflag, size = 0x8, scoped, tag = 'scoped memory for mfcc_embedding_forward.1']
    %16 = vsyncpa [#allocation8], 0
    %s17 = scalar_lea.sflag [#allocation8], 1
    %18 = vsyncpa %s17, 0
    loop: start=0, step=1, limit=4
    $region2: #{mfcc_embedding_forward.1} parent=1 // loop_pre_header
      _
    $region3: #{mfcc_embedding_forward.1} parent=1 // loop_header
      %s20 = sphi 0, %s24
      %p21 = scmp.ge.s32.totalorder %s20, 4
      %s30 = sphi 0, %s32
      %s33 = sphi 0, %s30
      %s34 = sphi 0, %s33
      %s50 = sphi 0, %s34
      %s54 = sphi 0, %s54
      %s56 = sphi 0, %s54
      %s57 = sphi 0, %s56
      %s71 = sphi 0, %s57
      %s75 = sphi 0, %s75
      %s77 = sphi 0, %s75
      %s78 = sphi 0, %s77
      %s92 = sphi 0, %s78
      %s96 = sphi 0, %s96
      %s98 = sphi 0, %s96
      %s99 = sphi 0, %s98
      %s113 = sphi 0, %s99
      %s117 = sphi 0, %s117
      %s119 = sphi 0, %s117
      %s120 = sphi 0, %s119
      %s134 = sphi 0, %s120
      %s138 = sphi 0, %s138
      %s140 = sphi 0, %s138
      %s141 = sphi 0, %s140
      %s155 = sphi 0, %s141
      %s159 = sphi 0, %s159
      %s161 = sphi 0, %s159
      %s162 = sphi 0, %s161
      %s176 = sphi 0, %s162
      %s180 = sphi 0, %s180
      %s182 = sphi 0, %s180
      %s183 = sphi 0, %s182
      %s197 = sphi 0, %s183
      %s201 = sphi 0, %s201
      %s203 = sphi 0, %s201
      %s204 = sphi 0, %s203
      %s218 = sphi 0, %s204
      %s222 = sphi 0, %s222
      %s224 = sphi 0, %s222
      %s225 = sphi 0, %s224
      %s239 = sphi 0, %s225
      %s243 = sphi 0, %s243
      %s245 = sphi 0, %s243
      %s246 = sphi 0, %s245
      %s260 = sphi 0, %s246
      %s266 = sphi 0, %s268
      %s269 = sphi 0, %s266
      %s270 = sphi 0, %s269
      %s286 = sphi 0, %s270
    $region4: #{mfcc_embedding_forward.1} parent=1 // loop_header_branch
      %23 = sbr.rel (%p21) target = $region8
    $region5: #{mfcc_embedding_forward.1} parent=1 // loop_body
      %s25 = ssub.s32 %s20, 1
      %s26 = ssub.s32 %s20, 2
      %s27 = sadd.s32 %s20, 1
      %s28 = ssub.s32 %s20, %s27
      %p29 = scmp.eq.s32.totalorder %s28, 0
      %s31 = sadd.s32 %s30, 1
      %s32 = scalar_select %p29, %s30, %s31
      %p35 = pneg %p29
      %p36 = scmp.eq.s32.totalorder %s20, 1
      %p37 = por %p35, %p36
      %p38 = scmp.ne.s32.totalorder %s30, %s33
      %p39 = scmp.eq.s32.totalorder %s20, 0
      %p40 = por %p38, %p39
      %p41 = scmp.ne.s32.totalorder %s30, %s33
      %p42 = scmp.eq.s32.totalorder %s25, 1
      %p43 = por %p41, %p42
      %p44 = scmp.ne.s32.totalorder %s33, %s34
      %p45 = scmp.eq.s32.totalorder %s25, 0
      %p46 = por %p44, %p45
      %p47 = scmp.ne.s32.totalorder %s33, %s34
      %p48 = scmp.eq.s32.totalorder %s26, 1
      %p49 = por %p47, %p48
      %p51 = scmp.ne.s32.totalorder %s34, %s50
      %p52 = scmp.eq.s32.totalorder %s26, 0
      %p53 = por %p51, %p52
      %s55 = sadd.s32 %s54, 1
      %p58 = scmp.eq.s32.totalorder %s20, 1
      %p59 = scmp.ne.s32.totalorder %s54, %s56
      %p60 = scmp.eq.s32.totalorder %s20, 0
      %p61 = por %p59, %p60
      %p62 = scmp.ne.s32.totalorder %s54, %s56
      %p63 = scmp.eq.s32.totalorder %s25, 1
      %p64 = por %p62, %p63
      %p65 = scmp.ne.s32.totalorder %s56, %s57
      %p66 = scmp.eq.s32.totalorder %s25, 0
      %p67 = por %p65, %p66
      %p68 = scmp.ne.s32.totalorder %s56, %s57
      %p69 = scmp.eq.s32.totalorder %s26, 1
      %p70 = por %p68, %p69
      %p72 = scmp.ne.s32.totalorder %s57, %s71
      %p73 = scmp.eq.s32.totalorder %s26, 0
      %p74 = por %p72, %p73
      %s76 = sadd.s32 %s75, 1
      %p79 = scmp.eq.s32.totalorder %s20, 1
      %p80 = scmp.ne.s32.totalorder %s75, %s77
      %p81 = scmp.eq.s32.totalorder %s20, 0
      %p82 = por %p80, %p81
      %p83 = scmp.ne.s32.totalorder %s75, %s77
      %p84 = scmp.eq.s32.totalorder %s25, 1
      %p85 = por %p83, %p84
      %p86 = scmp.ne.s32.totalorder %s77, %s78
      %p87 = scmp.eq.s32.totalorder %s25, 0
      %p88 = por %p86, %p87
      %p89 = scmp.ne.s32.totalorder %s77, %s78
      %p90 = scmp.eq.s32.totalorder %s26, 1
      %p91 = por %p89, %p90
      %p93 = scmp.ne.s32.totalorder %s78, %s92
      %p94 = scmp.eq.s32.totalorder %s26, 0
      %p95 = por %p93, %p94
      %s97 = sadd.s32 %s96, 1
      %p100 = scmp.eq.s32.totalorder %s20, 1
      %p101 = scmp.ne.s32.totalorder %s96, %s98
      %p102 = scmp.eq.s32.totalorder %s20, 0
      %p103 = por %p101, %p102
      %p104 = scmp.ne.s32.totalorder %s96, %s98
      %p105 = scmp.eq.s32.totalorder %s25, 1
      %p106 = por %p104, %p105
      %p107 = scmp.ne.s32.totalorder %s98, %s99
      %p108 = scmp.eq.s32.totalorder %s25, 0
      %p109 = por %p107, %p108
      %p110 = scmp.ne.s32.totalorder %s98, %s99
      %p111 = scmp.eq.s32.totalorder %s26, 1
      %p112 = por %p110, %p111
      %p114 = scmp.ne.s32.totalorder %s99, %s113
      %p115 = scmp.eq.s32.totalorder %s26, 0
      %p116 = por %p114, %p115
      %s118 = sadd.s32 %s117, 1
      %p121 = scmp.eq.s32.totalorder %s20, 1
      %p122 = scmp.ne.s32.totalorder %s117, %s119
      %p123 = scmp.eq.s32.totalorder %s20, 0
      %p124 = por %p122, %p123
      %p125 = scmp.ne.s32.totalorder %s117, %s119
      %p126 = scmp.eq.s32.totalorder %s25, 1
      %p127 = por %p125, %p126
      %p128 = scmp.ne.s32.totalorder %s119, %s120
      %p129 = scmp.eq.s32.totalorder %s25, 0
      %p130 = por %p128, %p129
      %p131 = scmp.ne.s32.totalorder %s119, %s120
      %p132 = scmp.eq.s32.totalorder %s26, 1
      %p133 = por %p131, %p132
      %p135 = scmp.ne.s32.totalorder %s120, %s134
      %p136 = scmp.eq.s32.totalorder %s26, 0
      %p137 = por %p135, %p136
      %s139 = sadd.s32 %s138, 1
      %p142 = scmp.eq.s32.totalorder %s20, 1
      %p143 = scmp.ne.s32.totalorder %s138, %s140
      %p144 = scmp.eq.s32.totalorder %s20, 0
      %p145 = por %p143, %p144
      %p146 = scmp.ne.s32.totalorder %s138, %s140
      %p147 = scmp.eq.s32.totalorder %s25, 1
      %p148 = por %p146, %p147
      %p149 = scmp.ne.s32.totalorder %s140, %s141
      %p150 = scmp.eq.s32.totalorder %s25, 0
      %p151 = por %p149, %p150
      %p152 = scmp.ne.s32.totalorder %s140, %s141
      %p153 = scmp.eq.s32.totalorder %s26, 1
      %p154 = por %p152, %p153
      %p156 = scmp.ne.s32.totalorder %s141, %s155
      %p157 = scmp.eq.s32.totalorder %s26, 0
      %p158 = por %p156, %p157
      %s160 = sadd.s32 %s159, 1
      %p163 = scmp.eq.s32.totalorder %s20, 1
      %p164 = scmp.ne.s32.totalorder %s159, %s161
      %p165 = scmp.eq.s32.totalorder %s20, 0
      %p166 = por %p164, %p165
      %p167 = scmp.ne.s32.totalorder %s159, %s161
      %p168 = scmp.eq.s32.totalorder %s25, 1
      %p169 = por %p167, %p168
      %p170 = scmp.ne.s32.totalorder %s161, %s162
      %p171 = scmp.eq.s32.totalorder %s25, 0
      %p172 = por %p170, %p171
      %p173 = scmp.ne.s32.totalorder %s161, %s162
      %p174 = scmp.eq.s32.totalorder %s26, 1
      %p175 = por %p173, %p174
      %p177 = scmp.ne.s32.totalorder %s162, %s176
      %p178 = scmp.eq.s32.totalorder %s26, 0
      %p179 = por %p177, %p178
      %s181 = sadd.s32 %s180, 1
      %p184 = scmp.eq.s32.totalorder %s20, 1
      %p185 = scmp.ne.s32.totalorder %s180, %s182
      %p186 = scmp.eq.s32.totalorder %s20, 0
      %p187 = por %p185, %p186
      %p188 = scmp.ne.s32.totalorder %s180, %s182
      %p189 = scmp.eq.s32.totalorder %s25, 1
      %p190 = por %p188, %p189
      %p191 = scmp.ne.s32.totalorder %s182, %s183
      %p192 = scmp.eq.s32.totalorder %s25, 0
      %p193 = por %p191, %p192
      %p194 = scmp.ne.s32.totalorder %s182, %s183
      %p195 = scmp.eq.s32.totalorder %s26, 1
      %p196 = por %p194, %p195
      %p198 = scmp.ne.s32.totalorder %s183, %s197
      %p199 = scmp.eq.s32.totalorder %s26, 0
      %p200 = por %p198, %p199
      %s202 = sadd.s32 %s201, 1
      %p205 = scmp.eq.s32.totalorder %s20, 1
      %p206 = scmp.ne.s32.totalorder %s201, %s203
      %p207 = scmp.eq.s32.totalorder %s20, 0
      %p208 = por %p206, %p207
      %p209 = scmp.ne.s32.totalorder %s201, %s203
      %p210 = scmp.eq.s32.totalorder %s25, 1
      %p211 = por %p209, %p210
      %p212 = scmp.ne.s32.totalorder %s203, %s204
      %p213 = scmp.eq.s32.totalorder %s25, 0
      %p214 = por %p212, %p213
      %p215 = scmp.ne.s32.totalorder %s203, %s204
      %p216 = scmp.eq.s32.totalorder %s26, 1
      %p217 = por %p215, %p216
      %p219 = scmp.ne.s32.totalorder %s204, %s218
      %p220 = scmp.eq.s32.totalorder %s26, 0
      %p221 = por %p219, %p220
      %s223 = sadd.s32 %s222, 1
      %p226 = scmp.eq.s32.totalorder %s20, 1
      %p227 = scmp.ne.s32.totalorder %s222, %s224
      %p228 = scmp.eq.s32.totalorder %s20, 0
      %p229 = por %p227, %p228
      %p230 = scmp.ne.s32.totalorder %s222, %s224
      %p231 = scmp.eq.s32.totalorder %s25, 1
      %p232 = por %p230, %p231
      %p233 = scmp.ne.s32.totalorder %s224, %s225
      %p234 = scmp.eq.s32.totalorder %s25, 0
      %p235 = por %p233, %p234
      %p236 = scmp.ne.s32.totalorder %s224, %s225
      %p237 = scmp.eq.s32.totalorder %s26, 1
      %p238 = por %p236, %p237
      %p240 = scmp.ne.s32.totalorder %s225, %s239
      %p241 = scmp.eq.s32.totalorder %s26, 0
      %p242 = por %p240, %p241
      %s244 = sadd.s32 %s243, 1
      %p247 = scmp.eq.s32.totalorder %s20, 1
      %p248 = scmp.ne.s32.totalorder %s243, %s245
      %p249 = scmp.eq.s32.totalorder %s20, 0
      %p250 = por %p248, %p249
      %p251 = scmp.ne.s32.totalorder %s243, %s245
      %p252 = scmp.eq.s32.totalorder %s25, 1
      %p253 = por %p251, %p252
      %p254 = scmp.ne.s32.totalorder %s245, %s246
      %p255 = scmp.eq.s32.totalorder %s25, 0
      %p256 = por %p254, %p255
      %p257 = scmp.ne.s32.totalorder %s245, %s246
      %p258 = scmp.eq.s32.totalorder %s26, 1
      %p259 = por %p257, %p258
      %p261 = scmp.ne.s32.totalorder %s246, %s260
      %p262 = scmp.eq.s32.totalorder %s26, 0
      %p263 = por %p261, %p262
      %s264 = ssub.s32 %s20, %s27
      %p265 = scmp.eq.s32.totalorder %s264, 0
      %s267 = sadd.s32 %s266, 1
      %s268 = scalar_select %p265, %s266, %s267
      %p271 = pneg %p265
      %p272 = scmp.eq.s32.totalorder %s20, 1
      %p273 = por %p271, %p272
      %p274 = scmp.ne.s32.totalorder %s266, %s269
      %p275 = scmp.eq.s32.totalorder %s20, 0
      %p276 = por %p274, %p275
      %p277 = scmp.ne.s32.totalorder %s266, %s269
      %p278 = scmp.eq.s32.totalorder %s25, 1
      %p279 = por %p277, %p278
      %p280 = scmp.ne.s32.totalorder %s269, %s270
      %p281 = scmp.eq.s32.totalorder %s25, 0
      %p282 = por %p280, %p281
      %p283 = scmp.ne.s32.totalorder %s269, %s270
      %p284 = scmp.eq.s32.totalorder %s26, 1
      %p285 = por %p283, %p284
      %p287 = scmp.ne.s32.totalorder %s270, %s286
      %p288 = scmp.eq.s32.totalorder %s26, 0
      %p289 = por %p287, %p288
      %p290 = scmp.le.s32.totalorder 1, %s20
      %p291 = scmp.lt.s32.totalorder %s20, 3
      %p292 = pnand %p290, %p291
      %p293 = pneg %p292
      // Predicated region
      $region9: #{mfcc_embedding_forward.1} parent=5 // pred_check
        _
      $region10: #{mfcc_embedding_forward.1} parent=5 // pred_check_branch
        %295 = sbr.rel (%p292) target = $region12
      $region11: #{mfcc_embedding_forward.1} parent=5 // pred_region
        %s296 = ssub.s32 %s20, 1
        // Predicated region
        $region13: #{mfcc_embedding_forward.1} parent=11 // pred_check
          %p297 = pneg %p67
        $region14: #{mfcc_embedding_forward.1} parent=11 // pred_check_branch
          %299 = sbr.rel (%p297) target = $region16
        $region15: #{mfcc_embedding_forward.1} parent=11 // pred_region
          _
        $region16: #{mfcc_embedding_forward.1} parent=11 // pred_fallthru
          _
        // Predicated region
        $region17: #{mfcc_embedding_forward.1} parent=11 // pred_check
          %p300 = pneg %p88
        $region18: #{mfcc_embedding_forward.1} parent=11 // pred_check_branch
          %302 = sbr.rel (%p300) target = $region20
        $region19: #{mfcc_embedding_forward.1} parent=11 // pred_region
          _
        $region20: #{mfcc_embedding_forward.1} parent=11 // pred_fallthru
          _
        // Predicated region
        $region21: #{mfcc_embedding_forward.1} parent=11 // pred_check
          %p303 = pneg %p109
        $region22: #{mfcc_embedding_forward.1} parent=11 // pred_check_branch
          %305 = sbr.rel (%p303) target = $region24
        $region23: #{mfcc_embedding_forward.1} parent=11 // pred_region
          _
        $region24: #{mfcc_embedding_forward.1} parent=11 // pred_fallthru
          _
        // Predicated region
        $region25: #{mfcc_embedding_forward.1} parent=11 // pred_check
          %p306 = pneg %p130
        $region26: #{mfcc_embedding_forward.1} parent=11 // pred_check_branch
          %308 = sbr.rel (%p306) target = $region28
        $region27: #{mfcc_embedding_forward.1} parent=11 // pred_region
          _
        $region28: #{mfcc_embedding_forward.1} parent=11 // pred_fallthru
          _
        // Predicated region
        $region29: #{mfcc_embedding_forward.1} parent=11 // pred_check
          %p309 = pneg %p151
        $region30: #{mfcc_embedding_forward.1} parent=11 // pred_check_branch
          %311 = sbr.rel (%p309) target = $region32
        $region31: #{mfcc_embedding_forward.1} parent=11 // pred_region
          _
        $region32: #{mfcc_embedding_forward.1} parent=11 // pred_fallthru
          _
        // Predicated region
        $region33: #{mfcc_embedding_forward.1} parent=11 // pred_check
          %p312 = pneg %p172
        $region34: #{mfcc_embedding_forward.1} parent=11 // pred_check_branch
          %314 = sbr.rel (%p312) target = $region36
        $region35: #{mfcc_embedding_forward.1} parent=11 // pred_region
          _
        $region36: #{mfcc_embedding_forward.1} parent=11 // pred_fallthru
          _
        // Predicated region
        $region37: #{mfcc_embedding_forward.1} parent=11 // pred_check
          %p315 = pneg %p193
        $region38: #{mfcc_embedding_forward.1} parent=11 // pred_check_branch
          %317 = sbr.rel (%p315) target = $region40
        $region39: #{mfcc_embedding_forward.1} parent=11 // pred_region
          _
        $region40: #{mfcc_embedding_forward.1} parent=11 // pred_fallthru
          _
        // Predicated region
        $region41: #{mfcc_embedding_forward.1} parent=11 // pred_check
          %p318 = pneg %p214
        $region42: #{mfcc_embedding_forward.1} parent=11 // pred_check_branch
          %320 = sbr.rel (%p318) target = $region44
        $region43: #{mfcc_embedding_forward.1} parent=11 // pred_region
          _
        $region44: #{mfcc_embedding_forward.1} parent=11 // pred_fallthru
          _
        // Predicated region
        $region45: #{mfcc_embedding_forward.1} parent=11 // pred_check
          %p321 = pneg %p235
        $region46: #{mfcc_embedding_forward.1} parent=11 // pred_check_branch
          %323 = sbr.rel (%p321) target = $region48
        $region47: #{mfcc_embedding_forward.1} parent=11 // pred_region
          _
        $region48: #{mfcc_embedding_forward.1} parent=11 // pred_fallthru
          _
        // Predicated region
        $region49: #{mfcc_embedding_forward.1} parent=11 // pred_check
          %p324 = pneg %p256
        $region50: #{mfcc_embedding_forward.1} parent=11 // pred_check_branch
          %326 = sbr.rel (%p324) target = $region52
        $region51: #{mfcc_embedding_forward.1} parent=11 // pred_region
          _
        $region52: #{mfcc_embedding_forward.1} parent=11 // pred_fallthru
          _
      $region12: #{mfcc_embedding_forward.1} parent=5 // pred_fallthru
        _
      %p327 = scmp.lt.s32.totalorder %s20, 2
      // Predicated region
      $region53: #{mfcc_embedding_forward.1} parent=5 // pred_check
        %p328 = pneg %p327
      $region54: #{mfcc_embedding_forward.1} parent=5 // pred_check_branch
        %330 = sbr.rel (%p328) target = $region56
      $region55: #{mfcc_embedding_forward.1} parent=5 // pred_region
        // Predicated region
        $region57: #{mfcc_embedding_forward.1} parent=55 // pred_check
          %p331 = pneg %p40
        $region58: #{mfcc_embedding_forward.1} parent=55 // pred_check_branch
          %333 = sbr.rel (%p331) target = $region60
        $region59: #{mfcc_embedding_forward.1} parent=55 // pred_region
          %p334 = scmp.lt.s32.totalorder %s20, 1
          %s335 = scalar_select %p334, %s20, 1
          %s336 = smul.addr %s335, 32
          %s337 = smul.addr %s336, 8
          %s338 = scalar_lea.vmem %s0, %s337
        $region60: #{mfcc_embedding_forward.1} parent=55 // pred_fallthru
          _
      $region56: #{mfcc_embedding_forward.1} parent=5 // pred_fallthru
        _
      %p339 = scmp.le.s32.totalorder 1, %s20
      %p340 = scmp.lt.s32.totalorder %s20, 3
      %p341 = pnand %p339, %p340
      %p342 = pneg %p341
      // Predicated region
      $region61: #{mfcc_embedding_forward.1} parent=5 // pred_check
        _
      $region62: #{mfcc_embedding_forward.1} parent=5 // pred_check_branch
        %344 = sbr.rel (%p341) target = $region64
      $region63: #{mfcc_embedding_forward.1} parent=5 // pred_region
        %s345 = ssub.s32 %s20, 1
        %p346 = scmp.lt.s32.totalorder %s25, 1
        %s347 = scalar_select %p346, %s25, 1
        %s348 = smul.addr %s347, 32
        %s349 = smul.addr %s348, 8
        %s350 = scalar_lea.vmem %s0, %s349
        %p351 = pneg %p46
        %p352 = pneg %p43
        %p353 = pneg %p67
        %p354 = pneg %p64
        %p355 = pneg %p88
        %p356 = pneg %p85
        %p357 = pneg %p109
        %p358 = pneg %p106
        %p359 = pneg %p130
        %p360 = pneg %p127
        %p361 = pneg %p151
        %p362 = pneg %p148
        %p363 = pneg %p172
        %p364 = pneg %p169
        %p365 = pneg %p193
        %p366 = pneg %p190
        %p367 = pneg %p214
        %p368 = pneg %p211
        %p369 = pneg %p235
        %p370 = pneg %p232
        %p371 = pneg %p256
        %p372 = pneg %p253
        %p373 = pneg %p282
        %p374 = pneg %p279
        %s375 = sand.u32 %s269, 1
        %s376 = scalar_lea.sflag [#allocation8], %s375
        %s377 = sand.u32 %s269, 1
        %s378 = scalar_lea.vmem [#allocation7], %s377
        %p379 = scmp.lt.s32.totalorder %s25, 1
        %s380 = scalar_select %p379, %s25, 1
        %s381 = smul.addr %s380, 32
        %s382 = smul.addr %s381, 8
        %s383 = scalar_lea.vmem %s0, %s382
        %v385 = vld [vmem:[%s383] sm:$0xff]
        %v386 = vld [vmem:[%s383 + $0x8] sm:$0xff]
        %v387 = vld [vmem:[%s383 + $0x10] sm:$0xff]
        %v388 = vld [vmem:[%s383 + $0x18] sm:$0xff]
        %v389 = vld [vmem:[%s383 + $0x20] sm:$0xff]
        %v390 = vld [vmem:[%s383 + $0x28] sm:$0xff]
        %v391 = vld [vmem:[%s383 + $0x30] sm:$0xff]
        %v392 = vld [vmem:[%s383 + $0x38] sm:$0xff]
        %v393 = vld [vmem:[%s383 + $0x40] sm:$0xff]
        %v394 = vld [vmem:[%s383 + $0x48] sm:$0xff]
        %v395 = vld [vmem:[%s383 + $0x50] sm:$0xff]
        %v396 = vld [vmem:[%s383 + $0x58] sm:$0xff]
        %v397 = vld [vmem:[%s383 + $0x60] sm:$0xff]
        %v398 = vld [vmem:[%s383 + $0x68] sm:$0xff]
        %v399 = vld [vmem:[%s383 + $0x70] sm:$0xff]
        %v400 = vld [vmem:[%s383 + $0x78] sm:$0xff]
        %v401 = vld [vmem:[%s383 + $0x80] sm:$0xff]
        %v402 = vld [vmem:[%s383 + $0x88] sm:$0xff]
        %v403 = vld [vmem:[%s383 + $0x90] sm:$0xff]
        %v404 = vld [vmem:[%s383 + $0x98] sm:$0xff]
        %v405 = vld [vmem:[%s383 + $0xa0] sm:$0xff]
        %v406 = vld [vmem:[%s383 + $0xa8] sm:$0xff]
        %v407 = vld [vmem:[%s383 + $0xb0] sm:$0xff]
        %v408 = vld [vmem:[%s383 + $0xb8] sm:$0xff]
        %v409 = vld [vmem:[%s383 + $0xc0] sm:$0xff]
        %v410 = vld [vmem:[%s383 + $0xc8] sm:$0xff]
        %v411 = vld [vmem:[%s383 + $0xd0] sm:$0xff]
        %v412 = vld [vmem:[%s383 + $0xd8] sm:$0xff]
        %v413 = vld [vmem:[%s383 + $0xe0] sm:$0xff]
        %v414 = vld [vmem:[%s383 + $0xe8] sm:$0xff]
        %v415 = vld [vmem:[%s383 + $0xf0] sm:$0xff]
        %v416 = vld [vmem:[%s383 + $0xf8] sm:$0xff]
        %vm417 = vcmask 7168
        %418 = vst.msk [vmem:[#allocation2] sm:$0xff] %vm417, 0.0
        %419 = vst.msk [vmem:[#allocation2 + $0x8] sm:$0xff] %vm417, 0.0
        %420 = vst.msk [vmem:[#allocation2 + $0x10] sm:$0xff] %vm417, 0.0
        %421 = vst.msk [vmem:[#allocation2 + $0x18] sm:$0xff] %vm417, 0.0
        %422 = vst.msk [vmem:[#allocation2 + $0x20] sm:$0xff] %vm417, 0.0
        %423 = vst.msk [vmem:[#allocation2 + $0x28] sm:$0xff] %vm417, 0.0
        %424 = vst.msk [vmem:[#allocation2 + $0x30] sm:$0xff] %vm417, 0.0
        %425 = vst.msk [vmem:[#allocation2 + $0x38] sm:$0xff] %vm417, 0.0
        %426 = vst.msk [vmem:[#allocation2 + $0x40] sm:$0xff] %vm417, 0.0
        %427 = vst.msk [vmem:[#allocation2 + $0x48] sm:$0xff] %vm417, 0.0
        %428 = vst.msk [vmem:[#allocation2 + $0x50] sm:$0xff] %vm417, 0.0
        %429 = vst.msk [vmem:[#allocation2 + $0x58] sm:$0xff] %vm417, 0.0
        %430 = vst.msk [vmem:[#allocation2 + $0x60] sm:$0xff] %vm417, 0.0
        %431 = vst.msk [vmem:[#allocation2 + $0x68] sm:$0xff] %vm417, 0.0
        %432 = vst.msk [vmem:[#allocation2 + $0x70] sm:$0xff] %vm417, 0.0
        %433 = vst.msk [vmem:[#allocation2 + $0x78] sm:$0xff] %vm417, 0.0
        %434 = vst.msk [vmem:[#allocation2 + $0x80] sm:$0xff] %vm417, 0.0
        %435 = vst.msk [vmem:[#allocation2 + $0x88] sm:$0xff] %vm417, 0.0
        %436 = vst.msk [vmem:[#allocation2 + $0x90] sm:$0xff] %vm417, 0.0
        %437 = vst.msk [vmem:[#allocation2 + $0x98] sm:$0xff] %vm417, 0.0
        %438 = vst.msk [vmem:[#allocation2 + $0xa0] sm:$0xff] %vm417, 0.0
        %439 = vst.msk [vmem:[#allocation2 + $0xa8] sm:$0xff] %vm417, 0.0
        %440 = vst.msk [vmem:[#allocation2 + $0xb0] sm:$0xff] %vm417, 0.0
        %441 = vst.msk [vmem:[#allocation2 + $0xb8] sm:$0xff] %vm417, 0.0
        %442 = vst.msk [vmem:[#allocation2 + $0xc0] sm:$0xff] %vm417, 0.0
        %443 = vst.msk [vmem:[#allocation2 + $0xc8] sm:$0xff] %vm417, 0.0
        %444 = vst.msk [vmem:[#allocation2 + $0xd0] sm:$0xff] %vm417, 0.0
        %445 = vst.msk [vmem:[#allocation2 + $0xd8] sm:$0xff] %vm417, 0.0
        %446 = vst.msk [vmem:[#allocation2 + $0xe0] sm:$0xff] %vm417, 0.0
        %447 = vst.msk [vmem:[#allocation2 + $0xe8] sm:$0xff] %vm417, 0.0
        %448 = vst.msk [vmem:[#allocation2 + $0xf0] sm:$0xff] %vm417, 0.0
        %449 = vst.msk [vmem:[#allocation2 + $0xf8] sm:$0xff] %vm417, 0.0
        %450 = vst.msk [vmem:[#allocation2 + $0x100] sm:$0xff] %vm417, 0.0
        %451 = vst.msk [vmem:[#allocation2 + $0x108] sm:$0xff] %vm417, 0.0
        %452 = vst.msk [vmem:[#allocation2 + $0x110] sm:$0xff] %vm417, 0.0
        %453 = vst.msk [vmem:[#allocation2 + $0x118] sm:$0xff] %vm417, 0.0
        %454 = vst.msk [vmem:[#allocation2 + $0x120] sm:$0xff] %vm417, 0.0
        %455 = vst.msk [vmem:[#allocation2 + $0x128] sm:$0xff] %vm417, 0.0
        %456 = vst.msk [vmem:[#allocation2 + $0x18] sm:$0xff] %vm417, %v385
        %457 = vst.msk [vmem:[#allocation2 + $0x20] sm:$0xff] %vm417, %v386
        %458 = vst.msk [vmem:[#allocation2 + $0x28] sm:$0xff] %vm417, %v387
        %459 = vst.msk [vmem:[#allocation2 + $0x30] sm:$0xff] %vm417, %v388
        %460 = vst.msk [vmem:[#allocation2 + $0x38] sm:$0xff] %vm417, %v389
        %461 = vst.msk [vmem:[#allocation2 + $0x40] sm:$0xff] %vm417, %v390
        %462 = vst.msk [vmem:[#allocation2 + $0x48] sm:$0xff] %vm417, %v391
        %463 = vst.msk [vmem:[#allocation2 + $0x50] sm:$0xff] %vm417, %v392
        %464 = vst.msk [vmem:[#allocation2 + $0x58] sm:$0xff] %vm417, %v393
        %465 = vst.msk [vmem:[#allocation2 + $0x60] sm:$0xff] %vm417, %v394
        %466 = vst.msk [vmem:[#allocation2 + $0x68] sm:$0xff] %vm417, %v395
        %467 = vst.msk [vmem:[#allocation2 + $0x70] sm:$0xff] %vm417, %v396
        %468 = vst.msk [vmem:[#allocation2 + $0x78] sm:$0xff] %vm417, %v397
        %469 = vst.msk [vmem:[#allocation2 + $0x80] sm:$0xff] %vm417, %v398
        %470 = vst.msk [vmem:[#allocation2 + $0x88] sm:$0xff] %vm417, %v399
        %471 = vst.msk [vmem:[#allocation2 + $0x90] sm:$0xff] %vm417, %v400
        %472 = vst.msk [vmem:[#allocation2 + $0x98] sm:$0xff] %vm417, %v401
        %473 = vst.msk [vmem:[#allocation2 + $0xa0] sm:$0xff] %vm417, %v402
        %474 = vst.msk [vmem:[#allocation2 + $0xa8] sm:$0xff] %vm417, %v403
        %475 = vst.msk [vmem:[#allocation2 + $0xb0] sm:$0xff] %vm417, %v404
        %476 = vst.msk [vmem:[#allocation2 + $0xb8] sm:$0xff] %vm417, %v405
        %477 = vst.msk [vmem:[#allocation2 + $0xc0] sm:$0xff] %vm417, %v406
        %478 = vst.msk [vmem:[#allocation2 + $0xc8] sm:$0xff] %vm417, %v407
        %479 = vst.msk [vmem:[#allocation2 + $0xd0] sm:$0xff] %vm417, %v408
        %480 = vst.msk [vmem:[#allocation2 + $0xd8] sm:$0xff] %vm417, %v409
        %481 = vst.msk [vmem:[#allocation2 + $0xe0] sm:$0xff] %vm417, %v410
        %482 = vst.msk [vmem:[#allocation2 + $0xe8] sm:$0xff] %vm417, %v411
        %483 = vst.msk [vmem:[#allocation2 + $0xf0] sm:$0xff] %vm417, %v412
        %484 = vst.msk [vmem:[#allocation2 + $0xf8] sm:$0xff] %vm417, %v413
        %485 = vst.msk [vmem:[#allocation2 + $0x100] sm:$0xff] %vm417, %v414
        %486 = vst.msk [vmem:[#allocation2 + $0x108] sm:$0xff] %vm417, %v415
        %487 = vst.msk [vmem:[#allocation2 + $0x110] sm:$0xff] %vm417, %v416
        %v488 = vlaneseq
        %v489 = vshrl.u32 %v488, 7
        %v490 = vadd.s32 %v489, 8
        %v491 = vadd.s32 %v489, 16
        %v492 = vadd.s32 %v489, 24
        %v493 = vadd.s32 %v489, 32
        %v494 = vadd.s32 %v489, 40
        %v495 = vadd.s32 %v489, 48
        %v496 = vadd.s32 %v489, 56
        %v497 = vadd.s32 %v489, 64
        %v498 = vadd.s32 %v489, 72
        %v499 = vadd.s32 %v489, 80
        %v500 = vadd.s32 %v489, 88
        %v501 = vadd.s32 %v489, 96
        %v502 = vadd.s32 %v489, 104
        %v503 = vadd.s32 %v489, 112
        %v504 = vadd.s32 %v489, 120
        %v505 = vadd.s32 %v489, 128
        %v506 = vadd.s32 %v489, 136
        %v507 = vadd.s32 %v489, 144
        %v508 = vadd.s32 %v489, 152
        %v509 = vadd.s32 %v489, 160
        %v510 = vadd.s32 %v489, 168
        %v511 = vadd.s32 %v489, 176
        %v512 = vadd.s32 %v489, 184
        %v513 = vadd.s32 %v489, 192
        %v514 = vadd.s32 %v489, 200
        %v515 = vadd.s32 %v489, 208
        %v516 = vadd.s32 %v489, 216
        %v517 = vadd.s32 %v489, 224
        %v518 = vadd.s32 %v489, 232
        %v519 = vadd.s32 %v489, 240
        %v520 = vadd.s32 %v489, 248
        %vm521 = vcmp.lt.s32.totalorder %v489, 0
        %v522 = vsub.s32 0, %v489
        %v523 = vsel %vm521, %v522, %v489
        %v524 = vshrl.u32 %v523, 4
        %v525 = vand.u32 %v523, 15
        %v526 = vsub.s32 0, %v525
        %v527 = vsel %vm521, %v526, %v525
        %vm528 = vcmp.lt.s32.totalorder %v490, 0
        %v529 = vsub.s32 0, %v490
        %v530 = vsel %vm528, %v529, %v490
        %v531 = vshrl.u32 %v530, 4
        %v532 = vand.u32 %v530, 15
        %v533 = vsub.s32 0, %v532
        %v534 = vsel %vm528, %v533, %v532
        %vm535 = vcmp.lt.s32.totalorder %v491, 0
        %v536 = vsub.s32 0, %v491
        %v537 = vsel %vm535, %v536, %v491
        %v538 = vshrl.u32 %v537, 4
        %v539 = vand.u32 %v537, 15
        %v540 = vsub.s32 0, %v539
        %v541 = vsel %vm535, %v540, %v539
        %vm542 = vcmp.lt.s32.totalorder %v492, 0
        %v543 = vsub.s32 0, %v492
        %v544 = vsel %vm542, %v543, %v492
        %v545 = vshrl.u32 %v544, 4
        %v546 = vand.u32 %v544, 15
        %v547 = vsub.s32 0, %v546
        %v548 = vsel %vm542, %v547, %v546
        %vm549 = vcmp.lt.s32.totalorder %v493, 0
        %v550 = vsub.s32 0, %v493
        %v551 = vsel %vm549, %v550, %v493
        %v552 = vshrl.u32 %v551, 4
        %v553 = vand.u32 %v551, 15
        %v554 = vsub.s32 0, %v553
        %v555 = vsel %vm549, %v554, %v553
        %vm556 = vcmp.lt.s32.totalorder %v494, 0
        %v557 = vsub.s32 0, %v494
        %v558 = vsel %vm556, %v557, %v494
        %v559 = vshrl.u32 %v558, 4
        %v560 = vand.u32 %v558, 15
        %v561 = vsub.s32 0, %v560
        %v562 = vsel %vm556, %v561, %v560
        %vm563 = vcmp.lt.s32.totalorder %v495, 0
        %v564 = vsub.s32 0, %v495
        %v565 = vsel %vm563, %v564, %v495
        %v566 = vshrl.u32 %v565, 4
        %v567 = vand.u32 %v565, 15
        %v568 = vsub.s32 0, %v567
        %v569 = vsel %vm563, %v568, %v567
        %vm570 = vcmp.lt.s32.totalorder %v496, 0
        %v571 = vsub.s32 0, %v496
        %v572 = vsel %vm570, %v571, %v496
        %v573 = vshrl.u32 %v572, 4
        %v574 = vand.u32 %v572, 15
        %v575 = vsub.s32 0, %v574
        %v576 = vsel %vm570, %v575, %v574
        %vm577 = vcmp.lt.s32.totalorder %v497, 0
        %v578 = vsub.s32 0, %v497
        %v579 = vsel %vm577, %v578, %v497
        %v580 = vshrl.u32 %v579, 4
        %v581 = vand.u32 %v579, 15
        %v582 = vsub.s32 0, %v581
        %v583 = vsel %vm577, %v582, %v581
        %vm584 = vcmp.lt.s32.totalorder %v498, 0
        %v585 = vsub.s32 0, %v498
        %v586 = vsel %vm584, %v585, %v498
        %v587 = vshrl.u32 %v586, 4
        %v588 = vand.u32 %v586, 15
        %v589 = vsub.s32 0, %v588
        %v590 = vsel %vm584, %v589, %v588
        %vm591 = vcmp.lt.s32.totalorder %v499, 0
        %v592 = vsub.s32 0, %v499
        %v593 = vsel %vm591, %v592, %v499
        %v594 = vshrl.u32 %v593, 4
        %v595 = vand.u32 %v593, 15
        %v596 = vsub.s32 0, %v595
        %v597 = vsel %vm591, %v596, %v595
        %vm598 = vcmp.lt.s32.totalorder %v500, 0
        %v599 = vsub.s32 0, %v500
        %v600 = vsel %vm598, %v599, %v500
        %v601 = vshrl.u32 %v600, 4
        %v602 = vand.u32 %v600, 15
        %v603 = vsub.s32 0, %v602
        %v604 = vsel %vm598, %v603, %v602
        %vm605 = vcmp.lt.s32.totalorder %v501, 0
        %v606 = vsub.s32 0, %v501
        %v607 = vsel %vm605, %v606, %v501
        %v608 = vshrl.u32 %v607, 4
        %v609 = vand.u32 %v607, 15
        %v610 = vsub.s32 0, %v609
        %v611 = vsel %vm605, %v610, %v609
        %vm612 = vcmp.lt.s32.totalorder %v502, 0
        %v613 = vsub.s32 0, %v502
        %v614 = vsel %vm612, %v613, %v502
        %v615 = vshrl.u32 %v614, 4
        %v616 = vand.u32 %v614, 15
        %v617 = vsub.s32 0, %v616
        %v618 = vsel %vm612, %v617, %v616
        %vm619 = vcmp.lt.s32.totalorder %v503, 0
        %v620 = vsub.s32 0, %v503
        %v621 = vsel %vm619, %v620, %v503
        %v622 = vshrl.u32 %v621, 4
        %v623 = vand.u32 %v621, 15
        %v624 = vsub.s32 0, %v623
        %v625 = vsel %vm619, %v624, %v623
        %vm626 = vcmp.lt.s32.totalorder %v504, 0
        %v627 = vsub.s32 0, %v504
        %v628 = vsel %vm626, %v627, %v504
        %v629 = vshrl.u32 %v628, 4
        %v630 = vand.u32 %v628, 15
        %v631 = vsub.s32 0, %v630
        %v632 = vsel %vm626, %v631, %v630
        %vm633 = vcmp.lt.s32.totalorder %v505, 0
        %v634 = vsub.s32 0, %v505
        %v635 = vsel %vm633, %v634, %v505
        %v636 = vshrl.u32 %v635, 4
        %v637 = vand.u32 %v635, 15
        %v638 = vsub.s32 0, %v637
        %v639 = vsel %vm633, %v638, %v637
        %vm640 = vcmp.lt.s32.totalorder %v506, 0
        %v641 = vsub.s32 0, %v506
        %v642 = vsel %vm640, %v641, %v506
        %v643 = vshrl.u32 %v642, 4
        %v644 = vand.u32 %v642, 15
        %v645 = vsub.s32 0, %v644
        %v646 = vsel %vm640, %v645, %v644
        %vm647 = vcmp.lt.s32.totalorder %v507, 0
        %v648 = vsub.s32 0, %v507
        %v649 = vsel %vm647, %v648, %v507
        %v650 = vshrl.u32 %v649, 4
        %v651 = vand.u32 %v649, 15
        %v652 = vsub.s32 0, %v651
        %v653 = vsel %vm647, %v652, %v651
        %vm654 = vcmp.lt.s32.totalorder %v508, 0
        %v655 = vsub.s32 0, %v508
        %v656 = vsel %vm654, %v655, %v508
        %v657 = vshrl.u32 %v656, 4
        %v658 = vand.u32 %v656, 15
        %v659 = vsub.s32 0, %v658
        %v660 = vsel %vm654, %v659, %v658
        %vm661 = vcmp.lt.s32.totalorder %v509, 0
        %v662 = vsub.s32 0, %v509
        %v663 = vsel %vm661, %v662, %v509
        %v664 = vshrl.u32 %v663, 4
        %v665 = vand.u32 %v663, 15
        %v666 = vsub.s32 0, %v665
        %v667 = vsel %vm661, %v666, %v665
        %vm668 = vcmp.lt.s32.totalorder %v510, 0
        %v669 = vsub.s32 0, %v510
        %v670 = vsel %vm668, %v669, %v510
        %v671 = vshrl.u32 %v670, 4
        %v672 = vand.u32 %v670, 15
        %v673 = vsub.s32 0, %v672
        %v674 = vsel %vm668, %v673, %v672
        %vm675 = vcmp.lt.s32.totalorder %v511, 0
        %v676 = vsub.s32 0, %v511
        %v677 = vsel %vm675, %v676, %v511
        %v678 = vshrl.u32 %v677, 4
        %v679 = vand.u32 %v677, 15
        %v680 = vsub.s32 0, %v679
        %v681 = vsel %vm675, %v680, %v679
        %vm682 = vcmp.lt.s32.totalorder %v512, 0
        %v683 = vsub.s32 0, %v512
        %v684 = vsel %vm682, %v683, %v512
        %v685 = vshrl.u32 %v684, 4
        %v686 = vand.u32 %v684, 15
        %v687 = vsub.s32 0, %v686
        %v688 = vsel %vm682, %v687, %v686
        %vm689 = vcmp.lt.s32.totalorder %v513, 0
        %v690 = vsub.s32 0, %v513
        %v691 = vsel %vm689, %v690, %v513
        %v692 = vshrl.u32 %v691, 4
        %v693 = vand.u32 %v691, 15
        %v694 = vsub.s32 0, %v693
        %v695 = vsel %vm689, %v694, %v693
        %vm696 = vcmp.lt.s32.totalorder %v514, 0
        %v697 = vsub.s32 0, %v514
        %v698 = vsel %vm696, %v697, %v514
        %v699 = vshrl.u32 %v698, 4
        %v700 = vand.u32 %v698, 15
        %v701 = vsub.s32 0, %v700
        %v702 = vsel %vm696, %v701, %v700
        %vm703 = vcmp.lt.s32.totalorder %v515, 0
        %v704 = vsub.s32 0, %v515
        %v705 = vsel %vm703, %v704, %v515
        %v706 = vshrl.u32 %v705, 4
        %v707 = vand.u32 %v705, 15
        %v708 = vsub.s32 0, %v707
        %v709 = vsel %vm703, %v708, %v707
        %vm710 = vcmp.lt.s32.totalorder %v516, 0
        %v711 = vsub.s32 0, %v516
        %v712 = vsel %vm710, %v711, %v516
        %v713 = vshrl.u32 %v712, 4
        %v714 = vand.u32 %v712, 15
        %v715 = vsub.s32 0, %v714
        %v716 = vsel %vm710, %v715, %v714
        %vm717 = vcmp.lt.s32.totalorder %v517, 0
        %v718 = vsub.s32 0, %v517
        %v719 = vsel %vm717, %v718, %v517
        %v720 = vshrl.u32 %v719, 4
        %v721 = vand.u32 %v719, 15
        %v722 = vsub.s32 0, %v721
        %v723 = vsel %vm717, %v722, %v721
        %vm724 = vcmp.lt.s32.totalorder %v518, 0
        %v725 = vsub.s32 0, %v518
        %v726 = vsel %vm724, %v725, %v518
        %v727 = vshrl.u32 %v726, 4
        %v728 = vand.u32 %v726, 15
        %v729 = vsub.s32 0, %v728
        %v730 = vsel %vm724, %v729, %v728
        %vm731 = vcmp.lt.s32.totalorder %v519, 0
        %v732 = vsub.s32 0, %v519
        %v733 = vsel %vm731, %v732, %v519
        %v734 = vshrl.u32 %v733, 4
        %v735 = vand.u32 %v733, 15
        %v736 = vsub.s32 0, %v735
        %v737 = vsel %vm731, %v736, %v735
        %vm738 = vcmp.lt.s32.totalorder %v520, 0
        %v739 = vsub.s32 0, %v520
        %v740 = vsel %vm738, %v739, %v520
        %v741 = vshrl.u32 %v740, 4
        %v742 = vand.u32 %v740, 15
        %v743 = vsub.s32 0, %v742
        %v744 = vsel %vm738, %v743, %v742
        %vm745 = vcmp.ne.s32.totalorder %v527, 0
        %vm746 = vcmp.ne.s32.totalorder %v534, 0
        %vm747 = vcmp.ne.s32.totalorder %v541, 0
        %vm748 = vcmp.ne.s32.totalorder %v548, 0
        %vm749 = vcmp.ne.s32.totalorder %v555, 0
        %vm750 = vcmp.ne.s32.totalorder %v562, 0
        %vm751 = vcmp.ne.s32.totalorder %v569, 0
        %vm752 = vcmp.ne.s32.totalorder %v576, 0
        %vm753 = vcmp.ne.s32.totalorder %v583, 0
        %vm754 = vcmp.ne.s32.totalorder %v590, 0
        %vm755 = vcmp.ne.s32.totalorder %v597, 0
        %vm756 = vcmp.ne.s32.totalorder %v604, 0
        %vm757 = vcmp.ne.s32.totalorder %v611, 0
        %vm758 = vcmp.ne.s32.totalorder %v618, 0
        %vm759 = vcmp.ne.s32.totalorder %v625, 0
        %vm760 = vcmp.ne.s32.totalorder %v632, 0
        %vm761 = vcmp.ne.s32.totalorder %v639, 0
        %vm762 = vcmp.ne.s32.totalorder %v646, 0
        %vm763 = vcmp.ne.s32.totalorder %v653, 0
        %vm764 = vcmp.ne.s32.totalorder %v660, 0
        %vm765 = vcmp.ne.s32.totalorder %v667, 0
        %vm766 = vcmp.ne.s32.totalorder %v674, 0
        %vm767 = vcmp.ne.s32.totalorder %v681, 0
        %vm768 = vcmp.ne.s32.totalorder %v688, 0
        %vm769 = vcmp.ne.s32.totalorder %v695, 0
        %vm770 = vcmp.ne.s32.totalorder %v702, 0
        %vm771 = vcmp.ne.s32.totalorder %v709, 0
        %vm772 = vcmp.ne.s32.totalorder %v716, 0
        %vm773 = vcmp.ne.s32.totalorder %v723, 0
        %vm774 = vcmp.ne.s32.totalorder %v730, 0
        %vm775 = vcmp.ne.s32.totalorder %v737, 0
        %vm776 = vcmp.ne.s32.totalorder %v744, 0
        %vm777 = vcmp.lt.s32.totalorder %v527, 0
        %vm778 = vcmp.lt.s32.totalorder %v534, 0
        %vm779 = vcmp.lt.s32.totalorder %v541, 0
        %vm780 = vcmp.lt.s32.totalorder %v548, 0
        %vm781 = vcmp.lt.s32.totalorder %v555, 0
        %vm782 = vcmp.lt.s32.totalorder %v562, 0
        %vm783 = vcmp.lt.s32.totalorder %v569, 0
        %vm784 = vcmp.lt.s32.totalorder %v576, 0
        %vm785 = vcmp.lt.s32.totalorder %v583, 0
        %vm786 = vcmp.lt.s32.totalorder %v590, 0
        %vm787 = vcmp.lt.s32.totalorder %v597, 0
        %vm788 = vcmp.lt.s32.totalorder %v604, 0
        %vm789 = vcmp.lt.s32.totalorder %v611, 0
        %vm790 = vcmp.lt.s32.totalorder %v618, 0
        %vm791 = vcmp.lt.s32.totalorder %v625, 0
        %vm792 = vcmp.lt.s32.totalorder %v632, 0
        %vm793 = vcmp.lt.s32.totalorder %v639, 0
        %vm794 = vcmp.lt.s32.totalorder %v646, 0
        %vm795 = vcmp.lt.s32.totalorder %v653, 0
        %vm796 = vcmp.lt.s32.totalorder %v660, 0
        %vm797 = vcmp.lt.s32.totalorder %v667, 0
        %vm798 = vcmp.lt.s32.totalorder %v674, 0
        %vm799 = vcmp.lt.s32.totalorder %v681, 0
        %vm800 = vcmp.lt.s32.totalorder %v688, 0
        %vm801 = vcmp.lt.s32.totalorder %v695, 0
        %vm802 = vcmp.lt.s32.totalorder %v702, 0
        %vm803 = vcmp.lt.s32.totalorder %v709, 0
        %vm804 = vcmp.lt.s32.totalorder %v716, 0
        %vm805 = vcmp.lt.s32.totalorder %v723, 0
        %vm806 = vcmp.lt.s32.totalorder %v730, 0
        %vm807 = vcmp.lt.s32.totalorder %v737, 0
        %vm808 = vcmp.lt.s32.totalorder %v744, 0
        %vm809 = vmand %vm777, %vm745
        %vm810 = vmand %vm778, %vm746
        %vm811 = vmand %vm779, %vm747
        %vm812 = vmand %vm780, %vm748
        %vm813 = vmand %vm781, %vm749
        %vm814 = vmand %vm782, %vm750
        %vm815 = vmand %vm783, %vm751
        %vm816 = vmand %vm784, %vm752
        %vm817 = vmand %vm785, %vm753
        %vm818 = vmand %vm786, %vm754
        %vm819 = vmand %vm787, %vm755
        %vm820 = vmand %vm788, %vm756
        %vm821 = vmand %vm789, %vm757
        %vm822 = vmand %vm790, %vm758
        %vm823 = vmand %vm791, %vm759
        %vm824 = vmand %vm792, %vm760
        %vm825 = vmand %vm793, %vm761
        %vm826 = vmand %vm794, %vm762
        %vm827 = vmand %vm795, %vm763
        %vm828 = vmand %vm796, %vm764
        %vm829 = vmand %vm797, %vm765
        %vm830 = vmand %vm798, %vm766
        %vm831 = vmand %vm799, %vm767
        %vm832 = vmand %vm800, %vm768
        %vm833 = vmand %vm801, %vm769
        %vm834 = vmand %vm802, %vm770
        %vm835 = vmand %vm803, %vm771
        %vm836 = vmand %vm804, %vm772
        %vm837 = vmand %vm805, %vm773
        %vm838 = vmand %vm806, %vm774
        %vm839 = vmand %vm807, %vm775
        %vm840 = vmand %vm808, %vm776
        %v841 = vadd.s32 %v527, 16
        %v842 = vadd.s32 %v534, 16
        %v843 = vadd.s32 %v541, 16
        %v844 = vadd.s32 %v548, 16
        %v845 = vadd.s32 %v555, 16
        %v846 = vadd.s32 %v562, 16
        %v847 = vadd.s32 %v569, 16
        %v848 = vadd.s32 %v576, 16
        %v849 = vadd.s32 %v583, 16
        %v850 = vadd.s32 %v590, 16
        %v851 = vadd.s32 %v597, 16
        %v852 = vadd.s32 %v604, 16
        %v853 = vadd.s32 %v611, 16
        %v854 = vadd.s32 %v618, 16
        %v855 = vadd.s32 %v625, 16
        %v856 = vadd.s32 %v632, 16
        %v857 = vadd.s32 %v639, 16
        %v858 = vadd.s32 %v646, 16
        %v859 = vadd.s32 %v653, 16
        %v860 = vadd.s32 %v660, 16
        %v861 = vadd.s32 %v667, 16
        %v862 = vadd.s32 %v674, 16
        %v863 = vadd.s32 %v681, 16
        %v864 = vadd.s32 %v688, 16
        %v865 = vadd.s32 %v695, 16
        %v866 = vadd.s32 %v702, 16
        %v867 = vadd.s32 %v709, 16
        %v868 = vadd.s32 %v716, 16
        %v869 = vadd.s32 %v723, 16
        %v870 = vadd.s32 %v730, 16
        %v871 = vadd.s32 %v737, 16
        %v872 = vadd.s32 %v744, 16
        %v873 = vsel %vm809, %v841, %v527
        %v874 = vsel %vm810, %v842, %v534
        %v875 = vsel %vm811, %v843, %v541
        %v876 = vsel %vm812, %v844, %v548
        %v877 = vsel %vm813, %v845, %v555
        %v878 = vsel %vm814, %v846, %v562
        %v879 = vsel %vm815, %v847, %v569
        %v880 = vsel %vm816, %v848, %v576
        %v881 = vsel %vm817, %v849, %v583
        %v882 = vsel %vm818, %v850, %v590
        %v883 = vsel %vm819, %v851, %v597
        %v884 = vsel %vm820, %v852, %v604
        %v885 = vsel %vm821, %v853, %v611
        %v886 = vsel %vm822, %v854, %v618
        %v887 = vsel %vm823, %v855, %v625
        %v888 = vsel %vm824, %v856, %v632
        %v889 = vsel %vm825, %v857, %v639
        %v890 = vsel %vm826, %v858, %v646
        %v891 = vsel %vm827, %v859, %v653
        %v892 = vsel %vm828, %v860, %v660
        %v893 = vsel %vm829, %v861, %v667
        %v894 = vsel %vm830, %v862, %v674
        %v895 = vsel %vm831, %v863, %v681
        %v896 = vsel %vm832, %v864, %v688
        %v897 = vsel %vm833, %v865, %v695
        %v898 = vsel %vm834, %v866, %v702
        %v899 = vsel %vm835, %v867, %v709
        %v900 = vsel %vm836, %v868, %v716
        %v901 = vsel %vm837, %v869, %v723
        %v902 = vsel %vm838, %v870, %v730
        %v903 = vsel %vm839, %v871, %v737
        %v904 = vsel %vm840, %v872, %v744
        %v905 = vld [vmem:[#allocation2 + $0x7] sm:$0xff]
        %v906 = vld [vmem:[#allocation2 + $0xf] sm:$0xff]
        %v907 = vld [vmem:[#allocation2 + $0x17] sm:$0xff]
        %v908 = vld [vmem:[#allocation2 + $0x1f] sm:$0xff]
        %v909 = vld [vmem:[#allocation2 + $0x27] sm:$0xff]
        %v910 = vld [vmem:[#allocation2 + $0x2f] sm:$0xff]
        %v911 = vld [vmem:[#allocation2 + $0x37] sm:$0xff]
        %v912 = vld [vmem:[#allocation2 + $0x3f] sm:$0xff]
        %v913 = vld [vmem:[#allocation2 + $0x47] sm:$0xff]
        %v914 = vld [vmem:[#allocation2 + $0x4f] sm:$0xff]
        %v915 = vld [vmem:[#allocation2 + $0x57] sm:$0xff]
        %v916 = vld [vmem:[#allocation2 + $0x5f] sm:$0xff]
        %v917 = vld [vmem:[#allocation2 + $0x67] sm:$0xff]
        %v918 = vld [vmem:[#allocation2 + $0x6f] sm:$0xff]
        %v919 = vld [vmem:[#allocation2 + $0x77] sm:$0xff]
        %v920 = vld [vmem:[#allocation2 + $0x7f] sm:$0xff]
        %v921 = vld [vmem:[#allocation2 + $0x87] sm:$0xff]
        %v922 = vld [vmem:[#allocation2 + $0x8f] sm:$0xff]
        %v923 = vld [vmem:[#allocation2 + $0x97] sm:$0xff]
        %v924 = vld [vmem:[#allocation2 + $0x9f] sm:$0xff]
        %v925 = vld [vmem:[#allocation2 + $0xa7] sm:$0xff]
        %v926 = vld [vmem:[#allocation2 + $0xaf] sm:$0xff]
        %v927 = vld [vmem:[#allocation2 + $0xb7] sm:$0xff]
        %v928 = vld [vmem:[#allocation2 + $0xbf] sm:$0xff]
        %v929 = vld [vmem:[#allocation2 + $0xc7] sm:$0xff]
        %v930 = vld [vmem:[#allocation2 + $0xcf] sm:$0xff]
        %v931 = vld [vmem:[#allocation2 + $0xd7] sm:$0xff]
        %v932 = vld [vmem:[#allocation2 + $0xdf] sm:$0xff]
        %v933 = vld [vmem:[#allocation2 + $0xe7] sm:$0xff]
        %v934 = vld [vmem:[#allocation2 + $0xef] sm:$0xff]
        %v935 = vld [vmem:[#allocation2 + $0xf7] sm:$0xff]
        %v936 = vld [vmem:[#allocation2 + $0xff] sm:$0xff]
        %vm937 = vcmp.ge.s32.totalorder %v873, 1
        %vm938 = vcmp.ge.s32.totalorder %v874, 1
        %vm939 = vcmp.ge.s32.totalorder %v875, 1
        %vm940 = vcmp.ge.s32.totalorder %v876, 1
        %vm941 = vcmp.ge.s32.totalorder %v877, 1
        %vm942 = vcmp.ge.s32.totalorder %v878, 1
        %vm943 = vcmp.ge.s32.totalorder %v879, 1
        %vm944 = vcmp.ge.s32.totalorder %v880, 1
        %vm945 = vcmp.ge.s32.totalorder %v881, 1
        %vm946 = vcmp.ge.s32.totalorder %v882, 1
        %vm947 = vcmp.ge.s32.totalorder %v883, 1
        %vm948 = vcmp.ge.s32.totalorder %v884, 1
        %vm949 = vcmp.ge.s32.totalorder %v885, 1
        %vm950 = vcmp.ge.s32.totalorder %v886, 1
        %vm951 = vcmp.ge.s32.totalorder %v887, 1
        %vm952 = vcmp.ge.s32.totalorder %v888, 1
        %vm953 = vcmp.ge.s32.totalorder %v889, 1
        %vm954 = vcmp.ge.s32.totalorder %v890, 1
        %vm955 = vcmp.ge.s32.totalorder %v891, 1
        %vm956 = vcmp.ge.s32.totalorder %v892, 1
        %vm957 = vcmp.ge.s32.totalorder %v893, 1
        %vm958 = vcmp.ge.s32.totalorder %v894, 1
        %vm959 = vcmp.ge.s32.totalorder %v895, 1
        %vm960 = vcmp.ge.s32.totalorder %v896, 1
        %vm961 = vcmp.ge.s32.totalorder %v897, 1
        %vm962 = vcmp.ge.s32.totalorder %v898, 1
        %vm963 = vcmp.ge.s32.totalorder %v899, 1
        %vm964 = vcmp.ge.s32.totalorder %v900, 1
        %vm965 = vcmp.ge.s32.totalorder %v901, 1
        %vm966 = vcmp.ge.s32.totalorder %v902, 1
        %vm967 = vcmp.ge.s32.totalorder %v903, 1
        %vm968 = vcmp.ge.s32.totalorder %v904, 1
        %v969 = vsel %vm937, %v905, 0.0
        %v970 = vsel %vm938, %v906, 0.0
        %v971 = vsel %vm939, %v907, 0.0
        %v972 = vsel %vm940, %v908, 0.0
        %v973 = vsel %vm941, %v909, 0.0
        %v974 = vsel %vm942, %v910, 0.0
        %v975 = vsel %vm943, %v911, 0.0
        %v976 = vsel %vm944, %v912, 0.0
        %v977 = vsel %vm945, %v913, 0.0
        %v978 = vsel %vm946, %v914, 0.0
        %v979 = vsel %vm947, %v915, 0.0
        %v980 = vsel %vm948, %v916, 0.0
        %v981 = vsel %vm949, %v917, 0.0
        %v982 = vsel %vm950, %v918, 0.0
        %v983 = vsel %vm951, %v919, 0.0
        %v984 = vsel %vm952, %v920, 0.0
        %v985 = vsel %vm953, %v921, 0.0
        %v986 = vsel %vm954, %v922, 0.0
        %v987 = vsel %vm955, %v923, 0.0
        %v988 = vsel %vm956, %v924, 0.0
        %v989 = vsel %vm957, %v925, 0.0
        %v990 = vsel %vm958, %v926, 0.0
        %v991 = vsel %vm959, %v927, 0.0
        %v992 = vsel %vm960, %v928, 0.0
        %v993 = vsel %vm961, %v929, 0.0
        %v994 = vsel %vm962, %v930, 0.0
        %v995 = vsel %vm963, %v931, 0.0
        %v996 = vsel %vm964, %v932, 0.0
        %v997 = vsel %vm965, %v933, 0.0
        %v998 = vsel %vm966, %v934, 0.0
        %v999 = vsel %vm967, %v935, 0.0
        %v1000 = vsel %vm968, %v936, 0.0
        %v1001 = vld [vmem:[%s1] sm:$0x1]
        %1003 = vset.pattern.permute.xlu0 0
        %1004 = vperm.xlu0 %1003, %v969
        %v1005 = vpop.permute.xlu0 %1004
        %1008 = vset.pattern.permute.xlu0 0
        %1009 = vperm.xlu0 %1008, %v970
        %v1010 = vpop.permute.xlu0 %1009
        %1013 = vset.pattern.permute.xlu0 0
        %1014 = vperm.xlu0 %1013, %v971
        %v1015 = vpop.permute.xlu0 %1014
        %1018 = vset.pattern.permute.xlu0 0
        %1019 = vperm.xlu0 %1018, %v972
        %v1020 = vpop.permute.xlu0 %1019
        %1023 = vset.pattern.permute.xlu0 0
        %1024 = vperm.xlu0 %1023, %v973
        %v1025 = vpop.permute.xlu0 %1024
        %1028 = vset.pattern.permute.xlu0 0
        %1029 = vperm.xlu0 %1028, %v974
        %v1030 = vpop.permute.xlu0 %1029
        %1033 = vset.pattern.permute.xlu0 0
        %1034 = vperm.xlu0 %1033, %v975
        %v1035 = vpop.permute.xlu0 %1034
        %1038 = vset.pattern.permute.xlu0 0
        %1039 = vperm.xlu0 %1038, %v976
        %v1040 = vpop.permute.xlu0 %1039
        %1043 = vset.pattern.permute.xlu0 0
        %1044 = vperm.xlu0 %1043, %v977
        %v1045 = vpop.permute.xlu0 %1044
        %1048 = vset.pattern.permute.xlu0 0
        %1049 = vperm.xlu0 %1048, %v978
        %v1050 = vpop.permute.xlu0 %1049
        %1053 = vset.pattern.permute.xlu0 0
        %1054 = vperm.xlu0 %1053, %v979
        %v1055 = vpop.permute.xlu0 %1054
        %1058 = vset.pattern.permute.xlu0 0
        %1059 = vperm.xlu0 %1058, %v980
        %v1060 = vpop.permute.xlu0 %1059
        %1063 = vset.pattern.permute.xlu0 0
        %1064 = vperm.xlu0 %1063, %v981
        %v1065 = vpop.permute.xlu0 %1064
        %1068 = vset.pattern.permute.xlu0 0
        %1069 = vperm.xlu0 %1068, %v982
        %v1070 = vpop.permute.xlu0 %1069
        %1073 = vset.pattern.permute.xlu0 0
        %1074 = vperm.xlu0 %1073, %v983
        %v1075 = vpop.permute.xlu0 %1074
        %1078 = vset.pattern.permute.xlu0 0
        %1079 = vperm.xlu0 %1078, %v984
        %v1080 = vpop.permute.xlu0 %1079
        %1083 = vset.pattern.permute.xlu0 0
        %1084 = vperm.xlu0 %1083, %v985
        %v1085 = vpop.permute.xlu0 %1084
        %1088 = vset.pattern.permute.xlu0 0
        %1089 = vperm.xlu0 %1088, %v986
        %v1090 = vpop.permute.xlu0 %1089
        %1093 = vset.pattern.permute.xlu0 0
        %1094 = vperm.xlu0 %1093, %v987
        %v1095 = vpop.permute.xlu0 %1094
        %1098 = vset.pattern.permute.xlu0 0
        %1099 = vperm.xlu0 %1098, %v988
        %v1100 = vpop.permute.xlu0 %1099
        %1103 = vset.pattern.permute.xlu0 0
        %1104 = vperm.xlu0 %1103, %v989
        %v1105 = vpop.permute.xlu0 %1104
        %1108 = vset.pattern.permute.xlu0 0
        %1109 = vperm.xlu0 %1108, %v990
        %v1110 = vpop.permute.xlu0 %1109
        %1113 = vset.pattern.permute.xlu0 0
        %1114 = vperm.xlu0 %1113, %v991
        %v1115 = vpop.permute.xlu0 %1114
        %1118 = vset.pattern.permute.xlu0 0
        %1119 = vperm.xlu0 %1118, %v992
        %v1120 = vpop.permute.xlu0 %1119
        %1123 = vset.pattern.permute.xlu0 0
        %1124 = vperm.xlu0 %1123, %v993
        %v1125 = vpop.permute.xlu0 %1124
        %1128 = vset.pattern.permute.xlu0 0
        %1129 = vperm.xlu0 %1128, %v994
        %v1130 = vpop.permute.xlu0 %1129
        %1133 = vset.pattern.permute.xlu0 0
        %1134 = vperm.xlu0 %1133, %v995
        %v1135 = vpop.permute.xlu0 %1134
        %1138 = vset.pattern.permute.xlu0 0
        %1139 = vperm.xlu0 %1138, %v996
        %v1140 = vpop.permute.xlu0 %1139
        %1143 = vset.pattern.permute.xlu0 0
        %1144 = vperm.xlu0 %1143, %v997
        %v1145 = vpop.permute.xlu0 %1144
        %1148 = vset.pattern.permute.xlu0 0
        %1149 = vperm.xlu0 %1148, %v998
        %v1150 = vpop.permute.xlu0 %1149
        %1153 = vset.pattern.permute.xlu0 0
        %1154 = vperm.xlu0 %1153, %v999
        %v1155 = vpop.permute.xlu0 %1154
        %1158 = vset.pattern.permute.xlu0 0
        %1159 = vperm.xlu0 %1158, %v1000
        %v1160 = vpop.permute.xlu0 %1159
        %v1163 = vperm.slane %v1001, 0
        %v1165 = vmul.f32 %v1005, %v1163
        %v1166 = vmul.f32 %v1010, %v1163
        %v1167 = vmul.f32 %v1015, %v1163
        %v1168 = vmul.f32 %v1020, %v1163
        %v1169 = vmul.f32 %v1025, %v1163
        %v1170 = vmul.f32 %v1030, %v1163
        %v1171 = vmul.f32 %v1035, %v1163
        %v1172 = vmul.f32 %v1040, %v1163
        %v1173 = vmul.f32 %v1045, %v1163
        %v1174 = vmul.f32 %v1050, %v1163
        %v1175 = vmul.f32 %v1055, %v1163
        %v1176 = vmul.f32 %v1060, %v1163
        %v1177 = vmul.f32 %v1065, %v1163
        %v1178 = vmul.f32 %v1070, %v1163
        %v1179 = vmul.f32 %v1075, %v1163
        %v1180 = vmul.f32 %v1080, %v1163
        %v1181 = vmul.f32 %v1085, %v1163
        %v1182 = vmul.f32 %v1090, %v1163
        %v1183 = vmul.f32 %v1095, %v1163
        %v1184 = vmul.f32 %v1100, %v1163
        %v1185 = vmul.f32 %v1105, %v1163
        %v1186 = vmul.f32 %v1110, %v1163
        %v1187 = vmul.f32 %v1115, %v1163
        %v1188 = vmul.f32 %v1120, %v1163
        %v1189 = vmul.f32 %v1125, %v1163
        %v1190 = vmul.f32 %v1130, %v1163
        %v1191 = vmul.f32 %v1135, %v1163
        %v1192 = vmul.f32 %v1140, %v1163
        %v1193 = vmul.f32 %v1145, %v1163
        %v1194 = vmul.f32 %v1150, %v1163
        %v1195 = vmul.f32 %v1155, %v1163
        %v1196 = vmul.f32 %v1160, %v1163
        %v1197 = vadd.f32 %v1165, 0.0
        %v1198 = vadd.f32 %v1166, 0.0
        %v1199 = vadd.f32 %v1167, 0.0
        %v1200 = vadd.f32 %v1168, 0.0
        %v1201 = vadd.f32 %v1169, 0.0
        %v1202 = vadd.f32 %v1170, 0.0
        %v1203 = vadd.f32 %v1171, 0.0
        %v1204 = vadd.f32 %v1172, 0.0
        %v1205 = vadd.f32 %v1173, 0.0
        %v1206 = vadd.f32 %v1174, 0.0
        %v1207 = vadd.f32 %v1175, 0.0
        %v1208 = vadd.f32 %v1176, 0.0
        %v1209 = vadd.f32 %v1177, 0.0
        %v1210 = vadd.f32 %v1178, 0.0
        %v1211 = vadd.f32 %v1179, 0.0
        %v1212 = vadd.f32 %v1180, 0.0
        %v1213 = vadd.f32 %v1181, 0.0
        %v1214 = vadd.f32 %v1182, 0.0
        %v1215 = vadd.f32 %v1183, 0.0
        %v1216 = vadd.f32 %v1184, 0.0
        %v1217 = vadd.f32 %v1185, 0.0
        %v1218 = vadd.f32 %v1186, 0.0
        %v1219 = vadd.f32 %v1187, 0.0
        %v1220 = vadd.f32 %v1188, 0.0
        %v1221 = vadd.f32 %v1189, 0.0
        %v1222 = vadd.f32 %v1190, 0.0
        %v1223 = vadd.f32 %v1191, 0.0
        %v1224 = vadd.f32 %v1192, 0.0
        %v1225 = vadd.f32 %v1193, 0.0
        %v1226 = vadd.f32 %v1194, 0.0
        %v1227 = vadd.f32 %v1195, 0.0
        %v1228 = vadd.f32 %v1196, 0.0
        %v1229 = vld [vmem:[#allocation2 + $0x8] sm:$0xff]
        %v1230 = vld [vmem:[#allocation2 + $0x10] sm:$0xff]
        %v1231 = vld [vmem:[#allocation2 + $0x18] sm:$0xff]
        %v1232 = vld [vmem:[#allocation2 + $0x20] sm:$0xff]
        %v1233 = vld [vmem:[#allocation2 + $0x28] sm:$0xff]
        %v1234 = vld [vmem:[#allocation2 + $0x30] sm:$0xff]
        %v1235 = vld [vmem:[#allocation2 + $0x38] sm:$0xff]
        %v1236 = vld [vmem:[#allocation2 + $0x40] sm:$0xff]
        %v1237 = vld [vmem:[#allocation2 + $0x48] sm:$0xff]
        %v1238 = vld [vmem:[#allocation2 + $0x50] sm:$0xff]
        %v1239 = vld [vmem:[#allocation2 + $0x58] sm:$0xff]
        %v1240 = vld [vmem:[#allocation2 + $0x60] sm:$0xff]
        %v1241 = vld [vmem:[#allocation2 + $0x68] sm:$0xff]
        %v1242 = vld [vmem:[#allocation2 + $0x70] sm:$0xff]
        %v1243 = vld [vmem:[#allocation2 + $0x78] sm:$0xff]
        %v1244 = vld [vmem:[#allocation2 + $0x80] sm:$0xff]
        %v1245 = vld [vmem:[#allocation2 + $0x88] sm:$0xff]
        %v1246 = vld [vmem:[#allocation2 + $0x90] sm:$0xff]
        %v1247 = vld [vmem:[#allocation2 + $0x98] sm:$0xff]
        %v1248 = vld [vmem:[#allocation2 + $0xa0] sm:$0xff]
        %v1249 = vld [vmem:[#allocation2 + $0xa8] sm:$0xff]
        %v1250 = vld [vmem:[#allocation2 + $0xb0] sm:$0xff]
        %v1251 = vld [vmem:[#allocation2 + $0xb8] sm:$0xff]
        %v1252 = vld [vmem:[#allocation2 + $0xc0] sm:$0xff]
        %v1253 = vld [vmem:[#allocation2 + $0xc8] sm:$0xff]
        %v1254 = vld [vmem:[#allocation2 + $0xd0] sm:$0xff]
        %v1255 = vld [vmem:[#allocation2 + $0xd8] sm:$0xff]
        %v1256 = vld [vmem:[#allocation2 + $0xe0] sm:$0xff]
        %v1257 = vld [vmem:[#allocation2 + $0xe8] sm:$0xff]
        %v1258 = vld [vmem:[#allocation2 + $0xf0] sm:$0xff]
        %v1259 = vld [vmem:[#allocation2 + $0xf8] sm:$0xff]
        %v1260 = vld [vmem:[#allocation2 + $0x100] sm:$0xff]
        %s1261 = scalar_lea.vmem %s1, 1
        %v1262 = vld [vmem:[%s1261] sm:$0x1]
        %1264 = vset.pattern.permute.xlu0 0
        %1265 = vperm.xlu0 %1264, %v1229
        %v1266 = vpop.permute.xlu0 %1265
        %1269 = vset.pattern.permute.xlu0 0
        %1270 = vperm.xlu0 %1269, %v1230
        %v1271 = vpop.permute.xlu0 %1270
        %1274 = vset.pattern.permute.xlu0 0
        %1275 = vperm.xlu0 %1274, %v1231
        %v1276 = vpop.permute.xlu0 %1275
        %1279 = vset.pattern.permute.xlu0 0
        %1280 = vperm.xlu0 %1279, %v1232
        %v1281 = vpop.permute.xlu0 %1280
        %1284 = vset.pattern.permute.xlu0 0
        %1285 = vperm.xlu0 %1284, %v1233
        %v1286 = vpop.permute.xlu0 %1285
        %1289 = vset.pattern.permute.xlu0 0
        %1290 = vperm.xlu0 %1289, %v1234
        %v1291 = vpop.permute.xlu0 %1290
        %1294 = vset.pattern.permute.xlu0 0
        %1295 = vperm.xlu0 %1294, %v1235
        %v1296 = vpop.permute.xlu0 %1295
        %1299 = vset.pattern.permute.xlu0 0
        %1300 = vperm.xlu0 %1299, %v1236
        %v1301 = vpop.permute.xlu0 %1300
        %1304 = vset.pattern.permute.xlu0 0
        %1305 = vperm.xlu0 %1304, %v1237
        %v1306 = vpop.permute.xlu0 %1305
        %1309 = vset.pattern.permute.xlu0 0
        %1310 = vperm.xlu0 %1309, %v1238
        %v1311 = vpop.permute.xlu0 %1310
        %1314 = vset.pattern.permute.xlu0 0
        %1315 = vperm.xlu0 %1314, %v1239
        %v1316 = vpop.permute.xlu0 %1315
        %1319 = vset.pattern.permute.xlu0 0
        %1320 = vperm.xlu0 %1319, %v1240
        %v1321 = vpop.permute.xlu0 %1320
        %1324 = vset.pattern.permute.xlu0 0
        %1325 = vperm.xlu0 %1324, %v1241
        %v1326 = vpop.permute.xlu0 %1325
        %1329 = vset.pattern.permute.xlu0 0
        %1330 = vperm.xlu0 %1329, %v1242
        %v1331 = vpop.permute.xlu0 %1330
        %1334 = vset.pattern.permute.xlu0 0
        %1335 = vperm.xlu0 %1334, %v1243
        %v1336 = vpop.permute.xlu0 %1335
        %1339 = vset.pattern.permute.xlu0 0
        %1340 = vperm.xlu0 %1339, %v1244
        %v1341 = vpop.permute.xlu0 %1340
        %1344 = vset.pattern.permute.xlu0 0
        %1345 = vperm.xlu0 %1344, %v1245
        %v1346 = vpop.permute.xlu0 %1345
        %1349 = vset.pattern.permute.xlu0 0
        %1350 = vperm.xlu0 %1349, %v1246
        %v1351 = vpop.permute.xlu0 %1350
        %1354 = vset.pattern.permute.xlu0 0
        %1355 = vperm.xlu0 %1354, %v1247
        %v1356 = vpop.permute.xlu0 %1355
        %1359 = vset.pattern.permute.xlu0 0
        %1360 = vperm.xlu0 %1359, %v1248
        %v1361 = vpop.permute.xlu0 %1360
        %1364 = vset.pattern.permute.xlu0 0
        %1365 = vperm.xlu0 %1364, %v1249
        %v1366 = vpop.permute.xlu0 %1365
        %1369 = vset.pattern.permute.xlu0 0
        %1370 = vperm.xlu0 %1369, %v1250
        %v1371 = vpop.permute.xlu0 %1370
        %1374 = vset.pattern.permute.xlu0 0
        %1375 = vperm.xlu0 %1374, %v1251
        %v1376 = vpop.permute.xlu0 %1375
        %1379 = vset.pattern.permute.xlu0 0
        %1380 = vperm.xlu0 %1379, %v1252
        %v1381 = vpop.permute.xlu0 %1380
        %1384 = vset.pattern.permute.xlu0 0
        %1385 = vperm.xlu0 %1384, %v1253
        %v1386 = vpop.permute.xlu0 %1385
        %1389 = vset.pattern.permute.xlu0 0
        %1390 = vperm.xlu0 %1389, %v1254
        %v1391 = vpop.permute.xlu0 %1390
        %1394 = vset.pattern.permute.xlu0 0
        %1395 = vperm.xlu0 %1394, %v1255
        %v1396 = vpop.permute.xlu0 %1395
        %1399 = vset.pattern.permute.xlu0 0
        %1400 = vperm.xlu0 %1399, %v1256
        %v1401 = vpop.permute.xlu0 %1400
        %1404 = vset.pattern.permute.xlu0 0
        %1405 = vperm.xlu0 %1404, %v1257
        %v1406 = vpop.permute.xlu0 %1405
        %1409 = vset.pattern.permute.xlu0 0
        %1410 = vperm.xlu0 %1409, %v1258
        %v1411 = vpop.permute.xlu0 %1410
        %1414 = vset.pattern.permute.xlu0 0
        %1415 = vperm.xlu0 %1414, %v1259
        %v1416 = vpop.permute.xlu0 %1415
        %1419 = vset.pattern.permute.xlu0 0
        %1420 = vperm.xlu0 %1419, %v1260
        %v1421 = vpop.permute.xlu0 %1420
        %v1424 = vperm.slane %v1262, 0
        %v1426 = vmul.f32 %v1266, %v1424
        %v1427 = vmul.f32 %v1271, %v1424
        %v1428 = vmul.f32 %v1276, %v1424
        %v1429 = vmul.f32 %v1281, %v1424
        %v1430 = vmul.f32 %v1286, %v1424
        %v1431 = vmul.f32 %v1291, %v1424
        %v1432 = vmul.f32 %v1296, %v1424
        %v1433 = vmul.f32 %v1301, %v1424
        %v1434 = vmul.f32 %v1306, %v1424
        %v1435 = vmul.f32 %v1311, %v1424
        %v1436 = vmul.f32 %v1316, %v1424
        %v1437 = vmul.f32 %v1321, %v1424
        %v1438 = vmul.f32 %v1326, %v1424
        %v1439 = vmul.f32 %v1331, %v1424
        %v1440 = vmul.f32 %v1336, %v1424
        %v1441 = vmul.f32 %v1341, %v1424
        %v1442 = vmul.f32 %v1346, %v1424
        %v1443 = vmul.f32 %v1351, %v1424
        %v1444 = vmul.f32 %v1356, %v1424
        %v1445 = vmul.f32 %v1361, %v1424
        %v1446 = vmul.f32 %v1366, %v1424
        %v1447 = vmul.f32 %v1371, %v1424
        %v1448 = vmul.f32 %v1376, %v1424
        %v1449 = vmul.f32 %v1381, %v1424
        %v1450 = vmul.f32 %v1386, %v1424
        %v1451 = vmul.f32 %v1391, %v1424
        %v1452 = vmul.f32 %v1396, %v1424
        %v1453 = vmul.f32 %v1401, %v1424
        %v1454 = vmul.f32 %v1406, %v1424
        %v1455 = vmul.f32 %v1411, %v1424
        %v1456 = vmul.f32 %v1416, %v1424
        %v1457 = vmul.f32 %v1421, %v1424
        %v1458 = vadd.f32 %v1197, %v1426
        %v1459 = vadd.f32 %v1198, %v1427
        %v1460 = vadd.f32 %v1199, %v1428
        %v1461 = vadd.f32 %v1200, %v1429
        %v1462 = vadd.f32 %v1201, %v1430
        %v1463 = vadd.f32 %v1202, %v1431
        %v1464 = vadd.f32 %v1203, %v1432
        %v1465 = vadd.f32 %v1204, %v1433
        %v1466 = vadd.f32 %v1205, %v1434
        %v1467 = vadd.f32 %v1206, %v1435
        %v1468 = vadd.f32 %v1207, %v1436
        %v1469 = vadd.f32 %v1208, %v1437
        %v1470 = vadd.f32 %v1209, %v1438
        %v1471 = vadd.f32 %v1210, %v1439
        %v1472 = vadd.f32 %v1211, %v1440
        %v1473 = vadd.f32 %v1212, %v1441
        %v1474 = vadd.f32 %v1213, %v1442
        %v1475 = vadd.f32 %v1214, %v1443
        %v1476 = vadd.f32 %v1215, %v1444
        %v1477 = vadd.f32 %v1216, %v1445
        %v1478 = vadd.f32 %v1217, %v1446
        %v1479 = vadd.f32 %v1218, %v1447
        %v1480 = vadd.f32 %v1219, %v1448
        %v1481 = vadd.f32 %v1220, %v1449
        %v1482 = vadd.f32 %v1221, %v1450
        %v1483 = vadd.f32 %v1222, %v1451
        %v1484 = vadd.f32 %v1223, %v1452
        %v1485 = vadd.f32 %v1224, %v1453
        %v1486 = vadd.f32 %v1225, %v1454
        %v1487 = vadd.f32 %v1226, %v1455
        %v1488 = vadd.f32 %v1227, %v1456
        %v1489 = vadd.f32 %v1228, %v1457
        %v1490 = vld [vmem:[#allocation2 + $0x9] sm:$0xff]
        %v1491 = vld [vmem:[#allocation2 + $0x11] sm:$0xff]
        %v1492 = vld [vmem:[#allocation2 + $0x19] sm:$0xff]
        %v1493 = vld [vmem:[#allocation2 + $0x21] sm:$0xff]
        %v1494 = vld [vmem:[#allocation2 + $0x29] sm:$0xff]
        %v1495 = vld [vmem:[#allocation2 + $0x31] sm:$0xff]
        %v1496 = vld [vmem:[#allocation2 + $0x39] sm:$0xff]
        %v1497 = vld [vmem:[#allocation2 + $0x41] sm:$0xff]
        %v1498 = vld [vmem:[#allocation2 + $0x49] sm:$0xff]
        %v1499 = vld [vmem:[#allocation2 + $0x51] sm:$0xff]
        %v1500 = vld [vmem:[#allocation2 + $0x59] sm:$0xff]
        %v1501 = vld [vmem:[#allocation2 + $0x61] sm:$0xff]
        %v1502 = vld [vmem:[#allocation2 + $0x69] sm:$0xff]
        %v1503 = vld [vmem:[#allocation2 + $0x71] sm:$0xff]
        %v1504 = vld [vmem:[#allocation2 + $0x79] sm:$0xff]
        %v1505 = vld [vmem:[#allocation2 + $0x81] sm:$0xff]
        %v1506 = vld [vmem:[#allocation2 + $0x89] sm:$0xff]
        %v1507 = vld [vmem:[#allocation2 + $0x91] sm:$0xff]
        %v1508 = vld [vmem:[#allocation2 + $0x99] sm:$0xff]
        %v1509 = vld [vmem:[#allocation2 + $0xa1] sm:$0xff]
        %v1510 = vld [vmem:[#allocation2 + $0xa9] sm:$0xff]
        %v1511 = vld [vmem:[#allocation2 + $0xb1] sm:$0xff]
        %v1512 = vld [vmem:[#allocation2 + $0xb9] sm:$0xff]
        %v1513 = vld [vmem:[#allocation2 + $0xc1] sm:$0xff]
        %v1514 = vld [vmem:[#allocation2 + $0xc9] sm:$0xff]
        %v1515 = vld [vmem:[#allocation2 + $0xd1] sm:$0xff]
        %v1516 = vld [vmem:[#allocation2 + $0xd9] sm:$0xff]
        %v1517 = vld [vmem:[#allocation2 + $0xe1] sm:$0xff]
        %v1518 = vld [vmem:[#allocation2 + $0xe9] sm:$0xff]
        %v1519 = vld [vmem:[#allocation2 + $0xf1] sm:$0xff]
        %v1520 = vld [vmem:[#allocation2 + $0xf9] sm:$0xff]
        %v1521 = vld [vmem:[#allocation2 + $0x101] sm:$0xff]
        %vm1522 = vcmp.le.s32.totalorder %v873, 14
        %vm1523 = vcmp.le.s32.totalorder %v874, 14
        %vm1524 = vcmp.le.s32.totalorder %v875, 14
        %vm1525 = vcmp.le.s32.totalorder %v876, 14
        %vm1526 = vcmp.le.s32.totalorder %v877, 14
        %vm1527 = vcmp.le.s32.totalorder %v878, 14
        %vm1528 = vcmp.le.s32.totalorder %v879, 14
        %vm1529 = vcmp.le.s32.totalorder %v880, 14
        %vm1530 = vcmp.le.s32.totalorder %v881, 14
        %vm1531 = vcmp.le.s32.totalorder %v882, 14
        %vm1532 = vcmp.le.s32.totalorder %v883, 14
        %vm1533 = vcmp.le.s32.totalorder %v884, 14
        %vm1534 = vcmp.le.s32.totalorder %v885, 14
        %vm1535 = vcmp.le.s32.totalorder %v886, 14
        %vm1536 = vcmp.le.s32.totalorder %v887, 14
        %vm1537 = vcmp.le.s32.totalorder %v888, 14
        %vm1538 = vcmp.le.s32.totalorder %v889, 14
        %vm1539 = vcmp.le.s32.totalorder %v890, 14
        %vm1540 = vcmp.le.s32.totalorder %v891, 14
        %vm1541 = vcmp.le.s32.totalorder %v892, 14
        %vm1542 = vcmp.le.s32.totalorder %v893, 14
        %vm1543 = vcmp.le.s32.totalorder %v894, 14
        %vm1544 = vcmp.le.s32.totalorder %v895, 14
        %vm1545 = vcmp.le.s32.totalorder %v896, 14
        %vm1546 = vcmp.le.s32.totalorder %v897, 14
        %vm1547 = vcmp.le.s32.totalorder %v898, 14
        %vm1548 = vcmp.le.s32.totalorder %v899, 14
        %vm1549 = vcmp.le.s32.totalorder %v900, 14
        %vm1550 = vcmp.le.s32.totalorder %v901, 14
        %vm1551 = vcmp.le.s32.totalorder %v902, 14
        %vm1552 = vcmp.le.s32.totalorder %v903, 14
        %vm1553 = vcmp.le.s32.totalorder %v904, 14
        %v1554 = vsel %vm1522, %v1490, 0.0
        %v1555 = vsel %vm1523, %v1491, 0.0
        %v1556 = vsel %vm1524, %v1492, 0.0
        %v1557 = vsel %vm1525, %v1493, 0.0
        %v1558 = vsel %vm1526, %v1494, 0.0
        %v1559 = vsel %vm1527, %v1495, 0.0
        %v1560 = vsel %vm1528, %v1496, 0.0
        %v1561 = vsel %vm1529, %v1497, 0.0
        %v1562 = vsel %vm1530, %v1498, 0.0
        %v1563 = vsel %vm1531, %v1499, 0.0
        %v1564 = vsel %vm1532, %v1500, 0.0
        %v1565 = vsel %vm1533, %v1501, 0.0
        %v1566 = vsel %vm1534, %v1502, 0.0
        %v1567 = vsel %vm1535, %v1503, 0.0
        %v1568 = vsel %vm1536, %v1504, 0.0
        %v1569 = vsel %vm1537, %v1505, 0.0
        %v1570 = vsel %vm1538, %v1506, 0.0
        %v1571 = vsel %vm1539, %v1507, 0.0
        %v1572 = vsel %vm1540, %v1508, 0.0
        %v1573 = vsel %vm1541, %v1509, 0.0
        %v1574 = vsel %vm1542, %v1510, 0.0
        %v1575 = vsel %vm1543, %v1511, 0.0
        %v1576 = vsel %vm1544, %v1512, 0.0
        %v1577 = vsel %vm1545, %v1513, 0.0
        %v1578 = vsel %vm1546, %v1514, 0.0
        %v1579 = vsel %vm1547, %v1515, 0.0
        %v1580 = vsel %vm1548, %v1516, 0.0
        %v1581 = vsel %vm1549, %v1517, 0.0
        %v1582 = vsel %vm1550, %v1518, 0.0
        %v1583 = vsel %vm1551, %v1519, 0.0
        %v1584 = vsel %vm1552, %v1520, 0.0
        %v1585 = vsel %vm1553, %v1521, 0.0
        %s1586 = scalar_lea.vmem %s1, 2
        %v1587 = vld [vmem:[%s1586] sm:$0x1]
        %1589 = vset.pattern.permute.xlu0 0
        %1590 = vperm.xlu0 %1589, %v1554
        %v1591 = vpop.permute.xlu0 %1590
        %1594 = vset.pattern.permute.xlu0 0
        %1595 = vperm.xlu0 %1594, %v1555
        %v1596 = vpop.permute.xlu0 %1595
        %1599 = vset.pattern.permute.xlu0 0
        %1600 = vperm.xlu0 %1599, %v1556
        %v1601 = vpop.permute.xlu0 %1600
        %1604 = vset.pattern.permute.xlu0 0
        %1605 = vperm.xlu0 %1604, %v1557
        %v1606 = vpop.permute.xlu0 %1605
        %1609 = vset.pattern.permute.xlu0 0
        %1610 = vperm.xlu0 %1609, %v1558
        %v1611 = vpop.permute.xlu0 %1610
        %1614 = vset.pattern.permute.xlu0 0
        %1615 = vperm.xlu0 %1614, %v1559
        %v1616 = vpop.permute.xlu0 %1615
        %1619 = vset.pattern.permute.xlu0 0
        %1620 = vperm.xlu0 %1619, %v1560
        %v1621 = vpop.permute.xlu0 %1620
        %1624 = vset.pattern.permute.xlu0 0
        %1625 = vperm.xlu0 %1624, %v1561
        %v1626 = vpop.permute.xlu0 %1625
        %1629 = vset.pattern.permute.xlu0 0
        %1630 = vperm.xlu0 %1629, %v1562
        %v1631 = vpop.permute.xlu0 %1630
        %1634 = vset.pattern.permute.xlu0 0
        %1635 = vperm.xlu0 %1634, %v1563
        %v1636 = vpop.permute.xlu0 %1635
        %1639 = vset.pattern.permute.xlu0 0
        %1640 = vperm.xlu0 %1639, %v1564
        %v1641 = vpop.permute.xlu0 %1640
        %1644 = vset.pattern.permute.xlu0 0
        %1645 = vperm.xlu0 %1644, %v1565
        %v1646 = vpop.permute.xlu0 %1645
        %1649 = vset.pattern.permute.xlu0 0
        %1650 = vperm.xlu0 %1649, %v1566
        %v1651 = vpop.permute.xlu0 %1650
        %1654 = vset.pattern.permute.xlu0 0
        %1655 = vperm.xlu0 %1654, %v1567
        %v1656 = vpop.permute.xlu0 %1655
        %1659 = vset.pattern.permute.xlu0 0
        %1660 = vperm.xlu0 %1659, %v1568
        %v1661 = vpop.permute.xlu0 %1660
        %1664 = vset.pattern.permute.xlu0 0
        %1665 = vperm.xlu0 %1664, %v1569
        %v1666 = vpop.permute.xlu0 %1665
        %1669 = vset.pattern.permute.xlu0 0
        %1670 = vperm.xlu0 %1669, %v1570
        %v1671 = vpop.permute.xlu0 %1670
        %1674 = vset.pattern.permute.xlu0 0
        %1675 = vperm.xlu0 %1674, %v1571
        %v1676 = vpop.permute.xlu0 %1675
        %1679 = vset.pattern.permute.xlu0 0
        %1680 = vperm.xlu0 %1679, %v1572
        %v1681 = vpop.permute.xlu0 %1680
        %1684 = vset.pattern.permute.xlu0 0
        %1685 = vperm.xlu0 %1684, %v1573
        %v1686 = vpop.permute.xlu0 %1685
        %1689 = vset.pattern.permute.xlu0 0
        %1690 = vperm.xlu0 %1689, %v1574
        %v1691 = vpop.permute.xlu0 %1690
        %1694 = vset.pattern.permute.xlu0 0
        %1695 = vperm.xlu0 %1694, %v1575
        %v1696 = vpop.permute.xlu0 %1695
        %1699 = vset.pattern.permute.xlu0 0
        %1700 = vperm.xlu0 %1699, %v1576
        %v1701 = vpop.permute.xlu0 %1700
        %1704 = vset.pattern.permute.xlu0 0
        %1705 = vperm.xlu0 %1704, %v1577
        %v1706 = vpop.permute.xlu0 %1705
        %1709 = vset.pattern.permute.xlu0 0
        %1710 = vperm.xlu0 %1709, %v1578
        %v1711 = vpop.permute.xlu0 %1710
        %1714 = vset.pattern.permute.xlu0 0
        %1715 = vperm.xlu0 %1714, %v1579
        %v1716 = vpop.permute.xlu0 %1715
        %1719 = vset.pattern.permute.xlu0 0
        %1720 = vperm.xlu0 %1719, %v1580
        %v1721 = vpop.permute.xlu0 %1720
        %1724 = vset.pattern.permute.xlu0 0
        %1725 = vperm.xlu0 %1724, %v1581
        %v1726 = vpop.permute.xlu0 %1725
        %1729 = vset.pattern.permute.xlu0 0
        %1730 = vperm.xlu0 %1729, %v1582
        %v1731 = vpop.permute.xlu0 %1730
        %1734 = vset.pattern.permute.xlu0 0
        %1735 = vperm.xlu0 %1734, %v1583
        %v1736 = vpop.permute.xlu0 %1735
        %1739 = vset.pattern.permute.xlu0 0
        %1740 = vperm.xlu0 %1739, %v1584
        %v1741 = vpop.permute.xlu0 %1740
        %1744 = vset.pattern.permute.xlu0 0
        %1745 = vperm.xlu0 %1744, %v1585
        %v1746 = vpop.permute.xlu0 %1745
        %v1749 = vperm.slane %v1587, 0
        %v1751 = vmul.f32 %v1591, %v1749
        %v1752 = vmul.f32 %v1596, %v1749
        %v1753 = vmul.f32 %v1601, %v1749
        %v1754 = vmul.f32 %v1606, %v1749
        %v1755 = vmul.f32 %v1611, %v1749
        %v1756 = vmul.f32 %v1616, %v1749
        %v1757 = vmul.f32 %v1621, %v1749
        %v1758 = vmul.f32 %v1626, %v1749
        %v1759 = vmul.f32 %v1631, %v1749
        %v1760 = vmul.f32 %v1636, %v1749
        %v1761 = vmul.f32 %v1641, %v1749
        %v1762 = vmul.f32 %v1646, %v1749
        %v1763 = vmul.f32 %v1651, %v1749
        %v1764 = vmul.f32 %v1656, %v1749
        %v1765 = vmul.f32 %v1661, %v1749
        %v1766 = vmul.f32 %v1666, %v1749
        %v1767 = vmul.f32 %v1671, %v1749
        %v1768 = vmul.f32 %v1676, %v1749
        %v1769 = vmul.f32 %v1681, %v1749
        %v1770 = vmul.f32 %v1686, %v1749
        %v1771 = vmul.f32 %v1691, %v1749
        %v1772 = vmul.f32 %v1696, %v1749
        %v1773 = vmul.f32 %v1701, %v1749
        %v1774 = vmul.f32 %v1706, %v1749
        %v1775 = vmul.f32 %v1711, %v1749
        %v1776 = vmul.f32 %v1716, %v1749
        %v1777 = vmul.f32 %v1721, %v1749
        %v1778 = vmul.f32 %v1726, %v1749
        %v1779 = vmul.f32 %v1731, %v1749
        %v1780 = vmul.f32 %v1736, %v1749
        %v1781 = vmul.f32 %v1741, %v1749
        %v1782 = vmul.f32 %v1746, %v1749
        %v1783 = vadd.f32 %v1458, %v1751
        %v1784 = vadd.f32 %v1459, %v1752
        %v1785 = vadd.f32 %v1460, %v1753
        %v1786 = vadd.f32 %v1461, %v1754
        %v1787 = vadd.f32 %v1462, %v1755
        %v1788 = vadd.f32 %v1463, %v1756
        %v1789 = vadd.f32 %v1464, %v1757
        %v1790 = vadd.f32 %v1465, %v1758
        %v1791 = vadd.f32 %v1466, %v1759
        %v1792 = vadd.f32 %v1467, %v1760
        %v1793 = vadd.f32 %v1468, %v1761
        %v1794 = vadd.f32 %v1469, %v1762
        %v1795 = vadd.f32 %v1470, %v1763
        %v1796 = vadd.f32 %v1471, %v1764
        %v1797 = vadd.f32 %v1472, %v1765
        %v1798 = vadd.f32 %v1473, %v1766
        %v1799 = vadd.f32 %v1474, %v1767
        %v1800 = vadd.f32 %v1475, %v1768
        %v1801 = vadd.f32 %v1476, %v1769
        %v1802 = vadd.f32 %v1477, %v1770
        %v1803 = vadd.f32 %v1478, %v1771
        %v1804 = vadd.f32 %v1479, %v1772
        %v1805 = vadd.f32 %v1480, %v1773
        %v1806 = vadd.f32 %v1481, %v1774
        %v1807 = vadd.f32 %v1482, %v1775
        %v1808 = vadd.f32 %v1483, %v1776
        %v1809 = vadd.f32 %v1484, %v1777
        %v1810 = vadd.f32 %v1485, %v1778
        %v1811 = vadd.f32 %v1486, %v1779
        %v1812 = vadd.f32 %v1487, %v1780
        %v1813 = vadd.f32 %v1488, %v1781
        %v1814 = vadd.f32 %v1489, %v1782
        %v1815 = vld [vmem:[#allocation2 + $0x17] sm:$0xff]
        %v1816 = vld [vmem:[#allocation2 + $0x1f] sm:$0xff]
        %v1817 = vld [vmem:[#allocation2 + $0x27] sm:$0xff]
        %v1818 = vld [vmem:[#allocation2 + $0x2f] sm:$0xff]
        %v1819 = vld [vmem:[#allocation2 + $0x37] sm:$0xff]
        %v1820 = vld [vmem:[#allocation2 + $0x3f] sm:$0xff]
        %v1821 = vld [vmem:[#allocation2 + $0x47] sm:$0xff]
        %v1822 = vld [vmem:[#allocation2 + $0x4f] sm:$0xff]
        %v1823 = vld [vmem:[#allocation2 + $0x57] sm:$0xff]
        %v1824 = vld [vmem:[#allocation2 + $0x5f] sm:$0xff]
        %v1825 = vld [vmem:[#allocation2 + $0x67] sm:$0xff]
        %v1826 = vld [vmem:[#allocation2 + $0x6f] sm:$0xff]
        %v1827 = vld [vmem:[#allocation2 + $0x77] sm:$0xff]
        %v1828 = vld [vmem:[#allocation2 + $0x7f] sm:$0xff]
        %v1829 = vld [vmem:[#allocation2 + $0x87] sm:$0xff]
        %v1830 = vld [vmem:[#allocation2 + $0x8f] sm:$0xff]
        %v1831 = vld [vmem:[#allocation2 + $0x97] sm:$0xff]
        %v1832 = vld [vmem:[#allocation2 + $0x9f] sm:$0xff]
        %v1833 = vld [vmem:[#allocation2 + $0xa7] sm:$0xff]
        %v1834 = vld [vmem:[#allocation2 + $0xaf] sm:$0xff]
        %v1835 = vld [vmem:[#allocation2 + $0xb7] sm:$0xff]
        %v1836 = vld [vmem:[#allocation2 + $0xbf] sm:$0xff]
        %v1837 = vld [vmem:[#allocation2 + $0xc7] sm:$0xff]
        %v1838 = vld [vmem:[#allocation2 + $0xcf] sm:$0xff]
        %v1839 = vld [vmem:[#allocation2 + $0xd7] sm:$0xff]
        %v1840 = vld [vmem:[#allocation2 + $0xdf] sm:$0xff]
        %v1841 = vld [vmem:[#allocation2 + $0xe7] sm:$0xff]
        %v1842 = vld [vmem:[#allocation2 + $0xef] sm:$0xff]
        %v1843 = vld [vmem:[#allocation2 + $0xf7] sm:$0xff]
        %v1844 = vld [vmem:[#allocation2 + $0xff] sm:$0xff]
        %v1845 = vld [vmem:[#allocation2 + $0x107] sm:$0xff]
        %v1846 = vld [vmem:[#allocation2 + $0x10f] sm:$0xff]
        %v1847 = vsel %vm937, %v1815, 0.0
        %v1848 = vsel %vm938, %v1816, 0.0
        %v1849 = vsel %vm939, %v1817, 0.0
        %v1850 = vsel %vm940, %v1818, 0.0
        %v1851 = vsel %vm941, %v1819, 0.0
        %v1852 = vsel %vm942, %v1820, 0.0
        %v1853 = vsel %vm943, %v1821, 0.0
        %v1854 = vsel %vm944, %v1822, 0.0
        %v1855 = vsel %vm945, %v1823, 0.0
        %v1856 = vsel %vm946, %v1824, 0.0
        %v1857 = vsel %vm947, %v1825, 0.0
        %v1858 = vsel %vm948, %v1826, 0.0
        %v1859 = vsel %vm949, %v1827, 0.0
        %v1860 = vsel %vm950, %v1828, 0.0
        %v1861 = vsel %vm951, %v1829, 0.0
        %v1862 = vsel %vm952, %v1830, 0.0
        %v1863 = vsel %vm953, %v1831, 0.0
        %v1864 = vsel %vm954, %v1832, 0.0
        %v1865 = vsel %vm955, %v1833, 0.0
        %v1866 = vsel %vm956, %v1834, 0.0
        %v1867 = vsel %vm957, %v1835, 0.0
        %v1868 = vsel %vm958, %v1836, 0.0
        %v1869 = vsel %vm959, %v1837, 0.0
        %v1870 = vsel %vm960, %v1838, 0.0
        %v1871 = vsel %vm961, %v1839, 0.0
        %v1872 = vsel %vm962, %v1840, 0.0
        %v1873 = vsel %vm963, %v1841, 0.0
        %v1874 = vsel %vm964, %v1842, 0.0
        %v1875 = vsel %vm965, %v1843, 0.0
        %v1876 = vsel %vm966, %v1844, 0.0
        %v1877 = vsel %vm967, %v1845, 0.0
        %v1878 = vsel %vm968, %v1846, 0.0
        %s1879 = scalar_lea.vmem %s1, 3
        %v1880 = vld [vmem:[%s1879] sm:$0x1]
        %1882 = vset.pattern.permute.xlu0 0
        %1883 = vperm.xlu0 %1882, %v1847
        %v1884 = vpop.permute.xlu0 %1883
        %1887 = vset.pattern.permute.xlu0 0
        %1888 = vperm.xlu0 %1887, %v1848
        %v1889 = vpop.permute.xlu0 %1888
        %1892 = vset.pattern.permute.xlu0 0
        %1893 = vperm.xlu0 %1892, %v1849
        %v1894 = vpop.permute.xlu0 %1893
        %1897 = vset.pattern.permute.xlu0 0
        %1898 = vperm.xlu0 %1897, %v1850
        %v1899 = vpop.permute.xlu0 %1898
        %1902 = vset.pattern.permute.xlu0 0
        %1903 = vperm.xlu0 %1902, %v1851
        %v1904 = vpop.permute.xlu0 %1903
        %1907 = vset.pattern.permute.xlu0 0
        %1908 = vperm.xlu0 %1907, %v1852
        %v1909 = vpop.permute.xlu0 %1908
        %1912 = vset.pattern.permute.xlu0 0
        %1913 = vperm.xlu0 %1912, %v1853
        %v1914 = vpop.permute.xlu0 %1913
        %1917 = vset.pattern.permute.xlu0 0
        %1918 = vperm.xlu0 %1917, %v1854
        %v1919 = vpop.permute.xlu0 %1918
        %1922 = vset.pattern.permute.xlu0 0
        %1923 = vperm.xlu0 %1922, %v1855
        %v1924 = vpop.permute.xlu0 %1923
        %1927 = vset.pattern.permute.xlu0 0
        %1928 = vperm.xlu0 %1927, %v1856
        %v1929 = vpop.permute.xlu0 %1928
        %1932 = vset.pattern.permute.xlu0 0
        %1933 = vperm.xlu0 %1932, %v1857
        %v1934 = vpop.permute.xlu0 %1933
        %1937 = vset.pattern.permute.xlu0 0
        %1938 = vperm.xlu0 %1937, %v1858
        %v1939 = vpop.permute.xlu0 %1938
        %1942 = vset.pattern.permute.xlu0 0
        %1943 = vperm.xlu0 %1942, %v1859
        %v1944 = vpop.permute.xlu0 %1943
        %1947 = vset.pattern.permute.xlu0 0
        %1948 = vperm.xlu0 %1947, %v1860
        %v1949 = vpop.permute.xlu0 %1948
        %1952 = vset.pattern.permute.xlu0 0
        %1953 = vperm.xlu0 %1952, %v1861
        %v1954 = vpop.permute.xlu0 %1953
        %1957 = vset.pattern.permute.xlu0 0
        %1958 = vperm.xlu0 %1957, %v1862
        %v1959 = vpop.permute.xlu0 %1958
        %1962 = vset.pattern.permute.xlu0 0
        %1963 = vperm.xlu0 %1962, %v1863
        %v1964 = vpop.permute.xlu0 %1963
        %1967 = vset.pattern.permute.xlu0 0
        %1968 = vperm.xlu0 %1967, %v1864
        %v1969 = vpop.permute.xlu0 %1968
        %1972 = vset.pattern.permute.xlu0 0
        %1973 = vperm.xlu0 %1972, %v1865
        %v1974 = vpop.permute.xlu0 %1973
        %1977 = vset.pattern.permute.xlu0 0
        %1978 = vperm.xlu0 %1977, %v1866
        %v1979 = vpop.permute.xlu0 %1978
        %1982 = vset.pattern.permute.xlu0 0
        %1983 = vperm.xlu0 %1982, %v1867
        %v1984 = vpop.permute.xlu0 %1983
        %1987 = vset.pattern.permute.xlu0 0
        %1988 = vperm.xlu0 %1987, %v1868
        %v1989 = vpop.permute.xlu0 %1988
        %1992 = vset.pattern.permute.xlu0 0
        %1993 = vperm.xlu0 %1992, %v1869
        %v1994 = vpop.permute.xlu0 %1993
        %1997 = vset.pattern.permute.xlu0 0
        %1998 = vperm.xlu0 %1997, %v1870
        %v1999 = vpop.permute.xlu0 %1998
        %2002 = vset.pattern.permute.xlu0 0
        %2003 = vperm.xlu0 %2002, %v1871
        %v2004 = vpop.permute.xlu0 %2003
        %2007 = vset.pattern.permute.xlu0 0
        %2008 = vperm.xlu0 %2007, %v1872
        %v2009 = vpop.permute.xlu0 %2008
        %2012 = vset.pattern.permute.xlu0 0
        %2013 = vperm.xlu0 %2012, %v1873
        %v2014 = vpop.permute.xlu0 %2013
        %2017 = vset.pattern.permute.xlu0 0
        %2018 = vperm.xlu0 %2017, %v1874
        %v2019 = vpop.permute.xlu0 %2018
        %2022 = vset.pattern.permute.xlu0 0
        %2023 = vperm.xlu0 %2022, %v1875
        %v2024 = vpop.permute.xlu0 %2023
        %2027 = vset.pattern.permute.xlu0 0
        %2028 = vperm.xlu0 %2027, %v1876
        %v2029 = vpop.permute.xlu0 %2028
        %2032 = vset.pattern.permute.xlu0 0
        %2033 = vperm.xlu0 %2032, %v1877
        %v2034 = vpop.permute.xlu0 %2033
        %2037 = vset.pattern.permute.xlu0 0
        %2038 = vperm.xlu0 %2037, %v1878
        %v2039 = vpop.permute.xlu0 %2038
        %v2042 = vperm.slane %v1880, 0
        %v2044 = vmul.f32 %v1884, %v2042
        %v2045 = vmul.f32 %v1889, %v2042
        %v2046 = vmul.f32 %v1894, %v2042
        %v2047 = vmul.f32 %v1899, %v2042
        %v2048 = vmul.f32 %v1904, %v2042
        %v2049 = vmul.f32 %v1909, %v2042
        %v2050 = vmul.f32 %v1914, %v2042
        %v2051 = vmul.f32 %v1919, %v2042
        %v2052 = vmul.f32 %v1924, %v2042
        %v2053 = vmul.f32 %v1929, %v2042
        %v2054 = vmul.f32 %v1934, %v2042
        %v2055 = vmul.f32 %v1939, %v2042
        %v2056 = vmul.f32 %v1944, %v2042
        %v2057 = vmul.f32 %v1949, %v2042
        %v2058 = vmul.f32 %v1954, %v2042
        %v2059 = vmul.f32 %v1959, %v2042
        %v2060 = vmul.f32 %v1964, %v2042
        %v2061 = vmul.f32 %v1969, %v2042
        %v2062 = vmul.f32 %v1974, %v2042
        %v2063 = vmul.f32 %v1979, %v2042
        %v2064 = vmul.f32 %v1984, %v2042
        %v2065 = vmul.f32 %v1989, %v2042
        %v2066 = vmul.f32 %v1994, %v2042
        %v2067 = vmul.f32 %v1999, %v2042
        %v2068 = vmul.f32 %v2004, %v2042
        %v2069 = vmul.f32 %v2009, %v2042
        %v2070 = vmul.f32 %v2014, %v2042
        %v2071 = vmul.f32 %v2019, %v2042
        %v2072 = vmul.f32 %v2024, %v2042
        %v2073 = vmul.f32 %v2029, %v2042
        %v2074 = vmul.f32 %v2034, %v2042
        %v2075 = vmul.f32 %v2039, %v2042
        %v2076 = vadd.f32 %v1783, %v2044
        %v2077 = vadd.f32 %v1784, %v2045
        %v2078 = vadd.f32 %v1785, %v2046
        %v2079 = vadd.f32 %v1786, %v2047
        %v2080 = vadd.f32 %v1787, %v2048
        %v2081 = vadd.f32 %v1788, %v2049
        %v2082 = vadd.f32 %v1789, %v2050
        %v2083 = vadd.f32 %v1790, %v2051
        %v2084 = vadd.f32 %v1791, %v2052
        %v2085 = vadd.f32 %v1792, %v2053
        %v2086 = vadd.f32 %v1793, %v2054
        %v2087 = vadd.f32 %v1794, %v2055
        %v2088 = vadd.f32 %v1795, %v2056
        %v2089 = vadd.f32 %v1796, %v2057
        %v2090 = vadd.f32 %v1797, %v2058
        %v2091 = vadd.f32 %v1798, %v2059
        %v2092 = vadd.f32 %v1799, %v2060
        %v2093 = vadd.f32 %v1800, %v2061
        %v2094 = vadd.f32 %v1801, %v2062
        %v2095 = vadd.f32 %v1802, %v2063
        %v2096 = vadd.f32 %v1803, %v2064
        %v2097 = vadd.f32 %v1804, %v2065
        %v2098 = vadd.f32 %v1805, %v2066
        %v2099 = vadd.f32 %v1806, %v2067
        %v2100 = vadd.f32 %v1807, %v2068
        %v2101 = vadd.f32 %v1808, %v2069
        %v2102 = vadd.f32 %v1809, %v2070
        %v2103 = vadd.f32 %v1810, %v2071
        %v2104 = vadd.f32 %v1811, %v2072
        %v2105 = vadd.f32 %v1812, %v2073
        %v2106 = vadd.f32 %v1813, %v2074
        %v2107 = vadd.f32 %v1814, %v2075
        %v2108 = vld [vmem:[#allocation2 + $0x18] sm:$0xff]
        %v2109 = vld [vmem:[#allocation2 + $0x20] sm:$0xff]
        %v2110 = vld [vmem:[#allocation2 + $0x28] sm:$0xff]
        %v2111 = vld [vmem:[#allocation2 + $0x30] sm:$0xff]
        %v2112 = vld [vmem:[#allocation2 + $0x38] sm:$0xff]
        %v2113 = vld [vmem:[#allocation2 + $0x40] sm:$0xff]
        %v2114 = vld [vmem:[#allocation2 + $0x48] sm:$0xff]
        %v2115 = vld [vmem:[#allocation2 + $0x50] sm:$0xff]
        %v2116 = vld [vmem:[#allocation2 + $0x58] sm:$0xff]
        %v2117 = vld [vmem:[#allocation2 + $0x60] sm:$0xff]
        %v2118 = vld [vmem:[#allocation2 + $0x68] sm:$0xff]
        %v2119 = vld [vmem:[#allocation2 + $0x70] sm:$0xff]
        %v2120 = vld [vmem:[#allocation2 + $0x78] sm:$0xff]
        %v2121 = vld [vmem:[#allocation2 + $0x80] sm:$0xff]
        %v2122 = vld [vmem:[#allocation2 + $0x88] sm:$0xff]
        %v2123 = vld [vmem:[#allocation2 + $0x90] sm:$0xff]
        %v2124 = vld [vmem:[#allocation2 + $0x98] sm:$0xff]
        %v2125 = vld [vmem:[#allocation2 + $0xa0] sm:$0xff]
        %v2126 = vld [vmem:[#allocation2 + $0xa8] sm:$0xff]
        %v2127 = vld [vmem:[#allocation2 + $0xb0] sm:$0xff]
        %v2128 = vld [vmem:[#allocation2 + $0xb8] sm:$0xff]
        %v2129 = vld [vmem:[#allocation2 + $0xc0] sm:$0xff]
        %v2130 = vld [vmem:[#allocation2 + $0xc8] sm:$0xff]
        %v2131 = vld [vmem:[#allocation2 + $0xd0] sm:$0xff]
        %v2132 = vld [vmem:[#allocation2 + $0xd8] sm:$0xff]
        %v2133 = vld [vmem:[#allocation2 + $0xe0] sm:$0xff]
        %v2134 = vld [vmem:[#allocation2 + $0xe8] sm:$0xff]
        %v2135 = vld [vmem:[#allocation2 + $0xf0] sm:$0xff]
        %v2136 = vld [vmem:[#allocation2 + $0xf8] sm:$0xff]
        %v2137 = vld [vmem:[#allocation2 + $0x100] sm:$0xff]
        %v2138 = vld [vmem:[#allocation2 + $0x108] sm:$0xff]
        %v2139 = vld [vmem:[#allocation2 + $0x110] sm:$0xff]
        %s2140 = scalar_lea.vmem %s1, 4
        %v2141 = vld [vmem:[%s2140] sm:$0x1]
        %2143 = vset.pattern.permute.xlu0 0
        %2144 = vperm.xlu0 %2143, %v2108
        %v2145 = vpop.permute.xlu0 %2144
        %2148 = vset.pattern.permute.xlu0 0
        %2149 = vperm.xlu0 %2148, %v2109
        %v2150 = vpop.permute.xlu0 %2149
        %2153 = vset.pattern.permute.xlu0 0
        %2154 = vperm.xlu0 %2153, %v2110
        %v2155 = vpop.permute.xlu0 %2154
        %2158 = vset.pattern.permute.xlu0 0
        %2159 = vperm.xlu0 %2158, %v2111
        %v2160 = vpop.permute.xlu0 %2159
        %2163 = vset.pattern.permute.xlu0 0
        %2164 = vperm.xlu0 %2163, %v2112
        %v2165 = vpop.permute.xlu0 %2164
        %2168 = vset.pattern.permute.xlu0 0
        %2169 = vperm.xlu0 %2168, %v2113
        %v2170 = vpop.permute.xlu0 %2169
        %2173 = vset.pattern.permute.xlu0 0
        %2174 = vperm.xlu0 %2173, %v2114
        %v2175 = vpop.permute.xlu0 %2174
        %2178 = vset.pattern.permute.xlu0 0
        %2179 = vperm.xlu0 %2178, %v2115
        %v2180 = vpop.permute.xlu0 %2179
        %2183 = vset.pattern.permute.xlu0 0
        %2184 = vperm.xlu0 %2183, %v2116
        %v2185 = vpop.permute.xlu0 %2184
        %2188 = vset.pattern.permute.xlu0 0
        %2189 = vperm.xlu0 %2188, %v2117
        %v2190 = vpop.permute.xlu0 %2189
        %2193 = vset.pattern.permute.xlu0 0
        %2194 = vperm.xlu0 %2193, %v2118
        %v2195 = vpop.permute.xlu0 %2194
        %2198 = vset.pattern.permute.xlu0 0
        %2199 = vperm.xlu0 %2198, %v2119
        %v2200 = vpop.permute.xlu0 %2199
        %2203 = vset.pattern.permute.xlu0 0
        %2204 = vperm.xlu0 %2203, %v2120
        %v2205 = vpop.permute.xlu0 %2204
        %2208 = vset.pattern.permute.xlu0 0
        %2209 = vperm.xlu0 %2208, %v2121
        %v2210 = vpop.permute.xlu0 %2209
        %2213 = vset.pattern.permute.xlu0 0
        %2214 = vperm.xlu0 %2213, %v2122
        %v2215 = vpop.permute.xlu0 %2214
        %2218 = vset.pattern.permute.xlu0 0
        %2219 = vperm.xlu0 %2218, %v2123
        %v2220 = vpop.permute.xlu0 %2219
        %2223 = vset.pattern.permute.xlu0 0
        %2224 = vperm.xlu0 %2223, %v2124
        %v2225 = vpop.permute.xlu0 %2224
        %2228 = vset.pattern.permute.xlu0 0
        %2229 = vperm.xlu0 %2228, %v2125
        %v2230 = vpop.permute.xlu0 %2229
        %2233 = vset.pattern.permute.xlu0 0
        %2234 = vperm.xlu0 %2233, %v2126
        %v2235 = vpop.permute.xlu0 %2234
        %2238 = vset.pattern.permute.xlu0 0
        %2239 = vperm.xlu0 %2238, %v2127
        %v2240 = vpop.permute.xlu0 %2239
        %2243 = vset.pattern.permute.xlu0 0
        %2244 = vperm.xlu0 %2243, %v2128
        %v2245 = vpop.permute.xlu0 %2244
        %2248 = vset.pattern.permute.xlu0 0
        %2249 = vperm.xlu0 %2248, %v2129
        %v2250 = vpop.permute.xlu0 %2249
        %2253 = vset.pattern.permute.xlu0 0
        %2254 = vperm.xlu0 %2253, %v2130
        %v2255 = vpop.permute.xlu0 %2254
        %2258 = vset.pattern.permute.xlu0 0
        %2259 = vperm.xlu0 %2258, %v2131
        %v2260 = vpop.permute.xlu0 %2259
        %2263 = vset.pattern.permute.xlu0 0
        %2264 = vperm.xlu0 %2263, %v2132
        %v2265 = vpop.permute.xlu0 %2264
        %2268 = vset.pattern.permute.xlu0 0
        %2269 = vperm.xlu0 %2268, %v2133
        %v2270 = vpop.permute.xlu0 %2269
        %2273 = vset.pattern.permute.xlu0 0
        %2274 = vperm.xlu0 %2273, %v2134
        %v2275 = vpop.permute.xlu0 %2274
        %2278 = vset.pattern.permute.xlu0 0
        %2279 = vperm.xlu0 %2278, %v2135
        %v2280 = vpop.permute.xlu0 %2279
        %2283 = vset.pattern.permute.xlu0 0
        %2284 = vperm.xlu0 %2283, %v2136
        %v2285 = vpop.permute.xlu0 %2284
        %2288 = vset.pattern.permute.xlu0 0
        %2289 = vperm.xlu0 %2288, %v2137
        %v2290 = vpop.permute.xlu0 %2289
        %2293 = vset.pattern.permute.xlu0 0
        %2294 = vperm.xlu0 %2293, %v2138
        %v2295 = vpop.permute.xlu0 %2294
        %2298 = vset.pattern.permute.xlu0 0
        %2299 = vperm.xlu0 %2298, %v2139
        %v2300 = vpop.permute.xlu0 %2299
        %v2303 = vperm.slane %v2141, 0
        %v2305 = vmul.f32 %v2145, %v2303
        %v2306 = vmul.f32 %v2150, %v2303
        %v2307 = vmul.f32 %v2155, %v2303
        %v2308 = vmul.f32 %v2160, %v2303
        %v2309 = vmul.f32 %v2165, %v2303
        %v2310 = vmul.f32 %v2170, %v2303
        %v2311 = vmul.f32 %v2175, %v2303
        %v2312 = vmul.f32 %v2180, %v2303
        %v2313 = vmul.f32 %v2185, %v2303
        %v2314 = vmul.f32 %v2190, %v2303
        %v2315 = vmul.f32 %v2195, %v2303
        %v2316 = vmul.f32 %v2200, %v2303
        %v2317 = vmul.f32 %v2205, %v2303
        %v2318 = vmul.f32 %v2210, %v2303
        %v2319 = vmul.f32 %v2215, %v2303
        %v2320 = vmul.f32 %v2220, %v2303
        %v2321 = vmul.f32 %v2225, %v2303
        %v2322 = vmul.f32 %v2230, %v2303
        %v2323 = vmul.f32 %v2235, %v2303
        %v2324 = vmul.f32 %v2240, %v2303
        %v2325 = vmul.f32 %v2245, %v2303
        %v2326 = vmul.f32 %v2250, %v2303
        %v2327 = vmul.f32 %v2255, %v2303
        %v2328 = vmul.f32 %v2260, %v2303
        %v2329 = vmul.f32 %v2265, %v2303
        %v2330 = vmul.f32 %v2270, %v2303
        %v2331 = vmul.f32 %v2275, %v2303
        %v2332 = vmul.f32 %v2280, %v2303
        %v2333 = vmul.f32 %v2285, %v2303
        %v2334 = vmul.f32 %v2290, %v2303
        %v2335 = vmul.f32 %v2295, %v2303
        %v2336 = vmul.f32 %v2300, %v2303
        %v2337 = vadd.f32 %v2076, %v2305
        %v2338 = vadd.f32 %v2077, %v2306
        %v2339 = vadd.f32 %v2078, %v2307
        %v2340 = vadd.f32 %v2079, %v2308
        %v2341 = vadd.f32 %v2080, %v2309
        %v2342 = vadd.f32 %v2081, %v2310
        %v2343 = vadd.f32 %v2082, %v2311
        %v2344 = vadd.f32 %v2083, %v2312
        %v2345 = vadd.f32 %v2084, %v2313
        %v2346 = vadd.f32 %v2085, %v2314
        %v2347 = vadd.f32 %v2086, %v2315
        %v2348 = vadd.f32 %v2087, %v2316
        %v2349 = vadd.f32 %v2088, %v2317
        %v2350 = vadd.f32 %v2089, %v2318
        %v2351 = vadd.f32 %v2090, %v2319
        %v2352 = vadd.f32 %v2091, %v2320
        %v2353 = vadd.f32 %v2092, %v2321
        %v2354 = vadd.f32 %v2093, %v2322
        %v2355 = vadd.f32 %v2094, %v2323
        %v2356 = vadd.f32 %v2095, %v2324
        %v2357 = vadd.f32 %v2096, %v2325
        %v2358 = vadd.f32 %v2097, %v2326
        %v2359 = vadd.f32 %v2098, %v2327
        %v2360 = vadd.f32 %v2099, %v2328
        %v2361 = vadd.f32 %v2100, %v2329
        %v2362 = vadd.f32 %v2101, %v2330
        %v2363 = vadd.f32 %v2102, %v2331
        %v2364 = vadd.f32 %v2103, %v2332
        %v2365 = vadd.f32 %v2104, %v2333
        %v2366 = vadd.f32 %v2105, %v2334
        %v2367 = vadd.f32 %v2106, %v2335
        %v2368 = vadd.f32 %v2107, %v2336
        %v2369 = vld [vmem:[#allocation2 + $0x19] sm:$0xff]
        %v2370 = vld [vmem:[#allocation2 + $0x21] sm:$0xff]
        %v2371 = vld [vmem:[#allocation2 + $0x29] sm:$0xff]
        %v2372 = vld [vmem:[#allocation2 + $0x31] sm:$0xff]
        %v2373 = vld [vmem:[#allocation2 + $0x39] sm:$0xff]
        %v2374 = vld [vmem:[#allocation2 + $0x41] sm:$0xff]
        %v2375 = vld [vmem:[#allocation2 + $0x49] sm:$0xff]
        %v2376 = vld [vmem:[#allocation2 + $0x51] sm:$0xff]
        %v2377 = vld [vmem:[#allocation2 + $0x59] sm:$0xff]
        %v2378 = vld [vmem:[#allocation2 + $0x61] sm:$0xff]
        %v2379 = vld [vmem:[#allocation2 + $0x69] sm:$0xff]
        %v2380 = vld [vmem:[#allocation2 + $0x71] sm:$0xff]
        %v2381 = vld [vmem:[#allocation2 + $0x79] sm:$0xff]
        %v2382 = vld [vmem:[#allocation2 + $0x81] sm:$0xff]
        %v2383 = vld [vmem:[#allocation2 + $0x89] sm:$0xff]
        %v2384 = vld [vmem:[#allocation2 + $0x91] sm:$0xff]
        %v2385 = vld [vmem:[#allocation2 + $0x99] sm:$0xff]
        %v2386 = vld [vmem:[#allocation2 + $0xa1] sm:$0xff]
        %v2387 = vld [vmem:[#allocation2 + $0xa9] sm:$0xff]
        %v2388 = vld [vmem:[#allocation2 + $0xb1] sm:$0xff]
        %v2389 = vld [vmem:[#allocation2 + $0xb9] sm:$0xff]
        %v2390 = vld [vmem:[#allocation2 + $0xc1] sm:$0xff]
        %v2391 = vld [vmem:[#allocation2 + $0xc9] sm:$0xff]
        %v2392 = vld [vmem:[#allocation2 + $0xd1] sm:$0xff]
        %v2393 = vld [vmem:[#allocation2 + $0xd9] sm:$0xff]
        %v2394 = vld [vmem:[#allocation2 + $0xe1] sm:$0xff]
        %v2395 = vld [vmem:[#allocation2 + $0xe9] sm:$0xff]
        %v2396 = vld [vmem:[#allocation2 + $0xf1] sm:$0xff]
        %v2397 = vld [vmem:[#allocation2 + $0xf9] sm:$0xff]
        %v2398 = vld [vmem:[#allocation2 + $0x101] sm:$0xff]
        %v2399 = vld [vmem:[#allocation2 + $0x109] sm:$0xff]
        %v2400 = vld [vmem:[#allocation2 + $0x111] sm:$0xff]
        %v2401 = vsel %vm1522, %v2369, 0.0
        %v2402 = vsel %vm1523, %v2370, 0.0
        %v2403 = vsel %vm1524, %v2371, 0.0
        %v2404 = vsel %vm1525, %v2372, 0.0
        %v2405 = vsel %vm1526, %v2373, 0.0
        %v2406 = vsel %vm1527, %v2374, 0.0
        %v2407 = vsel %vm1528, %v2375, 0.0
        %v2408 = vsel %vm1529, %v2376, 0.0
        %v2409 = vsel %vm1530, %v2377, 0.0
        %v2410 = vsel %vm1531, %v2378, 0.0
        %v2411 = vsel %vm1532, %v2379, 0.0
        %v2412 = vsel %vm1533, %v2380, 0.0
        %v2413 = vsel %vm1534, %v2381, 0.0
        %v2414 = vsel %vm1535, %v2382, 0.0
        %v2415 = vsel %vm1536, %v2383, 0.0
        %v2416 = vsel %vm1537, %v2384, 0.0
        %v2417 = vsel %vm1538, %v2385, 0.0
        %v2418 = vsel %vm1539, %v2386, 0.0
        %v2419 = vsel %vm1540, %v2387, 0.0
        %v2420 = vsel %vm1541, %v2388, 0.0
        %v2421 = vsel %vm1542, %v2389, 0.0
        %v2422 = vsel %vm1543, %v2390, 0.0
        %v2423 = vsel %vm1544, %v2391, 0.0
        %v2424 = vsel %vm1545, %v2392, 0.0
        %v2425 = vsel %vm1546, %v2393, 0.0
        %v2426 = vsel %vm1547, %v2394, 0.0
        %v2427 = vsel %vm1548, %v2395, 0.0
        %v2428 = vsel %vm1549, %v2396, 0.0
        %v2429 = vsel %vm1550, %v2397, 0.0
        %v2430 = vsel %vm1551, %v2398, 0.0
        %v2431 = vsel %vm1552, %v2399, 0.0
        %v2432 = vsel %vm1553, %v2400, 0.0
        %s2433 = scalar_lea.vmem %s1, 5
        %v2434 = vld [vmem:[%s2433] sm:$0x1]
        %2436 = vset.pattern.permute.xlu0 0
        %2437 = vperm.xlu0 %2436, %v2401
        %v2438 = vpop.permute.xlu0 %2437
        %2441 = vset.pattern.permute.xlu0 0
        %2442 = vperm.xlu0 %2441, %v2402
        %v2443 = vpop.permute.xlu0 %2442
        %2446 = vset.pattern.permute.xlu0 0
        %2447 = vperm.xlu0 %2446, %v2403
        %v2448 = vpop.permute.xlu0 %2447
        %2451 = vset.pattern.permute.xlu0 0
        %2452 = vperm.xlu0 %2451, %v2404
        %v2453 = vpop.permute.xlu0 %2452
        %2456 = vset.pattern.permute.xlu0 0
        %2457 = vperm.xlu0 %2456, %v2405
        %v2458 = vpop.permute.xlu0 %2457
        %2461 = vset.pattern.permute.xlu0 0
        %2462 = vperm.xlu0 %2461, %v2406
        %v2463 = vpop.permute.xlu0 %2462
        %2466 = vset.pattern.permute.xlu0 0
        %2467 = vperm.xlu0 %2466, %v2407
        %v2468 = vpop.permute.xlu0 %2467
        %2471 = vset.pattern.permute.xlu0 0
        %2472 = vperm.xlu0 %2471, %v2408
        %v2473 = vpop.permute.xlu0 %2472
        %2476 = vset.pattern.permute.xlu0 0
        %2477 = vperm.xlu0 %2476, %v2409
        %v2478 = vpop.permute.xlu0 %2477
        %2481 = vset.pattern.permute.xlu0 0
        %2482 = vperm.xlu0 %2481, %v2410
        %v2483 = vpop.permute.xlu0 %2482
        %2486 = vset.pattern.permute.xlu0 0
        %2487 = vperm.xlu0 %2486, %v2411
        %v2488 = vpop.permute.xlu0 %2487
        %2491 = vset.pattern.permute.xlu0 0
        %2492 = vperm.xlu0 %2491, %v2412
        %v2493 = vpop.permute.xlu0 %2492
        %2496 = vset.pattern.permute.xlu0 0
        %2497 = vperm.xlu0 %2496, %v2413
        %v2498 = vpop.permute.xlu0 %2497
        %2501 = vset.pattern.permute.xlu0 0
        %2502 = vperm.xlu0 %2501, %v2414
        %v2503 = vpop.permute.xlu0 %2502
        %2506 = vset.pattern.permute.xlu0 0
        %2507 = vperm.xlu0 %2506, %v2415
        %v2508 = vpop.permute.xlu0 %2507
        %2511 = vset.pattern.permute.xlu0 0
        %2512 = vperm.xlu0 %2511, %v2416
        %v2513 = vpop.permute.xlu0 %2512
        %2516 = vset.pattern.permute.xlu0 0
        %2517 = vperm.xlu0 %2516, %v2417
        %v2518 = vpop.permute.xlu0 %2517
        %2521 = vset.pattern.permute.xlu0 0
        %2522 = vperm.xlu0 %2521, %v2418
        %v2523 = vpop.permute.xlu0 %2522
        %2526 = vset.pattern.permute.xlu0 0
        %2527 = vperm.xlu0 %2526, %v2419
        %v2528 = vpop.permute.xlu0 %2527
        %2531 = vset.pattern.permute.xlu0 0
        %2532 = vperm.xlu0 %2531, %v2420
        %v2533 = vpop.permute.xlu0 %2532
        %2536 = vset.pattern.permute.xlu0 0
        %2537 = vperm.xlu0 %2536, %v2421
        %v2538 = vpop.permute.xlu0 %2537
        %2541 = vset.pattern.permute.xlu0 0
        %2542 = vperm.xlu0 %2541, %v2422
        %v2543 = vpop.permute.xlu0 %2542
        %2546 = vset.pattern.permute.xlu0 0
        %2547 = vperm.xlu0 %2546, %v2423
        %v2548 = vpop.permute.xlu0 %2547
        %2551 = vset.pattern.permute.xlu0 0
        %2552 = vperm.xlu0 %2551, %v2424
        %v2553 = vpop.permute.xlu0 %2552
        %2556 = vset.pattern.permute.xlu0 0
        %2557 = vperm.xlu0 %2556, %v2425
        %v2558 = vpop.permute.xlu0 %2557
        %2561 = vset.pattern.permute.xlu0 0
        %2562 = vperm.xlu0 %2561, %v2426
        %v2563 = vpop.permute.xlu0 %2562
        %2566 = vset.pattern.permute.xlu0 0
        %2567 = vperm.xlu0 %2566, %v2427
        %v2568 = vpop.permute.xlu0 %2567
        %2571 = vset.pattern.permute.xlu0 0
        %2572 = vperm.xlu0 %2571, %v2428
        %v2573 = vpop.permute.xlu0 %2572
        %2576 = vset.pattern.permute.xlu0 0
        %2577 = vperm.xlu0 %2576, %v2429
        %v2578 = vpop.permute.xlu0 %2577
        %2581 = vset.pattern.permute.xlu0 0
        %2582 = vperm.xlu0 %2581, %v2430
        %v2583 = vpop.permute.xlu0 %2582
        %2586 = vset.pattern.permute.xlu0 0
        %2587 = vperm.xlu0 %2586, %v2431
        %v2588 = vpop.permute.xlu0 %2587
        %2591 = vset.pattern.permute.xlu0 0
        %2592 = vperm.xlu0 %2591, %v2432
        %v2593 = vpop.permute.xlu0 %2592
        %v2596 = vperm.slane %v2434, 0
        %v2598 = vmul.f32 %v2438, %v2596
        %v2599 = vmul.f32 %v2443, %v2596
        %v2600 = vmul.f32 %v2448, %v2596
        %v2601 = vmul.f32 %v2453, %v2596
        %v2602 = vmul.f32 %v2458, %v2596
        %v2603 = vmul.f32 %v2463, %v2596
        %v2604 = vmul.f32 %v2468, %v2596
        %v2605 = vmul.f32 %v2473, %v2596
        %v2606 = vmul.f32 %v2478, %v2596
        %v2607 = vmul.f32 %v2483, %v2596
        %v2608 = vmul.f32 %v2488, %v2596
        %v2609 = vmul.f32 %v2493, %v2596
        %v2610 = vmul.f32 %v2498, %v2596
        %v2611 = vmul.f32 %v2503, %v2596
        %v2612 = vmul.f32 %v2508, %v2596
        %v2613 = vmul.f32 %v2513, %v2596
        %v2614 = vmul.f32 %v2518, %v2596
        %v2615 = vmul.f32 %v2523, %v2596
        %v2616 = vmul.f32 %v2528, %v2596
        %v2617 = vmul.f32 %v2533, %v2596
        %v2618 = vmul.f32 %v2538, %v2596
        %v2619 = vmul.f32 %v2543, %v2596
        %v2620 = vmul.f32 %v2548, %v2596
        %v2621 = vmul.f32 %v2553, %v2596
        %v2622 = vmul.f32 %v2558, %v2596
        %v2623 = vmul.f32 %v2563, %v2596
        %v2624 = vmul.f32 %v2568, %v2596
        %v2625 = vmul.f32 %v2573, %v2596
        %v2626 = vmul.f32 %v2578, %v2596
        %v2627 = vmul.f32 %v2583, %v2596
        %v2628 = vmul.f32 %v2588, %v2596
        %v2629 = vmul.f32 %v2593, %v2596
        %v2630 = vadd.f32 %v2337, %v2598
        %v2631 = vadd.f32 %v2338, %v2599
        %v2632 = vadd.f32 %v2339, %v2600
        %v2633 = vadd.f32 %v2340, %v2601
        %v2634 = vadd.f32 %v2341, %v2602
        %v2635 = vadd.f32 %v2342, %v2603
        %v2636 = vadd.f32 %v2343, %v2604
        %v2637 = vadd.f32 %v2344, %v2605
        %v2638 = vadd.f32 %v2345, %v2606
        %v2639 = vadd.f32 %v2346, %v2607
        %v2640 = vadd.f32 %v2347, %v2608
        %v2641 = vadd.f32 %v2348, %v2609
        %v2642 = vadd.f32 %v2349, %v2610
        %v2643 = vadd.f32 %v2350, %v2611
        %v2644 = vadd.f32 %v2351, %v2612
        %v2645 = vadd.f32 %v2352, %v2613
        %v2646 = vadd.f32 %v2353, %v2614
        %v2647 = vadd.f32 %v2354, %v2615
        %v2648 = vadd.f32 %v2355, %v2616
        %v2649 = vadd.f32 %v2356, %v2617
        %v2650 = vadd.f32 %v2357, %v2618
        %v2651 = vadd.f32 %v2358, %v2619
        %v2652 = vadd.f32 %v2359, %v2620
        %v2653 = vadd.f32 %v2360, %v2621
        %v2654 = vadd.f32 %v2361, %v2622
        %v2655 = vadd.f32 %v2362, %v2623
        %v2656 = vadd.f32 %v2363, %v2624
        %v2657 = vadd.f32 %v2364, %v2625
        %v2658 = vadd.f32 %v2365, %v2626
        %v2659 = vadd.f32 %v2366, %v2627
        %v2660 = vadd.f32 %v2367, %v2628
        %v2661 = vadd.f32 %v2368, %v2629
        %v2662 = vld [vmem:[#allocation2 + $0x27] sm:$0xff]
        %v2663 = vld [vmem:[#allocation2 + $0x2f] sm:$0xff]
        %v2664 = vld [vmem:[#allocation2 + $0x37] sm:$0xff]
        %v2665 = vld [vmem:[#allocation2 + $0x3f] sm:$0xff]
        %v2666 = vld [vmem:[#allocation2 + $0x47] sm:$0xff]
        %v2667 = vld [vmem:[#allocation2 + $0x4f] sm:$0xff]
        %v2668 = vld [vmem:[#allocation2 + $0x57] sm:$0xff]
        %v2669 = vld [vmem:[#allocation2 + $0x5f] sm:$0xff]
        %v2670 = vld [vmem:[#allocation2 + $0x67] sm:$0xff]
        %v2671 = vld [vmem:[#allocation2 + $0x6f] sm:$0xff]
        %v2672 = vld [vmem:[#allocation2 + $0x77] sm:$0xff]
        %v2673 = vld [vmem:[#allocation2 + $0x7f] sm:$0xff]
        %v2674 = vld [vmem:[#allocation2 + $0x87] sm:$0xff]
        %v2675 = vld [vmem:[#allocation2 + $0x8f] sm:$0xff]
        %v2676 = vld [vmem:[#allocation2 + $0x97] sm:$0xff]
        %v2677 = vld [vmem:[#allocation2 + $0x9f] sm:$0xff]
        %v2678 = vld [vmem:[#allocation2 + $0xa7] sm:$0xff]
        %v2679 = vld [vmem:[#allocation2 + $0xaf] sm:$0xff]
        %v2680 = vld [vmem:[#allocation2 + $0xb7] sm:$0xff]
        %v2681 = vld [vmem:[#allocation2 + $0xbf] sm:$0xff]
        %v2682 = vld [vmem:[#allocation2 + $0xc7] sm:$0xff]
        %v2683 = vld [vmem:[#allocation2 + $0xcf] sm:$0xff]
        %v2684 = vld [vmem:[#allocation2 + $0xd7] sm:$0xff]
        %v2685 = vld [vmem:[#allocation2 + $0xdf] sm:$0xff]
        %v2686 = vld [vmem:[#allocation2 + $0xe7] sm:$0xff]
        %v2687 = vld [vmem:[#allocation2 + $0xef] sm:$0xff]
        %v2688 = vld [vmem:[#allocation2 + $0xf7] sm:$0xff]
        %v2689 = vld [vmem:[#allocation2 + $0xff] sm:$0xff]
        %v2690 = vld [vmem:[#allocation2 + $0x107] sm:$0xff]
        %v2691 = vld [vmem:[#allocation2 + $0x10f] sm:$0xff]
        %v2692 = vld [vmem:[#allocation2 + $0x117] sm:$0xff]
        %v2693 = vld [vmem:[#allocation2 + $0x11f] sm:$0xff]
        %v2694 = vsel %vm937, %v2662, 0.0
        %v2695 = vsel %vm938, %v2663, 0.0
        %v2696 = vsel %vm939, %v2664, 0.0
        %v2697 = vsel %vm940, %v2665, 0.0
        %v2698 = vsel %vm941, %v2666, 0.0
        %v2699 = vsel %vm942, %v2667, 0.0
        %v2700 = vsel %vm943, %v2668, 0.0
        %v2701 = vsel %vm944, %v2669, 0.0
        %v2702 = vsel %vm945, %v2670, 0.0
        %v2703 = vsel %vm946, %v2671, 0.0
        %v2704 = vsel %vm947, %v2672, 0.0
        %v2705 = vsel %vm948, %v2673, 0.0
        %v2706 = vsel %vm949, %v2674, 0.0
        %v2707 = vsel %vm950, %v2675, 0.0
        %v2708 = vsel %vm951, %v2676, 0.0
        %v2709 = vsel %vm952, %v2677, 0.0
        %v2710 = vsel %vm953, %v2678, 0.0
        %v2711 = vsel %vm954, %v2679, 0.0
        %v2712 = vsel %vm955, %v2680, 0.0
        %v2713 = vsel %vm956, %v2681, 0.0
        %v2714 = vsel %vm957, %v2682, 0.0
        %v2715 = vsel %vm958, %v2683, 0.0
        %v2716 = vsel %vm959, %v2684, 0.0
        %v2717 = vsel %vm960, %v2685, 0.0
        %v2718 = vsel %vm961, %v2686, 0.0
        %v2719 = vsel %vm962, %v2687, 0.0
        %v2720 = vsel %vm963, %v2688, 0.0
        %v2721 = vsel %vm964, %v2689, 0.0
        %v2722 = vsel %vm965, %v2690, 0.0
        %v2723 = vsel %vm966, %v2691, 0.0
        %v2724 = vsel %vm967, %v2692, 0.0
        %v2725 = vsel %vm968, %v2693, 0.0
        %s2726 = scalar_lea.vmem %s1, 6
        %v2727 = vld [vmem:[%s2726] sm:$0x1]
        %2729 = vset.pattern.permute.xlu0 0
        %2730 = vperm.xlu0 %2729, %v2694
        %v2731 = vpop.permute.xlu0 %2730
        %2734 = vset.pattern.permute.xlu0 0
        %2735 = vperm.xlu0 %2734, %v2695
        %v2736 = vpop.permute.xlu0 %2735
        %2739 = vset.pattern.permute.xlu0 0
        %2740 = vperm.xlu0 %2739, %v2696
        %v2741 = vpop.permute.xlu0 %2740
        %2744 = vset.pattern.permute.xlu0 0
        %2745 = vperm.xlu0 %2744, %v2697
        %v2746 = vpop.permute.xlu0 %2745
        %2749 = vset.pattern.permute.xlu0 0
        %2750 = vperm.xlu0 %2749, %v2698
        %v2751 = vpop.permute.xlu0 %2750
        %2754 = vset.pattern.permute.xlu0 0
        %2755 = vperm.xlu0 %2754, %v2699
        %v2756 = vpop.permute.xlu0 %2755
        %2759 = vset.pattern.permute.xlu0 0
        %2760 = vperm.xlu0 %2759, %v2700
        %v2761 = vpop.permute.xlu0 %2760
        %2764 = vset.pattern.permute.xlu0 0
        %2765 = vperm.xlu0 %2764, %v2701
        %v2766 = vpop.permute.xlu0 %2765
        %2769 = vset.pattern.permute.xlu0 0
        %2770 = vperm.xlu0 %2769, %v2702
        %v2771 = vpop.permute.xlu0 %2770
        %2774 = vset.pattern.permute.xlu0 0
        %2775 = vperm.xlu0 %2774, %v2703
        %v2776 = vpop.permute.xlu0 %2775
        %2779 = vset.pattern.permute.xlu0 0
        %2780 = vperm.xlu0 %2779, %v2704
        %v2781 = vpop.permute.xlu0 %2780
        %2784 = vset.pattern.permute.xlu0 0
        %2785 = vperm.xlu0 %2784, %v2705
        %v2786 = vpop.permute.xlu0 %2785
        %2789 = vset.pattern.permute.xlu0 0
        %2790 = vperm.xlu0 %2789, %v2706
        %v2791 = vpop.permute.xlu0 %2790
        %2794 = vset.pattern.permute.xlu0 0
        %2795 = vperm.xlu0 %2794, %v2707
        %v2796 = vpop.permute.xlu0 %2795
        %2799 = vset.pattern.permute.xlu0 0
        %2800 = vperm.xlu0 %2799, %v2708
        %v2801 = vpop.permute.xlu0 %2800
        %2804 = vset.pattern.permute.xlu0 0
        %2805 = vperm.xlu0 %2804, %v2709
        %v2806 = vpop.permute.xlu0 %2805
        %2809 = vset.pattern.permute.xlu0 0
        %2810 = vperm.xlu0 %2809, %v2710
        %v2811 = vpop.permute.xlu0 %2810
        %2814 = vset.pattern.permute.xlu0 0
        %2815 = vperm.xlu0 %2814, %v2711
        %v2816 = vpop.permute.xlu0 %2815
        %2819 = vset.pattern.permute.xlu0 0
        %2820 = vperm.xlu0 %2819, %v2712
        %v2821 = vpop.permute.xlu0 %2820
        %2824 = vset.pattern.permute.xlu0 0
        %2825 = vperm.xlu0 %2824, %v2713
        %v2826 = vpop.permute.xlu0 %2825
        %2829 = vset.pattern.permute.xlu0 0
        %2830 = vperm.xlu0 %2829, %v2714
        %v2831 = vpop.permute.xlu0 %2830
        %2834 = vset.pattern.permute.xlu0 0
        %2835 = vperm.xlu0 %2834, %v2715
        %v2836 = vpop.permute.xlu0 %2835
        %2839 = vset.pattern.permute.xlu0 0
        %2840 = vperm.xlu0 %2839, %v2716
        %v2841 = vpop.permute.xlu0 %2840
        %2844 = vset.pattern.permute.xlu0 0
        %2845 = vperm.xlu0 %2844, %v2717
        %v2846 = vpop.permute.xlu0 %2845
        %2849 = vset.pattern.permute.xlu0 0
        %2850 = vperm.xlu0 %2849, %v2718
        %v2851 = vpop.permute.xlu0 %2850
        %2854 = vset.pattern.permute.xlu0 0
        %2855 = vperm.xlu0 %2854, %v2719
        %v2856 = vpop.permute.xlu0 %2855
        %2859 = vset.pattern.permute.xlu0 0
        %2860 = vperm.xlu0 %2859, %v2720
        %v2861 = vpop.permute.xlu0 %2860
        %2864 = vset.pattern.permute.xlu0 0
        %2865 = vperm.xlu0 %2864, %v2721
        %v2866 = vpop.permute.xlu0 %2865
        %2869 = vset.pattern.permute.xlu0 0
        %2870 = vperm.xlu0 %2869, %v2722
        %v2871 = vpop.permute.xlu0 %2870
        %2874 = vset.pattern.permute.xlu0 0
        %2875 = vperm.xlu0 %2874, %v2723
        %v2876 = vpop.permute.xlu0 %2875
        %2879 = vset.pattern.permute.xlu0 0
        %2880 = vperm.xlu0 %2879, %v2724
        %v2881 = vpop.permute.xlu0 %2880
        %2884 = vset.pattern.permute.xlu0 0
        %2885 = vperm.xlu0 %2884, %v2725
        %v2886 = vpop.permute.xlu0 %2885
        %v2889 = vperm.slane %v2727, 0
        %v2891 = vmul.f32 %v2731, %v2889
        %v2892 = vmul.f32 %v2736, %v2889
        %v2893 = vmul.f32 %v2741, %v2889
        %v2894 = vmul.f32 %v2746, %v2889
        %v2895 = vmul.f32 %v2751, %v2889
        %v2896 = vmul.f32 %v2756, %v2889
        %v2897 = vmul.f32 %v2761, %v2889
        %v2898 = vmul.f32 %v2766, %v2889
        %v2899 = vmul.f32 %v2771, %v2889
        %v2900 = vmul.f32 %v2776, %v2889
        %v2901 = vmul.f32 %v2781, %v2889
        %v2902 = vmul.f32 %v2786, %v2889
        %v2903 = vmul.f32 %v2791, %v2889
        %v2904 = vmul.f32 %v2796, %v2889
        %v2905 = vmul.f32 %v2801, %v2889
        %v2906 = vmul.f32 %v2806, %v2889
        %v2907 = vmul.f32 %v2811, %v2889
        %v2908 = vmul.f32 %v2816, %v2889
        %v2909 = vmul.f32 %v2821, %v2889
        %v2910 = vmul.f32 %v2826, %v2889
        %v2911 = vmul.f32 %v2831, %v2889
        %v2912 = vmul.f32 %v2836, %v2889
        %v2913 = vmul.f32 %v2841, %v2889
        %v2914 = vmul.f32 %v2846, %v2889
        %v2915 = vmul.f32 %v2851, %v2889
        %v2916 = vmul.f32 %v2856, %v2889
        %v2917 = vmul.f32 %v2861, %v2889
        %v2918 = vmul.f32 %v2866, %v2889
        %v2919 = vmul.f32 %v2871, %v2889
        %v2920 = vmul.f32 %v2876, %v2889
        %v2921 = vmul.f32 %v2881, %v2889
        %v2922 = vmul.f32 %v2886, %v2889
        %v2923 = vadd.f32 %v2630, %v2891
        %v2924 = vadd.f32 %v2631, %v2892
        %v2925 = vadd.f32 %v2632, %v2893
        %v2926 = vadd.f32 %v2633, %v2894
        %v2927 = vadd.f32 %v2634, %v2895
        %v2928 = vadd.f32 %v2635, %v2896
        %v2929 = vadd.f32 %v2636, %v2897
        %v2930 = vadd.f32 %v2637, %v2898
        %v2931 = vadd.f32 %v2638, %v2899
        %v2932 = vadd.f32 %v2639, %v2900
        %v2933 = vadd.f32 %v2640, %v2901
        %v2934 = vadd.f32 %v2641, %v2902
        %v2935 = vadd.f32 %v2642, %v2903
        %v2936 = vadd.f32 %v2643, %v2904
        %v2937 = vadd.f32 %v2644, %v2905
        %v2938 = vadd.f32 %v2645, %v2906
        %v2939 = vadd.f32 %v2646, %v2907
        %v2940 = vadd.f32 %v2647, %v2908
        %v2941 = vadd.f32 %v2648, %v2909
        %v2942 = vadd.f32 %v2649, %v2910
        %v2943 = vadd.f32 %v2650, %v2911
        %v2944 = vadd.f32 %v2651, %v2912
        %v2945 = vadd.f32 %v2652, %v2913
        %v2946 = vadd.f32 %v2653, %v2914
        %v2947 = vadd.f32 %v2654, %v2915
        %v2948 = vadd.f32 %v2655, %v2916
        %v2949 = vadd.f32 %v2656, %v2917
        %v2950 = vadd.f32 %v2657, %v2918
        %v2951 = vadd.f32 %v2658, %v2919
        %v2952 = vadd.f32 %v2659, %v2920
        %v2953 = vadd.f32 %v2660, %v2921
        %v2954 = vadd.f32 %v2661, %v2922
        %v2955 = vld [vmem:[#allocation2 + $0x28] sm:$0xff]
        %v2956 = vld [vmem:[#allocation2 + $0x30] sm:$0xff]
        %v2957 = vld [vmem:[#allocation2 + $0x38] sm:$0xff]
        %v2958 = vld [vmem:[#allocation2 + $0x40] sm:$0xff]
        %v2959 = vld [vmem:[#allocation2 + $0x48] sm:$0xff]
        %v2960 = vld [vmem:[#allocation2 + $0x50] sm:$0xff]
        %v2961 = vld [vmem:[#allocation2 + $0x58] sm:$0xff]
        %v2962 = vld [vmem:[#allocation2 + $0x60] sm:$0xff]
        %v2963 = vld [vmem:[#allocation2 + $0x68] sm:$0xff]
        %v2964 = vld [vmem:[#allocation2 + $0x70] sm:$0xff]
        %v2965 = vld [vmem:[#allocation2 + $0x78] sm:$0xff]
        %v2966 = vld [vmem:[#allocation2 + $0x80] sm:$0xff]
        %v2967 = vld [vmem:[#allocation2 + $0x88] sm:$0xff]
        %v2968 = vld [vmem:[#allocation2 + $0x90] sm:$0xff]
        %v2969 = vld [vmem:[#allocation2 + $0x98] sm:$0xff]
        %v2970 = vld [vmem:[#allocation2 + $0xa0] sm:$0xff]
        %v2971 = vld [vmem:[#allocation2 + $0xa8] sm:$0xff]
        %v2972 = vld [vmem:[#allocation2 + $0xb0] sm:$0xff]
        %v2973 = vld [vmem:[#allocation2 + $0xb8] sm:$0xff]
        %v2974 = vld [vmem:[#allocation2 + $0xc0] sm:$0xff]
        %v2975 = vld [vmem:[#allocation2 + $0xc8] sm:$0xff]
        %v2976 = vld [vmem:[#allocation2 + $0xd0] sm:$0xff]
        %v2977 = vld [vmem:[#allocation2 + $0xd8] sm:$0xff]
        %v2978 = vld [vmem:[#allocation2 + $0xe0] sm:$0xff]
        %v2979 = vld [vmem:[#allocation2 + $0xe8] sm:$0xff]
        %v2980 = vld [vmem:[#allocation2 + $0xf0] sm:$0xff]
        %v2981 = vld [vmem:[#allocation2 + $0xf8] sm:$0xff]
        %v2982 = vld [vmem:[#allocation2 + $0x100] sm:$0xff]
        %v2983 = vld [vmem:[#allocation2 + $0x108] sm:$0xff]
        %v2984 = vld [vmem:[#allocation2 + $0x110] sm:$0xff]
        %v2985 = vld [vmem:[#allocation2 + $0x118] sm:$0xff]
        %v2986 = vld [vmem:[#allocation2 + $0x120] sm:$0xff]
        %s2987 = scalar_lea.vmem %s1, 7
        %v2988 = vld [vmem:[%s2987] sm:$0x1]
        %2990 = vset.pattern.permute.xlu0 0
        %2991 = vperm.xlu0 %2990, %v2955
        %v2992 = vpop.permute.xlu0 %2991
        %2995 = vset.pattern.permute.xlu0 0
        %2996 = vperm.xlu0 %2995, %v2956
        %v2997 = vpop.permute.xlu0 %2996
        %3000 = vset.pattern.permute.xlu0 0
        %3001 = vperm.xlu0 %3000, %v2957
        %v3002 = vpop.permute.xlu0 %3001
        %3005 = vset.pattern.permute.xlu0 0
        %3006 = vperm.xlu0 %3005, %v2958
        %v3007 = vpop.permute.xlu0 %3006
        %3010 = vset.pattern.permute.xlu0 0
        %3011 = vperm.xlu0 %3010, %v2959
        %v3012 = vpop.permute.xlu0 %3011
        %3015 = vset.pattern.permute.xlu0 0
        %3016 = vperm.xlu0 %3015, %v2960
        %v3017 = vpop.permute.xlu0 %3016
        %3020 = vset.pattern.permute.xlu0 0
        %3021 = vperm.xlu0 %3020, %v2961
        %v3022 = vpop.permute.xlu0 %3021
        %3025 = vset.pattern.permute.xlu0 0
        %3026 = vperm.xlu0 %3025, %v2962
        %v3027 = vpop.permute.xlu0 %3026
        %3030 = vset.pattern.permute.xlu0 0
        %3031 = vperm.xlu0 %3030, %v2963
        %v3032 = vpop.permute.xlu0 %3031
        %3035 = vset.pattern.permute.xlu0 0
        %3036 = vperm.xlu0 %3035, %v2964
        %v3037 = vpop.permute.xlu0 %3036
        %3040 = vset.pattern.permute.xlu0 0
        %3041 = vperm.xlu0 %3040, %v2965
        %v3042 = vpop.permute.xlu0 %3041
        %3045 = vset.pattern.permute.xlu0 0
        %3046 = vperm.xlu0 %3045, %v2966
        %v3047 = vpop.permute.xlu0 %3046
        %3050 = vset.pattern.permute.xlu0 0
        %3051 = vperm.xlu0 %3050, %v2967
        %v3052 = vpop.permute.xlu0 %3051
        %3055 = vset.pattern.permute.xlu0 0
        %3056 = vperm.xlu0 %3055, %v2968
        %v3057 = vpop.permute.xlu0 %3056
        %3060 = vset.pattern.permute.xlu0 0
        %3061 = vperm.xlu0 %3060, %v2969
        %v3062 = vpop.permute.xlu0 %3061
        %3065 = vset.pattern.permute.xlu0 0
        %3066 = vperm.xlu0 %3065, %v2970
        %v3067 = vpop.permute.xlu0 %3066
        %3070 = vset.pattern.permute.xlu0 0
        %3071 = vperm.xlu0 %3070, %v2971
        %v3072 = vpop.permute.xlu0 %3071
        %3075 = vset.pattern.permute.xlu0 0
        %3076 = vperm.xlu0 %3075, %v2972
        %v3077 = vpop.permute.xlu0 %3076
        %3080 = vset.pattern.permute.xlu0 0
        %3081 = vperm.xlu0 %3080, %v2973
        %v3082 = vpop.permute.xlu0 %3081
        %3085 = vset.pattern.permute.xlu0 0
        %3086 = vperm.xlu0 %3085, %v2974
        %v3087 = vpop.permute.xlu0 %3086
        %3090 = vset.pattern.permute.xlu0 0
        %3091 = vperm.xlu0 %3090, %v2975
        %v3092 = vpop.permute.xlu0 %3091
        %3095 = vset.pattern.permute.xlu0 0
        %3096 = vperm.xlu0 %3095, %v2976
        %v3097 = vpop.permute.xlu0 %3096
        %3100 = vset.pattern.permute.xlu0 0
        %3101 = vperm.xlu0 %3100, %v2977
        %v3102 = vpop.permute.xlu0 %3101
        %3105 = vset.pattern.permute.xlu0 0
        %3106 = vperm.xlu0 %3105, %v2978
        %v3107 = vpop.permute.xlu0 %3106
        %3110 = vset.pattern.permute.xlu0 0
        %3111 = vperm.xlu0 %3110, %v2979
        %v3112 = vpop.permute.xlu0 %3111
        %3115 = vset.pattern.permute.xlu0 0
        %3116 = vperm.xlu0 %3115, %v2980
        %v3117 = vpop.permute.xlu0 %3116
        %3120 = vset.pattern.permute.xlu0 0
        %3121 = vperm.xlu0 %3120, %v2981
        %v3122 = vpop.permute.xlu0 %3121
        %3125 = vset.pattern.permute.xlu0 0
        %3126 = vperm.xlu0 %3125, %v2982
        %v3127 = vpop.permute.xlu0 %3126
        %3130 = vset.pattern.permute.xlu0 0
        %3131 = vperm.xlu0 %3130, %v2983
        %v3132 = vpop.permute.xlu0 %3131
        %3135 = vset.pattern.permute.xlu0 0
        %3136 = vperm.xlu0 %3135, %v2984
        %v3137 = vpop.permute.xlu0 %3136
        %3140 = vset.pattern.permute.xlu0 0
        %3141 = vperm.xlu0 %3140, %v2985
        %v3142 = vpop.permute.xlu0 %3141
        %3145 = vset.pattern.permute.xlu0 0
        %3146 = vperm.xlu0 %3145, %v2986
        %v3147 = vpop.permute.xlu0 %3146
        %v3150 = vperm.slane %v2988, 0
        %v3152 = vmul.f32 %v2992, %v3150
        %v3153 = vmul.f32 %v2997, %v3150
        %v3154 = vmul.f32 %v3002, %v3150
        %v3155 = vmul.f32 %v3007, %v3150
        %v3156 = vmul.f32 %v3012, %v3150
        %v3157 = vmul.f32 %v3017, %v3150
        %v3158 = vmul.f32 %v3022, %v3150
        %v3159 = vmul.f32 %v3027, %v3150
        %v3160 = vmul.f32 %v3032, %v3150
        %v3161 = vmul.f32 %v3037, %v3150
        %v3162 = vmul.f32 %v3042, %v3150
        %v3163 = vmul.f32 %v3047, %v3150
        %v3164 = vmul.f32 %v3052, %v3150
        %v3165 = vmul.f32 %v3057, %v3150
        %v3166 = vmul.f32 %v3062, %v3150
        %v3167 = vmul.f32 %v3067, %v3150
        %v3168 = vmul.f32 %v3072, %v3150
        %v3169 = vmul.f32 %v3077, %v3150
        %v3170 = vmul.f32 %v3082, %v3150
        %v3171 = vmul.f32 %v3087, %v3150
        %v3172 = vmul.f32 %v3092, %v3150
        %v3173 = vmul.f32 %v3097, %v3150
        %v3174 = vmul.f32 %v3102, %v3150
        %v3175 = vmul.f32 %v3107, %v3150
        %v3176 = vmul.f32 %v3112, %v3150
        %v3177 = vmul.f32 %v3117, %v3150
        %v3178 = vmul.f32 %v3122, %v3150
        %v3179 = vmul.f32 %v3127, %v3150
        %v3180 = vmul.f32 %v3132, %v3150
        %v3181 = vmul.f32 %v3137, %v3150
        %v3182 = vmul.f32 %v3142, %v3150
        %v3183 = vmul.f32 %v3147, %v3150
        %v3184 = vadd.f32 %v2923, %v3152
        %v3185 = vadd.f32 %v2924, %v3153
        %v3186 = vadd.f32 %v2925, %v3154
        %v3187 = vadd.f32 %v2926, %v3155
        %v3188 = vadd.f32 %v2927, %v3156
        %v3189 = vadd.f32 %v2928, %v3157
        %v3190 = vadd.f32 %v2929, %v3158
        %v3191 = vadd.f32 %v2930, %v3159
        %v3192 = vadd.f32 %v2931, %v3160
        %v3193 = vadd.f32 %v2932, %v3161
        %v3194 = vadd.f32 %v2933, %v3162
        %v3195 = vadd.f32 %v2934, %v3163
        %v3196 = vadd.f32 %v2935, %v3164
        %v3197 = vadd.f32 %v2936, %v3165
        %v3198 = vadd.f32 %v2937, %v3166
        %v3199 = vadd.f32 %v2938, %v3167
        %v3200 = vadd.f32 %v2939, %v3168
        %v3201 = vadd.f32 %v2940, %v3169
        %v3202 = vadd.f32 %v2941, %v3170
        %v3203 = vadd.f32 %v2942, %v3171
        %v3204 = vadd.f32 %v2943, %v3172
        %v3205 = vadd.f32 %v2944, %v3173
        %v3206 = vadd.f32 %v2945, %v3174
        %v3207 = vadd.f32 %v2946, %v3175
        %v3208 = vadd.f32 %v2947, %v3176
        %v3209 = vadd.f32 %v2948, %v3177
        %v3210 = vadd.f32 %v2949, %v3178
        %v3211 = vadd.f32 %v2950, %v3179
        %v3212 = vadd.f32 %v2951, %v3180
        %v3213 = vadd.f32 %v2952, %v3181
        %v3214 = vadd.f32 %v2953, %v3182
        %v3215 = vadd.f32 %v2954, %v3183
        %v3216 = vld [vmem:[#allocation2 + $0x29] sm:$0xff]
        %v3217 = vld [vmem:[#allocation2 + $0x31] sm:$0xff]
        %v3218 = vld [vmem:[#allocation2 + $0x39] sm:$0xff]
        %v3219 = vld [vmem:[#allocation2 + $0x41] sm:$0xff]
        %v3220 = vld [vmem:[#allocation2 + $0x49] sm:$0xff]
        %v3221 = vld [vmem:[#allocation2 + $0x51] sm:$0xff]
        %v3222 = vld [vmem:[#allocation2 + $0x59] sm:$0xff]
        %v3223 = vld [vmem:[#allocation2 + $0x61] sm:$0xff]
        %v3224 = vld [vmem:[#allocation2 + $0x69] sm:$0xff]
        %v3225 = vld [vmem:[#allocation2 + $0x71] sm:$0xff]
        %v3226 = vld [vmem:[#allocation2 + $0x79] sm:$0xff]
        %v3227 = vld [vmem:[#allocation2 + $0x81] sm:$0xff]
        %v3228 = vld [vmem:[#allocation2 + $0x89] sm:$0xff]
        %v3229 = vld [vmem:[#allocation2 + $0x91] sm:$0xff]
        %v3230 = vld [vmem:[#allocation2 + $0x99] sm:$0xff]
        %v3231 = vld [vmem:[#allocation2 + $0xa1] sm:$0xff]
        %v3232 = vld [vmem:[#allocation2 + $0xa9] sm:$0xff]
        %v3233 = vld [vmem:[#allocation2 + $0xb1] sm:$0xff]
        %v3234 = vld [vmem:[#allocation2 + $0xb9] sm:$0xff]
        %v3235 = vld [vmem:[#allocation2 + $0xc1] sm:$0xff]
        %v3236 = vld [vmem:[#allocation2 + $0xc9] sm:$0xff]
        %v3237 = vld [vmem:[#allocation2 + $0xd1] sm:$0xff]
        %v3238 = vld [vmem:[#allocation2 + $0xd9] sm:$0xff]
        %v3239 = vld [vmem:[#allocation2 + $0xe1] sm:$0xff]
        %v3240 = vld [vmem:[#allocation2 + $0xe9] sm:$0xff]
        %v3241 = vld [vmem:[#allocation2 + $0xf1] sm:$0xff]
        %v3242 = vld [vmem:[#allocation2 + $0xf9] sm:$0xff]
        %v3243 = vld [vmem:[#allocation2 + $0x101] sm:$0xff]
        %v3244 = vld [vmem:[#allocation2 + $0x109] sm:$0xff]
        %v3245 = vld [vmem:[#allocation2 + $0x111] sm:$0xff]
        %v3246 = vld [vmem:[#allocation2 + $0x119] sm:$0xff]
        %v3247 = vld [vmem:[#allocation2 + $0x121] sm:$0xff]
        %v3248 = vsel %vm1522, %v3216, 0.0
        %v3249 = vsel %vm1523, %v3217, 0.0
        %v3250 = vsel %vm1524, %v3218, 0.0
        %v3251 = vsel %vm1525, %v3219, 0.0
        %v3252 = vsel %vm1526, %v3220, 0.0
        %v3253 = vsel %vm1527, %v3221, 0.0
        %v3254 = vsel %vm1528, %v3222, 0.0
        %v3255 = vsel %vm1529, %v3223, 0.0
        %v3256 = vsel %vm1530, %v3224, 0.0
        %v3257 = vsel %vm1531, %v3225, 0.0
        %v3258 = vsel %vm1532, %v3226, 0.0
        %v3259 = vsel %vm1533, %v3227, 0.0
        %v3260 = vsel %vm1534, %v3228, 0.0
        %v3261 = vsel %vm1535, %v3229, 0.0
        %v3262 = vsel %vm1536, %v3230, 0.0
        %v3263 = vsel %vm1537, %v3231, 0.0
        %v3264 = vsel %vm1538, %v3232, 0.0
        %v3265 = vsel %vm1539, %v3233, 0.0
        %v3266 = vsel %vm1540, %v3234, 0.0
        %v3267 = vsel %vm1541, %v3235, 0.0
        %v3268 = vsel %vm1542, %v3236, 0.0
        %v3269 = vsel %vm1543, %v3237, 0.0
        %v3270 = vsel %vm1544, %v3238, 0.0
        %v3271 = vsel %vm1545, %v3239, 0.0
        %v3272 = vsel %vm1546, %v3240, 0.0
        %v3273 = vsel %vm1547, %v3241, 0.0
        %v3274 = vsel %vm1548, %v3242, 0.0
        %v3275 = vsel %vm1549, %v3243, 0.0
        %v3276 = vsel %vm1550, %v3244, 0.0
        %v3277 = vsel %vm1551, %v3245, 0.0
        %v3278 = vsel %vm1552, %v3246, 0.0
        %v3279 = vsel %vm1553, %v3247, 0.0
        %s3280 = scalar_lea.vmem %s1, 8
        %v3281 = vld [vmem:[%s3280] sm:$0x1]
        %3283 = vset.pattern.permute.xlu0 0
        %3284 = vperm.xlu0 %3283, %v3248
        %v3285 = vpop.permute.xlu0 %3284
        %3288 = vset.pattern.permute.xlu0 0
        %3289 = vperm.xlu0 %3288, %v3249
        %v3290 = vpop.permute.xlu0 %3289
        %3293 = vset.pattern.permute.xlu0 0
        %3294 = vperm.xlu0 %3293, %v3250
        %v3295 = vpop.permute.xlu0 %3294
        %3298 = vset.pattern.permute.xlu0 0
        %3299 = vperm.xlu0 %3298, %v3251
        %v3300 = vpop.permute.xlu0 %3299
        %3303 = vset.pattern.permute.xlu0 0
        %3304 = vperm.xlu0 %3303, %v3252
        %v3305 = vpop.permute.xlu0 %3304
        %3308 = vset.pattern.permute.xlu0 0
        %3309 = vperm.xlu0 %3308, %v3253
        %v3310 = vpop.permute.xlu0 %3309
        %3313 = vset.pattern.permute.xlu0 0
        %3314 = vperm.xlu0 %3313, %v3254
        %v3315 = vpop.permute.xlu0 %3314
        %3318 = vset.pattern.permute.xlu0 0
        %3319 = vperm.xlu0 %3318, %v3255
        %v3320 = vpop.permute.xlu0 %3319
        %3323 = vset.pattern.permute.xlu0 0
        %3324 = vperm.xlu0 %3323, %v3256
        %v3325 = vpop.permute.xlu0 %3324
        %3328 = vset.pattern.permute.xlu0 0
        %3329 = vperm.xlu0 %3328, %v3257
        %v3330 = vpop.permute.xlu0 %3329
        %3333 = vset.pattern.permute.xlu0 0
        %3334 = vperm.xlu0 %3333, %v3258
        %v3335 = vpop.permute.xlu0 %3334
        %3338 = vset.pattern.permute.xlu0 0
        %3339 = vperm.xlu0 %3338, %v3259
        %v3340 = vpop.permute.xlu0 %3339
        %3343 = vset.pattern.permute.xlu0 0
        %3344 = vperm.xlu0 %3343, %v3260
        %v3345 = vpop.permute.xlu0 %3344
        %3348 = vset.pattern.permute.xlu0 0
        %3349 = vperm.xlu0 %3348, %v3261
        %v3350 = vpop.permute.xlu0 %3349
        %3353 = vset.pattern.permute.xlu0 0
        %3354 = vperm.xlu0 %3353, %v3262
        %v3355 = vpop.permute.xlu0 %3354
        %3358 = vset.pattern.permute.xlu0 0
        %3359 = vperm.xlu0 %3358, %v3263
        %v3360 = vpop.permute.xlu0 %3359
        %3363 = vset.pattern.permute.xlu0 0
        %3364 = vperm.xlu0 %3363, %v3264
        %v3365 = vpop.permute.xlu0 %3364
        %3368 = vset.pattern.permute.xlu0 0
        %3369 = vperm.xlu0 %3368, %v3265
        %v3370 = vpop.permute.xlu0 %3369
        %3373 = vset.pattern.permute.xlu0 0
        %3374 = vperm.xlu0 %3373, %v3266
        %v3375 = vpop.permute.xlu0 %3374
        %3378 = vset.pattern.permute.xlu0 0
        %3379 = vperm.xlu0 %3378, %v3267
        %v3380 = vpop.permute.xlu0 %3379
        %3383 = vset.pattern.permute.xlu0 0
        %3384 = vperm.xlu0 %3383, %v3268
        %v3385 = vpop.permute.xlu0 %3384
        %3388 = vset.pattern.permute.xlu0 0
        %3389 = vperm.xlu0 %3388, %v3269
        %v3390 = vpop.permute.xlu0 %3389
        %3393 = vset.pattern.permute.xlu0 0
        %3394 = vperm.xlu0 %3393, %v3270
        %v3395 = vpop.permute.xlu0 %3394
        %3398 = vset.pattern.permute.xlu0 0
        %3399 = vperm.xlu0 %3398, %v3271
        %v3400 = vpop.permute.xlu0 %3399
        %3403 = vset.pattern.permute.xlu0 0
        %3404 = vperm.xlu0 %3403, %v3272
        %v3405 = vpop.permute.xlu0 %3404
        %3408 = vset.pattern.permute.xlu0 0
        %3409 = vperm.xlu0 %3408, %v3273
        %v3410 = vpop.permute.xlu0 %3409
        %3413 = vset.pattern.permute.xlu0 0
        %3414 = vperm.xlu0 %3413, %v3274
        %v3415 = vpop.permute.xlu0 %3414
        %3418 = vset.pattern.permute.xlu0 0
        %3419 = vperm.xlu0 %3418, %v3275
        %v3420 = vpop.permute.xlu0 %3419
        %3423 = vset.pattern.permute.xlu0 0
        %3424 = vperm.xlu0 %3423, %v3276
        %v3425 = vpop.permute.xlu0 %3424
        %3428 = vset.pattern.permute.xlu0 0
        %3429 = vperm.xlu0 %3428, %v3277
        %v3430 = vpop.permute.xlu0 %3429
        %3433 = vset.pattern.permute.xlu0 0
        %3434 = vperm.xlu0 %3433, %v3278
        %v3435 = vpop.permute.xlu0 %3434
        %3438 = vset.pattern.permute.xlu0 0
        %3439 = vperm.xlu0 %3438, %v3279
        %v3440 = vpop.permute.xlu0 %3439
        %v3443 = vperm.slane %v3281, 0
        %v3445 = vmul.f32 %v3285, %v3443
        %v3446 = vmul.f32 %v3290, %v3443
        %v3447 = vmul.f32 %v3295, %v3443
        %v3448 = vmul.f32 %v3300, %v3443
        %v3449 = vmul.f32 %v3305, %v3443
        %v3450 = vmul.f32 %v3310, %v3443
        %v3451 = vmul.f32 %v3315, %v3443
        %v3452 = vmul.f32 %v3320, %v3443
        %v3453 = vmul.f32 %v3325, %v3443
        %v3454 = vmul.f32 %v3330, %v3443
        %v3455 = vmul.f32 %v3335, %v3443
        %v3456 = vmul.f32 %v3340, %v3443
        %v3457 = vmul.f32 %v3345, %v3443
        %v3458 = vmul.f32 %v3350, %v3443
        %v3459 = vmul.f32 %v3355, %v3443
        %v3460 = vmul.f32 %v3360, %v3443
        %v3461 = vmul.f32 %v3365, %v3443
        %v3462 = vmul.f32 %v3370, %v3443
        %v3463 = vmul.f32 %v3375, %v3443
        %v3464 = vmul.f32 %v3380, %v3443
        %v3465 = vmul.f32 %v3385, %v3443
        %v3466 = vmul.f32 %v3390, %v3443
        %v3467 = vmul.f32 %v3395, %v3443
        %v3468 = vmul.f32 %v3400, %v3443
        %v3469 = vmul.f32 %v3405, %v3443
        %v3470 = vmul.f32 %v3410, %v3443
        %v3471 = vmul.f32 %v3415, %v3443
        %v3472 = vmul.f32 %v3420, %v3443
        %v3473 = vmul.f32 %v3425, %v3443
        %v3474 = vmul.f32 %v3430, %v3443
        %v3475 = vmul.f32 %v3435, %v3443
        %v3476 = vmul.f32 %v3440, %v3443
        %v3477 = vadd.f32 %v3184, %v3445
        %v3478 = vadd.f32 %v3185, %v3446
        %v3479 = vadd.f32 %v3186, %v3447
        %v3480 = vadd.f32 %v3187, %v3448
        %v3481 = vadd.f32 %v3188, %v3449
        %v3482 = vadd.f32 %v3189, %v3450
        %v3483 = vadd.f32 %v3190, %v3451
        %v3484 = vadd.f32 %v3191, %v3452
        %v3485 = vadd.f32 %v3192, %v3453
        %v3486 = vadd.f32 %v3193, %v3454
        %v3487 = vadd.f32 %v3194, %v3455
        %v3488 = vadd.f32 %v3195, %v3456
        %v3489 = vadd.f32 %v3196, %v3457
        %v3490 = vadd.f32 %v3197, %v3458
        %v3491 = vadd.f32 %v3198, %v3459
        %v3492 = vadd.f32 %v3199, %v3460
        %v3493 = vadd.f32 %v3200, %v3461
        %v3494 = vadd.f32 %v3201, %v3462
        %v3495 = vadd.f32 %v3202, %v3463
        %v3496 = vadd.f32 %v3203, %v3464
        %v3497 = vadd.f32 %v3204, %v3465
        %v3498 = vadd.f32 %v3205, %v3466
        %v3499 = vadd.f32 %v3206, %v3467
        %v3500 = vadd.f32 %v3207, %v3468
        %v3501 = vadd.f32 %v3208, %v3469
        %v3502 = vadd.f32 %v3209, %v3470
        %v3503 = vadd.f32 %v3210, %v3471
        %v3504 = vadd.f32 %v3211, %v3472
        %v3505 = vadd.f32 %v3212, %v3473
        %v3506 = vadd.f32 %v3213, %v3474
        %v3507 = vadd.f32 %v3214, %v3475
        %v3508 = vadd.f32 %v3215, %v3476
        %v3509 = vld [vmem:[%s2] sm:$0x1]
        %v3511 = vperm.slane %v3509, 0
        %v3513 = vadd.f32 %v3477, %v3511
        %v3514 = vadd.f32 %v3478, %v3511
        %v3515 = vadd.f32 %v3479, %v3511
        %v3516 = vadd.f32 %v3480, %v3511
        %v3517 = vadd.f32 %v3481, %v3511
        %v3518 = vadd.f32 %v3482, %v3511
        %v3519 = vadd.f32 %v3483, %v3511
        %v3520 = vadd.f32 %v3484, %v3511
        %v3521 = vadd.f32 %v3485, %v3511
        %v3522 = vadd.f32 %v3486, %v3511
        %v3523 = vadd.f32 %v3487, %v3511
        %v3524 = vadd.f32 %v3488, %v3511
        %v3525 = vadd.f32 %v3489, %v3511
        %v3526 = vadd.f32 %v3490, %v3511
        %v3527 = vadd.f32 %v3491, %v3511
        %v3528 = vadd.f32 %v3492, %v3511
        %v3529 = vadd.f32 %v3493, %v3511
        %v3530 = vadd.f32 %v3494, %v3511
        %v3531 = vadd.f32 %v3495, %v3511
        %v3532 = vadd.f32 %v3496, %v3511
        %v3533 = vadd.f32 %v3497, %v3511
        %v3534 = vadd.f32 %v3498, %v3511
        %v3535 = vadd.f32 %v3499, %v3511
        %v3536 = vadd.f32 %v3500, %v3511
        %v3537 = vadd.f32 %v3501, %v3511
        %v3538 = vadd.f32 %v3502, %v3511
        %v3539 = vadd.f32 %v3503, %v3511
        %v3540 = vadd.f32 %v3504, %v3511
        %v3541 = vadd.f32 %v3505, %v3511
        %v3542 = vadd.f32 %v3506, %v3511
        %v3543 = vadd.f32 %v3507, %v3511
        %v3544 = vadd.f32 %v3508, %v3511
        %v3545 = vmax.f32 %v3513, 0.0
        %v3546 = vmax.f32 %v3514, 0.0
        %v3547 = vmax.f32 %v3515, 0.0
        %v3548 = vmax.f32 %v3516, 0.0
        %v3549 = vmax.f32 %v3517, 0.0
        %v3550 = vmax.f32 %v3518, 0.0
        %v3551 = vmax.f32 %v3519, 0.0
        %v3552 = vmax.f32 %v3520, 0.0
        %v3553 = vmax.f32 %v3521, 0.0
        %v3554 = vmax.f32 %v3522, 0.0
        %v3555 = vmax.f32 %v3523, 0.0
        %v3556 = vmax.f32 %v3524, 0.0
        %v3557 = vmax.f32 %v3525, 0.0
        %v3558 = vmax.f32 %v3526, 0.0
        %v3559 = vmax.f32 %v3527, 0.0
        %v3560 = vmax.f32 %v3528, 0.0
        %v3561 = vmax.f32 %v3529, 0.0
        %v3562 = vmax.f32 %v3530, 0.0
        %v3563 = vmax.f32 %v3531, 0.0
        %v3564 = vmax.f32 %v3532, 0.0
        %v3565 = vmax.f32 %v3533, 0.0
        %v3566 = vmax.f32 %v3534, 0.0
        %v3567 = vmax.f32 %v3535, 0.0
        %v3568 = vmax.f32 %v3536, 0.0
        %v3569 = vmax.f32 %v3537, 0.0
        %v3570 = vmax.f32 %v3538, 0.0
        %v3571 = vmax.f32 %v3539, 0.0
        %v3572 = vmax.f32 %v3540, 0.0
        %v3573 = vmax.f32 %v3541, 0.0
        %v3574 = vmax.f32 %v3542, 0.0
        %v3575 = vmax.f32 %v3543, 0.0
        %v3576 = vmax.f32 %v3544, 0.0
        %vm3577 = vcmask 261120
        %3578 = vst.msk [vmem:[#allocation3] sm:$0xff] %vm3577, 0.0
        %3579 = vst.msk [vmem:[#allocation3 + $0x8] sm:$0xff] %vm3577, 0.0
        %3580 = vst.msk [vmem:[#allocation3 + $0x10] sm:$0xff] %vm3577, 0.0
        %3581 = vst.msk [vmem:[#allocation3 + $0x18] sm:$0xff] %vm3577, 0.0
        %3582 = vst.msk [vmem:[#allocation3 + $0x20] sm:$0xff] %vm3577, 0.0
        %3583 = vst.msk [vmem:[#allocation3 + $0x28] sm:$0xff] %vm3577, 0.0
        %3584 = vst.msk [vmem:[#allocation3 + $0x30] sm:$0xff] %vm3577, 0.0
        %3585 = vst.msk [vmem:[#allocation3 + $0x38] sm:$0xff] %vm3577, 0.0
        %3586 = vst.msk [vmem:[#allocation3 + $0x40] sm:$0xff] %vm3577, 0.0
        %3587 = vst.msk [vmem:[#allocation3 + $0x48] sm:$0xff] %vm3577, 0.0
        %3588 = vst.msk [vmem:[#allocation3 + $0x50] sm:$0xff] %vm3577, 0.0
        %3589 = vst.msk [vmem:[#allocation3 + $0x58] sm:$0xff] %vm3577, 0.0
        %3590 = vst.msk [vmem:[#allocation3 + $0x60] sm:$0xff] %vm3577, 0.0
        %3591 = vst.msk [vmem:[#allocation3 + $0x68] sm:$0xff] %vm3577, 0.0
        %3592 = vst.msk [vmem:[#allocation3 + $0x70] sm:$0xff] %vm3577, 0.0
        %3593 = vst.msk [vmem:[#allocation3 + $0x78] sm:$0xff] %vm3577, 0.0
        %3594 = vst.msk [vmem:[#allocation3 + $0x80] sm:$0xff] %vm3577, 0.0
        %3595 = vst.msk [vmem:[#allocation3 + $0x88] sm:$0xff] %vm3577, 0.0
        %3596 = vst.msk [vmem:[#allocation3 + $0x90] sm:$0xff] %vm3577, 0.0
        %3597 = vst.msk [vmem:[#allocation3 + $0x98] sm:$0xff] %vm3577, 0.0
        %3598 = vst.msk [vmem:[#allocation3 + $0xa0] sm:$0xff] %vm3577, 0.0
        %3599 = vst.msk [vmem:[#allocation3 + $0xa8] sm:$0xff] %vm3577, 0.0
        %3600 = vst.msk [vmem:[#allocation3 + $0xb0] sm:$0xff] %vm3577, 0.0
        %3601 = vst.msk [vmem:[#allocation3 + $0xb8] sm:$0xff] %vm3577, 0.0
        %3602 = vst.msk [vmem:[#allocation3 + $0xc0] sm:$0xff] %vm3577, 0.0
        %3603 = vst.msk [vmem:[#allocation3 + $0xc8] sm:$0xff] %vm3577, 0.0
        %3604 = vst.msk [vmem:[#allocation3 + $0xd0] sm:$0xff] %vm3577, 0.0
        %3605 = vst.msk [vmem:[#allocation3 + $0xd8] sm:$0xff] %vm3577, 0.0
        %3606 = vst.msk [vmem:[#allocation3 + $0xe0] sm:$0xff] %vm3577, 0.0
        %3607 = vst.msk [vmem:[#allocation3 + $0xe8] sm:$0xff] %vm3577, 0.0
        %3608 = vst.msk [vmem:[#allocation3 + $0xf0] sm:$0xff] %vm3577, 0.0
        %3609 = vst.msk [vmem:[#allocation3 + $0xf8] sm:$0xff] %vm3577, 0.0
        %3610 = vst.msk [vmem:[#allocation3 + $0x100] sm:$0xff] %vm3577, 0.0
        %3611 = vst.msk [vmem:[#allocation3 + $0x108] sm:$0xff] %vm3577, 0.0
        %3612 = vst.msk [vmem:[#allocation3 + $0x110] sm:$0xff] %vm3577, 0.0
        %3613 = vst.msk [vmem:[#allocation3 + $0x118] sm:$0xff] %vm3577, 0.0
        %3614 = vst.msk [vmem:[#allocation3 + $0x120] sm:$0xff] %vm3577, 0.0
        %3615 = vst.msk [vmem:[#allocation3 + $0x128] sm:$0xff] %vm3577, 0.0
        %3616 = vst.msk [vmem:[#allocation3 + $0x18] sm:$0xff] %vm3577, %v3545
        %3617 = vst.msk [vmem:[#allocation3 + $0x20] sm:$0xff] %vm3577, %v3546
        %3618 = vst.msk [vmem:[#allocation3 + $0x28] sm:$0xff] %vm3577, %v3547
        %3619 = vst.msk [vmem:[#allocation3 + $0x30] sm:$0xff] %vm3577, %v3548
        %3620 = vst.msk [vmem:[#allocation3 + $0x38] sm:$0xff] %vm3577, %v3549
        %3621 = vst.msk [vmem:[#allocation3 + $0x40] sm:$0xff] %vm3577, %v3550
        %3622 = vst.msk [vmem:[#allocation3 + $0x48] sm:$0xff] %vm3577, %v3551
        %3623 = vst.msk [vmem:[#allocation3 + $0x50] sm:$0xff] %vm3577, %v3552
        %3624 = vst.msk [vmem:[#allocation3 + $0x58] sm:$0xff] %vm3577, %v3553
        %3625 = vst.msk [vmem:[#allocation3 + $0x60] sm:$0xff] %vm3577, %v3554
        %3626 = vst.msk [vmem:[#allocation3 + $0x68] sm:$0xff] %vm3577, %v3555
        %3627 = vst.msk [vmem:[#allocation3 + $0x70] sm:$0xff] %vm3577, %v3556
        %3628 = vst.msk [vmem:[#allocation3 + $0x78] sm:$0xff] %vm3577, %v3557
        %3629 = vst.msk [vmem:[#allocation3 + $0x80] sm:$0xff] %vm3577, %v3558
        %3630 = vst.msk [vmem:[#allocation3 + $0x88] sm:$0xff] %vm3577, %v3559
        %3631 = vst.msk [vmem:[#allocation3 + $0x90] sm:$0xff] %vm3577, %v3560
        %3632 = vst.msk [vmem:[#allocation3 + $0x98] sm:$0xff] %vm3577, %v3561
        %3633 = vst.msk [vmem:[#allocation3 + $0xa0] sm:$0xff] %vm3577, %v3562
        %3634 = vst.msk [vmem:[#allocation3 + $0xa8] sm:$0xff] %vm3577, %v3563
        %3635 = vst.msk [vmem:[#allocation3 + $0xb0] sm:$0xff] %vm3577, %v3564
        %3636 = vst.msk [vmem:[#allocation3 + $0xb8] sm:$0xff] %vm3577, %v3565
        %3637 = vst.msk [vmem:[#allocation3 + $0xc0] sm:$0xff] %vm3577, %v3566
        %3638 = vst.msk [vmem:[#allocation3 + $0xc8] sm:$0xff] %vm3577, %v3567
        %3639 = vst.msk [vmem:[#allocation3 + $0xd0] sm:$0xff] %vm3577, %v3568
        %3640 = vst.msk [vmem:[#allocation3 + $0xd8] sm:$0xff] %vm3577, %v3569
        %3641 = vst.msk [vmem:[#allocation3 + $0xe0] sm:$0xff] %vm3577, %v3570
        %3642 = vst.msk [vmem:[#allocation3 + $0xe8] sm:$0xff] %vm3577, %v3571
        %3643 = vst.msk [vmem:[#allocation3 + $0xf0] sm:$0xff] %vm3577, %v3572
        %3644 = vst.msk [vmem:[#allocation3 + $0xf8] sm:$0xff] %vm3577, %v3573
        %3645 = vst.msk [vmem:[#allocation3 + $0x100] sm:$0xff] %vm3577, %v3574
        %3646 = vst.msk [vmem:[#allocation3 + $0x108] sm:$0xff] %vm3577, %v3575
        %3647 = vst.msk [vmem:[#allocation3 + $0x110] sm:$0xff] %vm3577, %v3576
        %v3648 = vld [vmem:[#allocation3 + $0x18] sm:$0xff]
        %v3649 = vld [vmem:[#allocation3 + $0x20] sm:$0xff]
        %v3650 = vld [vmem:[#allocation3 + $0x28] sm:$0xff]
        %v3651 = vld [vmem:[#allocation3 + $0x30] sm:$0xff]
        %v3652 = vld [vmem:[#allocation3 + $0x38] sm:$0xff]
        %v3653 = vld [vmem:[#allocation3 + $0x40] sm:$0xff]
        %v3654 = vld [vmem:[#allocation3 + $0x48] sm:$0xff]
        %v3655 = vld [vmem:[#allocation3 + $0x50] sm:$0xff]
        %v3656 = vld [vmem:[#allocation3 + $0x58] sm:$0xff]
        %v3657 = vld [vmem:[#allocation3 + $0x60] sm:$0xff]
        %v3658 = vld [vmem:[#allocation3 + $0x68] sm:$0xff]
        %v3659 = vld [vmem:[#allocation3 + $0x70] sm:$0xff]
        %v3660 = vld [vmem:[#allocation3 + $0x78] sm:$0xff]
        %v3661 = vld [vmem:[#allocation3 + $0x80] sm:$0xff]
        %v3662 = vld [vmem:[#allocation3 + $0x88] sm:$0xff]
        %v3663 = vld [vmem:[#allocation3 + $0x90] sm:$0xff]
        %v3664 = vld [vmem:[#allocation3 + $0x98] sm:$0xff]
        %v3665 = vld [vmem:[#allocation3 + $0xa0] sm:$0xff]
        %v3666 = vld [vmem:[#allocation3 + $0xa8] sm:$0xff]
        %v3667 = vld [vmem:[#allocation3 + $0xb0] sm:$0xff]
        %v3668 = vld [vmem:[#allocation3 + $0xb8] sm:$0xff]
        %v3669 = vld [vmem:[#allocation3 + $0xc0] sm:$0xff]
        %v3670 = vld [vmem:[#allocation3 + $0xc8] sm:$0xff]
        %v3671 = vld [vmem:[#allocation3 + $0xd0] sm:$0xff]
        %v3672 = vld [vmem:[#allocation3 + $0xd8] sm:$0xff]
        %v3673 = vld [vmem:[#allocation3 + $0xe0] sm:$0xff]
        %v3674 = vld [vmem:[#allocation3 + $0xe8] sm:$0xff]
        %v3675 = vld [vmem:[#allocation3 + $0xf0] sm:$0xff]
        %v3676 = vld [vmem:[#allocation3 + $0xf8] sm:$0xff]
        %v3677 = vld [vmem:[#allocation3 + $0x100] sm:$0xff]
        %v3678 = vld [vmem:[#allocation3 + $0x108] sm:$0xff]
        %v3679 = vld [vmem:[#allocation3 + $0x110] sm:$0xff]
        %v3680 = vld [vmem:[#allocation3 + $0x19] sm:$0xff]
        %v3681 = vld [vmem:[#allocation3 + $0x21] sm:$0xff]
        %v3682 = vld [vmem:[#allocation3 + $0x29] sm:$0xff]
        %v3683 = vld [vmem:[#allocation3 + $0x31] sm:$0xff]
        %v3684 = vld [vmem:[#allocation3 + $0x39] sm:$0xff]
        %v3685 = vld [vmem:[#allocation3 + $0x41] sm:$0xff]
        %v3686 = vld [vmem:[#allocation3 + $0x49] sm:$0xff]
        %v3687 = vld [vmem:[#allocation3 + $0x51] sm:$0xff]
        %v3688 = vld [vmem:[#allocation3 + $0x59] sm:$0xff]
        %v3689 = vld [vmem:[#allocation3 + $0x61] sm:$0xff]
        %v3690 = vld [vmem:[#allocation3 + $0x69] sm:$0xff]
        %v3691 = vld [vmem:[#allocation3 + $0x71] sm:$0xff]
        %v3692 = vld [vmem:[#allocation3 + $0x79] sm:$0xff]
        %v3693 = vld [vmem:[#allocation3 + $0x81] sm:$0xff]
        %v3694 = vld [vmem:[#allocation3 + $0x89] sm:$0xff]
        %v3695 = vld [vmem:[#allocation3 + $0x91] sm:$0xff]
        %v3696 = vld [vmem:[#allocation3 + $0x99] sm:$0xff]
        %v3697 = vld [vmem:[#allocation3 + $0xa1] sm:$0xff]
        %v3698 = vld [vmem:[#allocation3 + $0xa9] sm:$0xff]
        %v3699 = vld [vmem:[#allocation3 + $0xb1] sm:$0xff]
        %v3700 = vld [vmem:[#allocation3 + $0xb9] sm:$0xff]
        %v3701 = vld [vmem:[#allocation3 + $0xc1] sm:$0xff]
        %v3702 = vld [vmem:[#allocation3 + $0xc9] sm:$0xff]
        %v3703 = vld [vmem:[#allocation3 + $0xd1] sm:$0xff]
        %v3704 = vld [vmem:[#allocation3 + $0xd9] sm:$0xff]
        %v3705 = vld [vmem:[#allocation3 + $0xe1] sm:$0xff]
        %v3706 = vld [vmem:[#allocation3 + $0xe9] sm:$0xff]
        %v3707 = vld [vmem:[#allocation3 + $0xf1] sm:$0xff]
        %v3708 = vld [vmem:[#allocation3 + $0xf9] sm:$0xff]
        %v3709 = vld [vmem:[#allocation3 + $0x101] sm:$0xff]
        %v3710 = vld [vmem:[#allocation3 + $0x109] sm:$0xff]
        %v3711 = vld [vmem:[#allocation3 + $0x111] sm:$0xff]
        %v3712 = vmax.f32 %v3648, %v3680
        %v3713 = vmax.f32 %v3649, %v3681
        %v3714 = vmax.f32 %v3650, %v3682
        %v3715 = vmax.f32 %v3651, %v3683
        %v3716 = vmax.f32 %v3652, %v3684
        %v3717 = vmax.f32 %v3653, %v3685
        %v3718 = vmax.f32 %v3654, %v3686
        %v3719 = vmax.f32 %v3655, %v3687
        %v3720 = vmax.f32 %v3656, %v3688
        %v3721 = vmax.f32 %v3657, %v3689
        %v3722 = vmax.f32 %v3658, %v3690
        %v3723 = vmax.f32 %v3659, %v3691
        %v3724 = vmax.f32 %v3660, %v3692
        %v3725 = vmax.f32 %v3661, %v3693
        %v3726 = vmax.f32 %v3662, %v3694
        %v3727 = vmax.f32 %v3663, %v3695
        %v3728 = vmax.f32 %v3664, %v3696
        %v3729 = vmax.f32 %v3665, %v3697
        %v3730 = vmax.f32 %v3666, %v3698
        %v3731 = vmax.f32 %v3667, %v3699
        %v3732 = vmax.f32 %v3668, %v3700
        %v3733 = vmax.f32 %v3669, %v3701
        %v3734 = vmax.f32 %v3670, %v3702
        %v3735 = vmax.f32 %v3671, %v3703
        %v3736 = vmax.f32 %v3672, %v3704
        %v3737 = vmax.f32 %v3673, %v3705
        %v3738 = vmax.f32 %v3674, %v3706
        %v3739 = vmax.f32 %v3675, %v3707
        %v3740 = vmax.f32 %v3676, %v3708
        %v3741 = vmax.f32 %v3677, %v3709
        %v3742 = vmax.f32 %v3678, %v3710
        %v3743 = vmax.f32 %v3679, %v3711
        %v3744 = vld [vmem:[#allocation3 + $0x118] sm:$0xff]
        %v3745 = vld [vmem:[#allocation3 + $0x120] sm:$0xff]
        %v3746 = vmax.f32 %v3712, %v3650
        %v3747 = vmax.f32 %v3713, %v3651
        %v3748 = vmax.f32 %v3714, %v3652
        %v3749 = vmax.f32 %v3715, %v3653
        %v3750 = vmax.f32 %v3716, %v3654
        %v3751 = vmax.f32 %v3717, %v3655
        %v3752 = vmax.f32 %v3718, %v3656
        %v3753 = vmax.f32 %v3719, %v3657
        %v3754 = vmax.f32 %v3720, %v3658
        %v3755 = vmax.f32 %v3721, %v3659
        %v3756 = vmax.f32 %v3722, %v3660
        %v3757 = vmax.f32 %v3723, %v3661
        %v3758 = vmax.f32 %v3724, %v3662
        %v3759 = vmax.f32 %v3725, %v3663
        %v3760 = vmax.f32 %v3726, %v3664
        %v3761 = vmax.f32 %v3727, %v3665
        %v3762 = vmax.f32 %v3728, %v3666
        %v3763 = vmax.f32 %v3729, %v3667
        %v3764 = vmax.f32 %v3730, %v3668
        %v3765 = vmax.f32 %v3731, %v3669
        %v3766 = vmax.f32 %v3732, %v3670
        %v3767 = vmax.f32 %v3733, %v3671
        %v3768 = vmax.f32 %v3734, %v3672
        %v3769 = vmax.f32 %v3735, %v3673
        %v3770 = vmax.f32 %v3736, %v3674
        %v3771 = vmax.f32 %v3737, %v3675
        %v3772 = vmax.f32 %v3738, %v3676
        %v3773 = vmax.f32 %v3739, %v3677
        %v3774 = vmax.f32 %v3740, %v3678
        %v3775 = vmax.f32 %v3741, %v3679
        %v3776 = vmax.f32 %v3742, %v3744
        %v3777 = vmax.f32 %v3743, %v3745
        %v3778 = vld [vmem:[#allocation3 + $0x119] sm:$0xff]
        %v3779 = vld [vmem:[#allocation3 + $0x121] sm:$0xff]
        %v3780 = vmax.f32 %v3746, %v3682
        %v3781 = vmax.f32 %v3747, %v3683
        %v3782 = vmax.f32 %v3748, %v3684
        %v3783 = vmax.f32 %v3749, %v3685
        %v3784 = vmax.f32 %v3750, %v3686
        %v3785 = vmax.f32 %v3751, %v3687
        %v3786 = vmax.f32 %v3752, %v3688
        %v3787 = vmax.f32 %v3753, %v3689
        %v3788 = vmax.f32 %v3754, %v3690
        %v3789 = vmax.f32 %v3755, %v3691
        %v3790 = vmax.f32 %v3756, %v3692
        %v3791 = vmax.f32 %v3757, %v3693
        %v3792 = vmax.f32 %v3758, %v3694
        %v3793 = vmax.f32 %v3759, %v3695
        %v3794 = vmax.f32 %v3760, %v3696
        %v3795 = vmax.f32 %v3761, %v3697
        %v3796 = vmax.f32 %v3762, %v3698
        %v3797 = vmax.f32 %v3763, %v3699
        %v3798 = vmax.f32 %v3764, %v3700
        %v3799 = vmax.f32 %v3765, %v3701
        %v3800 = vmax.f32 %v3766, %v3702
        %v3801 = vmax.f32 %v3767, %v3703
        %v3802 = vmax.f32 %v3768, %v3704
        %v3803 = vmax.f32 %v3769, %v3705
        %v3804 = vmax.f32 %v3770, %v3706
        %v3805 = vmax.f32 %v3771, %v3707
        %v3806 = vmax.f32 %v3772, %v3708
        %v3807 = vmax.f32 %v3773, %v3709
        %v3808 = vmax.f32 %v3774, %v3710
        %v3809 = vmax.f32 %v3775, %v3711
        %v3810 = vmax.f32 %v3776, %v3778
        %v3811 = vmax.f32 %v3777, %v3779
        %v3812 = vld [vmem:[%s7] sm:$0xff]
        %v3813 = vld [vmem:[%s7 + $0x8] sm:$0xff]
        %v3814 = vld [vmem:[%s7 + $0x10] sm:$0xff]
        %v3815 = vld [vmem:[%s7 + $0x18] sm:$0xff]
        %v3816 = vld [vmem:[%s7 + $0x20] sm:$0xff]
        %v3817 = vld [vmem:[%s7 + $0x28] sm:$0xff]
        %v3818 = vld [vmem:[%s7 + $0x30] sm:$0xff]
        %v3819 = vld [vmem:[%s7 + $0x38] sm:$0xff]
        %v3820 = vld [vmem:[%s7 + $0x40] sm:$0xff]
        %v3821 = vld [vmem:[%s7 + $0x48] sm:$0xff]
        %v3822 = vld [vmem:[%s7 + $0x50] sm:$0xff]
        %v3823 = vld [vmem:[%s7 + $0x58] sm:$0xff]
        %v3824 = vld [vmem:[%s7 + $0x60] sm:$0xff]
        %v3825 = vld [vmem:[%s7 + $0x68] sm:$0xff]
        %v3826 = vld [vmem:[%s7 + $0x70] sm:$0xff]
        %v3827 = vld [vmem:[%s7 + $0x78] sm:$0xff]
        %3828 = vmatpush.msra.mxu0 %v3795
        %3829 = vmatpush.msra.mxu0 %v3794
        %3830 = vmatpush.msra.mxu0 %v3793
        %3831 = vmatpush.msra.mxu0 %v3792
        %3832 = vmatpush.msra.mxu0 %v3791
        %3833 = vmatpush.msra.mxu0 %v3790
        %3834 = vmatpush.msra.mxu0 %v3789
        %3835 = vmatpush.msra.mxu0 %v3788
        %3836 = vmatpush.msra.mxu0 %v3787
        %3837 = vmatpush.msra.mxu0 %v3786
        %3838 = vmatpush.msra.mxu0 %v3785
        %3839 = vmatpush.msra.mxu0 %v3784
        %3840 = vmatpush.msra.mxu0 %v3783
        %3841 = vmatpush.msra.mxu0 %v3782
        %3842 = vmatpush.msra.mxu0 %v3781
        %3843 = vmatpush.msra.mxu0 %v3780
        %3844 = vmatmul.f32.gmra.mxu0 %v3812
        %v3845 = vpop.f32.mrf.mxu0
        %v3846 = vadd.f32 0.0, %v3845
        %3847 = vmatmul.f32.gmra.mxu0 %v3814
        %v3848 = vpop.f32.mrf.mxu0
        %v3849 = vadd.f32 0.0, %v3848
        %3850 = vmatmul.f32.gmra.mxu0 %v3816
        %v3851 = vpop.f32.mrf.mxu0
        %v3852 = vadd.f32 0.0, %v3851
        %3853 = vmatmul.f32.gmra.mxu0 %v3818
        %v3854 = vpop.f32.mrf.mxu0
        %v3855 = vadd.f32 0.0, %v3854
        %3856 = vmatmul.f32.gmra.mxu0 %v3820
        %v3857 = vpop.f32.mrf.mxu0
        %v3858 = vadd.f32 0.0, %v3857
        %3859 = vmatmul.f32.gmra.mxu0 %v3822
        %v3860 = vpop.f32.mrf.mxu0
        %v3861 = vadd.f32 0.0, %v3860
        %3862 = vmatmul.f32.gmra.mxu0 %v3824
        %v3863 = vpop.f32.mrf.mxu0
        %v3864 = vadd.f32 0.0, %v3863
        %3865 = vmatmul.f32.gmra.mxu0 %v3826
        %v3866 = vpop.f32.mrf.mxu0
        %v3867 = vadd.f32 0.0, %v3866
        %3868 = vdwg.mxu0
        %3869 = vmatpush.msra.mxu0 %v3811
        %3870 = vmatpush.msra.mxu0 %v3810
        %3871 = vmatpush.msra.mxu0 %v3809
        %3872 = vmatpush.msra.mxu0 %v3808
        %3873 = vmatpush.msra.mxu0 %v3807
        %3874 = vmatpush.msra.mxu0 %v3806
        %3875 = vmatpush.msra.mxu0 %v3805
        %3876 = vmatpush.msra.mxu0 %v3804
        %3877 = vmatpush.msra.mxu0 %v3803
        %3878 = vmatpush.msra.mxu0 %v3802
        %3879 = vmatpush.msra.mxu0 %v3801
        %3880 = vmatpush.msra.mxu0 %v3800
        %3881 = vmatpush.msra.mxu0 %v3799
        %3882 = vmatpush.msra.mxu0 %v3798
        %3883 = vmatpush.msra.mxu0 %v3797
        %3884 = vmatpush.msra.mxu0 %v3796
        %3885 = vmatmul.f32.gmra.mxu0 %v3813
        %v3886 = vpop.f32.mrf.mxu0
        %v3887 = vadd.f32 %v3846, %v3886
        %3888 = vmatmul.f32.gmra.mxu0 %v3815
        %v3889 = vpop.f32.mrf.mxu0
        %v3890 = vadd.f32 %v3849, %v3889
        %3891 = vmatmul.f32.gmra.mxu0 %v3817
        %v3892 = vpop.f32.mrf.mxu0
        %v3893 = vadd.f32 %v3852, %v3892
        %3894 = vmatmul.f32.gmra.mxu0 %v3819
        %v3895 = vpop.f32.mrf.mxu0
        %v3896 = vadd.f32 %v3855, %v3895
        %3897 = vmatmul.f32.gmra.mxu0 %v3821
        %v3898 = vpop.f32.mrf.mxu0
        %v3899 = vadd.f32 %v3858, %v3898
        %3900 = vmatmul.f32.gmra.mxu0 %v3823
        %v3901 = vpop.f32.mrf.mxu0
        %v3902 = vadd.f32 %v3861, %v3901
        %3903 = vmatmul.f32.gmra.mxu0 %v3825
        %v3904 = vpop.f32.mrf.mxu0
        %v3905 = vadd.f32 %v3864, %v3904
        %3906 = vmatmul.f32.gmra.mxu0 %v3827
        %v3907 = vpop.f32.mrf.mxu0
        %v3908 = vadd.f32 %v3867, %v3907
        %3909 = vdwg.mxu0
        %3910 = vst.msk [vmem:[#allocation4] sm:$0xff] %vm3577, 0.0
        %3911 = vst.msk [vmem:[#allocation4 + $0x8] sm:$0xff] %vm3577, 0.0
        %3912 = vst.msk [vmem:[#allocation4 + $0x10] sm:$0xff] %vm3577, 0.0
        %3913 = vst.msk [vmem:[#allocation4 + $0x18] sm:$0xff] %vm3577, 0.0
        %3914 = vst.msk [vmem:[#allocation4 + $0x20] sm:$0xff] %vm3577, 0.0
        %3915 = vst.msk [vmem:[#allocation4 + $0x28] sm:$0xff] %vm3577, 0.0
        %3916 = vst.msk [vmem:[#allocation4 + $0x30] sm:$0xff] %vm3577, 0.0
        %3917 = vst.msk [vmem:[#allocation4 + $0x38] sm:$0xff] %vm3577, 0.0
        %3918 = vst.msk [vmem:[#allocation4 + $0x40] sm:$0xff] %vm3577, 0.0
        %3919 = vst.msk [vmem:[#allocation4 + $0x48] sm:$0xff] %vm3577, 0.0
        %3920 = vst.msk [vmem:[#allocation4 + $0x50] sm:$0xff] %vm3577, 0.0
        %3921 = vst.msk [vmem:[#allocation4 + $0x58] sm:$0xff] %vm3577, 0.0
        %3922 = vst.msk [vmem:[#allocation4 + $0x10] sm:$0xff] %vm3577, %v3887
        %3923 = vst.msk [vmem:[#allocation4 + $0x18] sm:$0xff] %vm3577, %v3890
        %3924 = vst.msk [vmem:[#allocation4 + $0x20] sm:$0xff] %vm3577, %v3893
        %3925 = vst.msk [vmem:[#allocation4 + $0x28] sm:$0xff] %vm3577, %v3896
        %3926 = vst.msk [vmem:[#allocation4 + $0x30] sm:$0xff] %vm3577, %v3899
        %3927 = vst.msk [vmem:[#allocation4 + $0x38] sm:$0xff] %vm3577, %v3902
        %3928 = vst.msk [vmem:[#allocation4 + $0x40] sm:$0xff] %vm3577, %v3905
        %3929 = vst.msk [vmem:[#allocation4 + $0x48] sm:$0xff] %vm3577, %v3908
        %vm3930 = vcmp.lt.s32.totalorder %v489, 0
        %v3931 = vsub.s32 0, %v489
        %v3932 = vsel %vm3930, %v3931, %v489
        %v3933 = vshrl.u32 %v3932, 3
        %v3934 = vand.u32 %v3932, 7
        %v3935 = vsub.s32 0, %v3934
        %v3936 = vsel %vm3930, %v3935, %v3934
        %vm3937 = vcmp.lt.s32.totalorder %v490, 0
        %v3938 = vsub.s32 0, %v490
        %v3939 = vsel %vm3937, %v3938, %v490
        %v3940 = vshrl.u32 %v3939, 3
        %v3941 = vand.u32 %v3939, 7
        %v3942 = vsub.s32 0, %v3941
        %v3943 = vsel %vm3937, %v3942, %v3941
        %vm3944 = vcmp.lt.s32.totalorder %v491, 0
        %v3945 = vsub.s32 0, %v491
        %v3946 = vsel %vm3944, %v3945, %v491
        %v3947 = vshrl.u32 %v3946, 3
        %v3948 = vand.u32 %v3946, 7
        %v3949 = vsub.s32 0, %v3948
        %v3950 = vsel %vm3944, %v3949, %v3948
        %vm3951 = vcmp.lt.s32.totalorder %v492, 0
        %v3952 = vsub.s32 0, %v492
        %v3953 = vsel %vm3951, %v3952, %v492
        %v3954 = vshrl.u32 %v3953, 3
        %v3955 = vand.u32 %v3953, 7
        %v3956 = vsub.s32 0, %v3955
        %v3957 = vsel %vm3951, %v3956, %v3955
        %vm3958 = vcmp.lt.s32.totalorder %v493, 0
        %v3959 = vsub.s32 0, %v493
        %v3960 = vsel %vm3958, %v3959, %v493
        %v3961 = vshrl.u32 %v3960, 3
        %v3962 = vand.u32 %v3960, 7
        %v3963 = vsub.s32 0, %v3962
        %v3964 = vsel %vm3958, %v3963, %v3962
        %vm3965 = vcmp.lt.s32.totalorder %v494, 0
        %v3966 = vsub.s32 0, %v494
        %v3967 = vsel %vm3965, %v3966, %v494
        %v3968 = vshrl.u32 %v3967, 3
        %v3969 = vand.u32 %v3967, 7
        %v3970 = vsub.s32 0, %v3969
        %v3971 = vsel %vm3965, %v3970, %v3969
        %vm3972 = vcmp.lt.s32.totalorder %v495, 0
        %v3973 = vsub.s32 0, %v495
        %v3974 = vsel %vm3972, %v3973, %v495
        %v3975 = vshrl.u32 %v3974, 3
        %v3976 = vand.u32 %v3974, 7
        %v3977 = vsub.s32 0, %v3976
        %v3978 = vsel %vm3972, %v3977, %v3976
        %vm3979 = vcmp.lt.s32.totalorder %v496, 0
        %v3980 = vsub.s32 0, %v496
        %v3981 = vsel %vm3979, %v3980, %v496
        %v3982 = vshrl.u32 %v3981, 3
        %v3983 = vand.u32 %v3981, 7
        %v3984 = vsub.s32 0, %v3983
        %v3985 = vsel %vm3979, %v3984, %v3983
        %vm3986 = vcmp.ne.s32.totalorder %v3936, 0
        %vm3987 = vcmp.ne.s32.totalorder %v3943, 0
        %vm3988 = vcmp.ne.s32.totalorder %v3950, 0
        %vm3989 = vcmp.ne.s32.totalorder %v3957, 0
        %vm3990 = vcmp.ne.s32.totalorder %v3964, 0
        %vm3991 = vcmp.ne.s32.totalorder %v3971, 0
        %vm3992 = vcmp.ne.s32.totalorder %v3978, 0
        %vm3993 = vcmp.ne.s32.totalorder %v3985, 0
        %vm3994 = vcmp.lt.s32.totalorder %v3936, 0
        %vm3995 = vcmp.lt.s32.totalorder %v3943, 0
        %vm3996 = vcmp.lt.s32.totalorder %v3950, 0
        %vm3997 = vcmp.lt.s32.totalorder %v3957, 0
        %vm3998 = vcmp.lt.s32.totalorder %v3964, 0
        %vm3999 = vcmp.lt.s32.totalorder %v3971, 0
        %vm4000 = vcmp.lt.s32.totalorder %v3978, 0
        %vm4001 = vcmp.lt.s32.totalorder %v3985, 0
        %vm4002 = vmand %vm3994, %vm3986
        %vm4003 = vmand %vm3995, %vm3987
        %vm4004 = vmand %vm3996, %vm3988
        %vm4005 = vmand %vm3997, %vm3989
        %vm4006 = vmand %vm3998, %vm3990
        %vm4007 = vmand %vm3999, %vm3991
        %vm4008 = vmand %vm4000, %vm3992
        %vm4009 = vmand %vm4001, %vm3993
        %v4010 = vadd.s32 %v3936, 8
        %v4011 = vadd.s32 %v3943, 8
        %v4012 = vadd.s32 %v3950, 8
        %v4013 = vadd.s32 %v3957, 8
        %v4014 = vadd.s32 %v3964, 8
        %v4015 = vadd.s32 %v3971, 8
        %v4016 = vadd.s32 %v3978, 8
        %v4017 = vadd.s32 %v3985, 8
        %v4018 = vsel %vm4002, %v4010, %v3936
        %v4019 = vsel %vm4003, %v4011, %v3943
        %v4020 = vsel %vm4004, %v4012, %v3950
        %v4021 = vsel %vm4005, %v4013, %v3957
        %v4022 = vsel %vm4006, %v4014, %v3964
        %v4023 = vsel %vm4007, %v4015, %v3971
        %v4024 = vsel %vm4008, %v4016, %v3978
        %v4025 = vsel %vm4009, %v4017, %v3985
        %v4026 = vld [vmem:[#allocation4 + $0x7] sm:$0xff]
        %v4027 = vld [vmem:[#allocation4 + $0xf] sm:$0xff]
        %v4028 = vld [vmem:[#allocation4 + $0x17] sm:$0xff]
        %v4029 = vld [vmem:[#allocation4 + $0x1f] sm:$0xff]
        %v4030 = vld [vmem:[#allocation4 + $0x27] sm:$0xff]
        %v4031 = vld [vmem:[#allocation4 + $0x2f] sm:$0xff]
        %v4032 = vld [vmem:[#allocation4 + $0x37] sm:$0xff]
        %v4033 = vld [vmem:[#allocation4 + $0x3f] sm:$0xff]
        %vm4034 = vcmp.ge.s32.totalorder %v4018, 1
        %vm4035 = vcmp.ge.s32.totalorder %v4019, 1
        %vm4036 = vcmp.ge.s32.totalorder %v4020, 1
        %vm4037 = vcmp.ge.s32.totalorder %v4021, 1
        %vm4038 = vcmp.ge.s32.totalorder %v4022, 1
        %vm4039 = vcmp.ge.s32.totalorder %v4023, 1
        %vm4040 = vcmp.ge.s32.totalorder %v4024, 1
        %vm4041 = vcmp.ge.s32.totalorder %v4025, 1
        %v4042 = vsel %vm4034, %v4026, 0.0
        %v4043 = vsel %vm4035, %v4027, 0.0
        %v4044 = vsel %vm4036, %v4028, 0.0
        %v4045 = vsel %vm4037, %v4029, 0.0
        %v4046 = vsel %vm4038, %v4030, 0.0
        %v4047 = vsel %vm4039, %v4031, 0.0
        %v4048 = vsel %vm4040, %v4032, 0.0
        %v4049 = vsel %vm4041, %v4033, 0.0
        %v4050 = vpack.c.bf16 %v4043, %v4042
        %v4051 = vpack.c.bf16 %v4045, %v4044
        %v4052 = vpack.c.bf16 %v4047, %v4046
        %v4053 = vpack.c.bf16 %v4049, %v4048
        %v4054 = vld [vmem:[%s3] sm:$0xf]
        %v4055 = vld [vmem:[%s3 + $0x4] sm:$0xf]
        %v4056 = vld [vmem:[%s3 + $0x8] sm:$0xf]
        %v4057 = vld [vmem:[%s3 + $0xc] sm:$0xf]
        %v4058 = vld [vmem:[#allocation4 + $0x8] sm:$0xff]
        %v4059 = vld [vmem:[#allocation4 + $0x10] sm:$0xff]
        %v4060 = vld [vmem:[#allocation4 + $0x18] sm:$0xff]
        %v4061 = vld [vmem:[#allocation4 + $0x20] sm:$0xff]
        %v4062 = vld [vmem:[#allocation4 + $0x28] sm:$0xff]
        %v4063 = vld [vmem:[#allocation4 + $0x30] sm:$0xff]
        %v4064 = vld [vmem:[#allocation4 + $0x38] sm:$0xff]
        %v4065 = vld [vmem:[#allocation4 + $0x40] sm:$0xff]
        %v4066 = vpack.c.bf16 %v4059, %v4058
        %v4067 = vpack.c.bf16 %v4061, %v4060
        %v4068 = vpack.c.bf16 %v4063, %v4062
        %v4069 = vpack.c.bf16 %v4065, %v4064
        %s4070 = scalar_lea.vmem %s3, 16
        %v4071 = vld [vmem:[%s4070] sm:$0xf]
        %v4072 = vld [vmem:[%s4070 + $0x4] sm:$0xf]
        %v4073 = vld [vmem:[%s4070 + $0x8] sm:$0xf]
        %v4074 = vld [vmem:[%s4070 + $0xc] sm:$0xf]
        %v4079 = vunpack.c.l.b16 %v4071
        %v4080 = vunpack.c.l.b16 %v4072
        %v4081 = vunpack.c.l.b16 %v4073
        %v4082 = vunpack.c.l.b16 %v4074
        %v4083 = vpack.c.b16 %v4080, %v4079
        %v4084 = vpack.c.b16 %v4082, %v4081
        %v4088 = vsel %vm3577, %v4066, 0
        %v4091 = vsel %vm3577, %v4067, 0
        %v4094 = vsel %vm3577, %v4068, 0
        %v4097 = vsel %vm3577, %v4069, 0
        %4099 = vmatpush.bf16.msra.mxu0 0
        %4100 = vmatpush.bf16.msra.mxu0 0
        %4101 = vmatpush.bf16.msra.mxu0 0
        %4102 = vmatpush.bf16.msra.mxu0 0
        %4103 = vmatpush.bf16.msra.mxu0 0
        %4104 = vmatpush.bf16.msra.mxu0 0
        %4105 = vmatpush.bf16.msra.mxu0 %v4084
        %4106 = vmatpush.bf16.msra.mxu0 %v4083
        %4107 = vmatmul.bf16.gmra.mxu0 %v4088
        %v4108 = vpop.f32.mrf.mxu0
        %v4109 = vadd.f32 0.0, %v4108
        %v4110 = vpop.f32.mrf.mxu0
        %v4111 = vadd.f32 0.0, %v4110
        %4112 = vmatmul.bf16.gmra.mxu0 %v4091
        %v4113 = vpop.f32.mrf.mxu0
        %v4114 = vadd.f32 0.0, %v4113
        %v4115 = vpop.f32.mrf.mxu0
        %v4116 = vadd.f32 0.0, %v4115
        %4117 = vmatmul.bf16.gmra.mxu0 %v4094
        %v4118 = vpop.f32.mrf.mxu0
        %v4119 = vadd.f32 0.0, %v4118
        %v4120 = vpop.f32.mrf.mxu0
        %v4121 = vadd.f32 0.0, %v4120
        %4122 = vmatmul.bf16.gmra.mxu0 %v4097
        %v4123 = vpop.f32.mrf.mxu0
        %v4124 = vadd.f32 0.0, %v4123
        %v4125 = vpop.f32.mrf.mxu0
        %v4126 = vadd.f32 0.0, %v4125
        %4127 = vdwg.mxu0
        %v4132 = vunpack.c.l.b16 %v4054
        %v4133 = vunpack.c.l.b16 %v4055
        %v4134 = vunpack.c.l.b16 %v4056
        %v4135 = vunpack.c.l.b16 %v4057
        %v4136 = vpack.c.b16 %v4133, %v4132
        %v4137 = vpack.c.b16 %v4135, %v4134
        %v4141 = vsel %vm3577, %v4050, 0
        %v4144 = vsel %vm3577, %v4051, 0
        %v4147 = vsel %vm3577, %v4052, 0
        %v4150 = vsel %vm3577, %v4053, 0
        %4152 = vmatpush.bf16.msra.mxu0 0
        %4153 = vmatpush.bf16.msra.mxu0 0
        %4154 = vmatpush.bf16.msra.mxu0 0
        %4155 = vmatpush.bf16.msra.mxu0 0
        %4156 = vmatpush.bf16.msra.mxu0 0
        %4157 = vmatpush.bf16.msra.mxu0 0
        %4158 = vmatpush.bf16.msra.mxu0 %v4137
        %4159 = vmatpush.bf16.msra.mxu0 %v4136
        %4160 = vmatmul.bf16.gmra.mxu0 %v4141
        %v4161 = vpop.f32.mrf.mxu0
        %v4162 = vadd.f32 %v4109, %v4161
        %v4163 = vpop.f32.mrf.mxu0
        %v4164 = vadd.f32 %v4111, %v4163
        %4165 = vmatmul.bf16.gmra.mxu0 %v4144
        %v4166 = vpop.f32.mrf.mxu0
        %v4167 = vadd.f32 %v4114, %v4166
        %v4168 = vpop.f32.mrf.mxu0
        %v4169 = vadd.f32 %v4116, %v4168
        %4170 = vmatmul.bf16.gmra.mxu0 %v4147
        %v4171 = vpop.f32.mrf.mxu0
        %v4172 = vadd.f32 %v4119, %v4171
        %v4173 = vpop.f32.mrf.mxu0
        %v4174 = vadd.f32 %v4121, %v4173
        %4175 = vmatmul.bf16.gmra.mxu0 %v4150
        %v4176 = vpop.f32.mrf.mxu0
        %v4177 = vadd.f32 %v4124, %v4176
        %v4178 = vpop.f32.mrf.mxu0
        %v4179 = vadd.f32 %v4126, %v4178
        %4180 = vdwg.mxu0
        %v4181 = vld [vmem:[#allocation4 + $0x9] sm:$0xff]
        %v4182 = vld [vmem:[#allocation4 + $0x11] sm:$0xff]
        %v4183 = vld [vmem:[#allocation4 + $0x19] sm:$0xff]
        %v4184 = vld [vmem:[#allocation4 + $0x21] sm:$0xff]
        %v4185 = vld [vmem:[#allocation4 + $0x29] sm:$0xff]
        %v4186 = vld [vmem:[#allocation4 + $0x31] sm:$0xff]
        %v4187 = vld [vmem:[#allocation4 + $0x39] sm:$0xff]
        %v4188 = vld [vmem:[#allocation4 + $0x41] sm:$0xff]
        %vm4189 = vcmp.le.s32.totalorder %v4018, 6
        %vm4190 = vcmp.le.s32.totalorder %v4019, 6
        %vm4191 = vcmp.le.s32.totalorder %v4020, 6
        %vm4192 = vcmp.le.s32.totalorder %v4021, 6
        %vm4193 = vcmp.le.s32.totalorder %v4022, 6
        %vm4194 = vcmp.le.s32.totalorder %v4023, 6
        %vm4195 = vcmp.le.s32.totalorder %v4024, 6
        %vm4196 = vcmp.le.s32.totalorder %v4025, 6
        %v4197 = vsel %vm4189, %v4181, 0.0
        %v4198 = vsel %vm4190, %v4182, 0.0
        %v4199 = vsel %vm4191, %v4183, 0.0
        %v4200 = vsel %vm4192, %v4184, 0.0
        %v4201 = vsel %vm4193, %v4185, 0.0
        %v4202 = vsel %vm4194, %v4186, 0.0
        %v4203 = vsel %vm4195, %v4187, 0.0
        %v4204 = vsel %vm4196, %v4188, 0.0
        %v4205 = vpack.c.bf16 %v4198, %v4197
        %v4206 = vpack.c.bf16 %v4200, %v4199
        %v4207 = vpack.c.bf16 %v4202, %v4201
        %v4208 = vpack.c.bf16 %v4204, %v4203
        %s4209 = scalar_lea.vmem %s3, 32
        %v4210 = vld [vmem:[%s4209] sm:$0xf]
        %v4211 = vld [vmem:[%s4209 + $0x4] sm:$0xf]
        %v4212 = vld [vmem:[%s4209 + $0x8] sm:$0xf]
        %v4213 = vld [vmem:[%s4209 + $0xc] sm:$0xf]
        %v4218 = vunpack.c.l.b16 %v4210
        %v4219 = vunpack.c.l.b16 %v4211
        %v4220 = vunpack.c.l.b16 %v4212
        %v4221 = vunpack.c.l.b16 %v4213
        %v4222 = vpack.c.b16 %v4219, %v4218
        %v4223 = vpack.c.b16 %v4221, %v4220
        %v4227 = vsel %vm3577, %v4205, 0
        %v4230 = vsel %vm3577, %v4206, 0
        %v4233 = vsel %vm3577, %v4207, 0
        %v4236 = vsel %vm3577, %v4208, 0
        %4238 = vmatpush.bf16.msra.mxu0 0
        %4239 = vmatpush.bf16.msra.mxu0 0
        %4240 = vmatpush.bf16.msra.mxu0 0
        %4241 = vmatpush.bf16.msra.mxu0 0
        %4242 = vmatpush.bf16.msra.mxu0 0
        %4243 = vmatpush.bf16.msra.mxu0 0
        %4244 = vmatpush.bf16.msra.mxu0 %v4223
        %4245 = vmatpush.bf16.msra.mxu0 %v4222
        %4246 = vmatmul.bf16.gmra.mxu0 %v4227
        %v4247 = vpop.f32.mrf.mxu0
        %v4248 = vadd.f32 0.0, %v4247
        %v4249 = vpop.f32.mrf.mxu0
        %v4250 = vadd.f32 0.0, %v4249
        %4251 = vmatmul.bf16.gmra.mxu0 %v4230
        %v4252 = vpop.f32.mrf.mxu0
        %v4253 = vadd.f32 0.0, %v4252
        %v4254 = vpop.f32.mrf.mxu0
        %v4255 = vadd.f32 0.0, %v4254
        %4256 = vmatmul.bf16.gmra.mxu0 %v4233
        %v4257 = vpop.f32.mrf.mxu0
        %v4258 = vadd.f32 0.0, %v4257
        %v4259 = vpop.f32.mrf.mxu0
        %v4260 = vadd.f32 0.0, %v4259
        %4261 = vmatmul.bf16.gmra.mxu0 %v4236
        %v4262 = vpop.f32.mrf.mxu0
        %v4263 = vadd.f32 0.0, %v4262
        %v4264 = vpop.f32.mrf.mxu0
        %v4265 = vadd.f32 0.0, %v4264
        %4266 = vdwg.mxu0
        %v4267 = vadd.f32 %v4162, %v4248
        %v4268 = vadd.f32 %v4164, %v4250
        %v4269 = vadd.f32 %v4167, %v4253
        %v4270 = vadd.f32 %v4169, %v4255
        %v4271 = vadd.f32 %v4172, %v4258
        %v4272 = vadd.f32 %v4174, %v4260
        %v4273 = vadd.f32 %v4177, %v4263
        %v4274 = vadd.f32 %v4179, %v4265
        %v4275 = vld [vmem:[#allocation4 + $0xf] sm:$0xff]
        %v4276 = vld [vmem:[#allocation4 + $0x17] sm:$0xff]
        %v4277 = vld [vmem:[#allocation4 + $0x1f] sm:$0xff]
        %v4278 = vld [vmem:[#allocation4 + $0x27] sm:$0xff]
        %v4279 = vld [vmem:[#allocation4 + $0x2f] sm:$0xff]
        %v4280 = vld [vmem:[#allocation4 + $0x37] sm:$0xff]
        %v4281 = vld [vmem:[#allocation4 + $0x3f] sm:$0xff]
        %v4282 = vld [vmem:[#allocation4 + $0x47] sm:$0xff]
        %v4283 = vsel %vm4034, %v4275, 0.0
        %v4284 = vsel %vm4035, %v4276, 0.0
        %v4285 = vsel %vm4036, %v4277, 0.0
        %v4286 = vsel %vm4037, %v4278, 0.0
        %v4287 = vsel %vm4038, %v4279, 0.0
        %v4288 = vsel %vm4039, %v4280, 0.0
        %v4289 = vsel %vm4040, %v4281, 0.0
        %v4290 = vsel %vm4041, %v4282, 0.0
        %v4291 = vpack.c.bf16 %v4284, %v4283
        %v4292 = vpack.c.bf16 %v4286, %v4285
        %v4293 = vpack.c.bf16 %v4288, %v4287
        %v4294 = vpack.c.bf16 %v4290, %v4289
        %s4295 = scalar_lea.vmem %s3, 48
        %v4296 = vld [vmem:[%s4295] sm:$0xf]
        %v4297 = vld [vmem:[%s4295 + $0x4] sm:$0xf]
        %v4298 = vld [vmem:[%s4295 + $0x8] sm:$0xf]
        %v4299 = vld [vmem:[%s4295 + $0xc] sm:$0xf]
        %v4304 = vunpack.c.l.b16 %v4296
        %v4305 = vunpack.c.l.b16 %v4297
        %v4306 = vunpack.c.l.b16 %v4298
        %v4307 = vunpack.c.l.b16 %v4299
        %v4308 = vpack.c.b16 %v4305, %v4304
        %v4309 = vpack.c.b16 %v4307, %v4306
        %v4313 = vsel %vm3577, %v4291, 0
        %v4316 = vsel %vm3577, %v4292, 0
        %v4319 = vsel %vm3577, %v4293, 0
        %v4322 = vsel %vm3577, %v4294, 0
        %4324 = vmatpush.bf16.msra.mxu0 0
        %4325 = vmatpush.bf16.msra.mxu0 0
        %4326 = vmatpush.bf16.msra.mxu0 0
        %4327 = vmatpush.bf16.msra.mxu0 0
        %4328 = vmatpush.bf16.msra.mxu0 0
        %4329 = vmatpush.bf16.msra.mxu0 0
        %4330 = vmatpush.bf16.msra.mxu0 %v4309
        %4331 = vmatpush.bf16.msra.mxu0 %v4308
        %4332 = vmatmul.bf16.gmra.mxu0 %v4313
        %v4333 = vpop.f32.mrf.mxu0
        %v4334 = vadd.f32 0.0, %v4333
        %v4335 = vpop.f32.mrf.mxu0
        %v4336 = vadd.f32 0.0, %v4335
        %4337 = vmatmul.bf16.gmra.mxu0 %v4316
        %v4338 = vpop.f32.mrf.mxu0
        %v4339 = vadd.f32 0.0, %v4338
        %v4340 = vpop.f32.mrf.mxu0
        %v4341 = vadd.f32 0.0, %v4340
        %4342 = vmatmul.bf16.gmra.mxu0 %v4319
        %v4343 = vpop.f32.mrf.mxu0
        %v4344 = vadd.f32 0.0, %v4343
        %v4345 = vpop.f32.mrf.mxu0
        %v4346 = vadd.f32 0.0, %v4345
        %4347 = vmatmul.bf16.gmra.mxu0 %v4322
        %v4348 = vpop.f32.mrf.mxu0
        %v4349 = vadd.f32 0.0, %v4348
        %v4350 = vpop.f32.mrf.mxu0
        %v4351 = vadd.f32 0.0, %v4350
        %4352 = vdwg.mxu0
        %v4353 = vadd.f32 %v4267, %v4334
        %v4354 = vadd.f32 %v4268, %v4336
        %v4355 = vadd.f32 %v4269, %v4339
        %v4356 = vadd.f32 %v4270, %v4341
        %v4357 = vadd.f32 %v4271, %v4344
        %v4358 = vadd.f32 %v4272, %v4346
        %v4359 = vadd.f32 %v4273, %v4349
        %v4360 = vadd.f32 %v4274, %v4351
        %v4361 = vld [vmem:[#allocation4 + $0x10] sm:$0xff]
        %v4362 = vld [vmem:[#allocation4 + $0x18] sm:$0xff]
        %v4363 = vld [vmem:[#allocation4 + $0x20] sm:$0xff]
        %v4364 = vld [vmem:[#allocation4 + $0x28] sm:$0xff]
        %v4365 = vld [vmem:[#allocation4 + $0x30] sm:$0xff]
        %v4366 = vld [vmem:[#allocation4 + $0x38] sm:$0xff]
        %v4367 = vld [vmem:[#allocation4 + $0x40] sm:$0xff]
        %v4368 = vld [vmem:[#allocation4 + $0x48] sm:$0xff]
        %v4369 = vpack.c.bf16 %v4362, %v4361
        %v4370 = vpack.c.bf16 %v4364, %v4363
        %v4371 = vpack.c.bf16 %v4366, %v4365
        %v4372 = vpack.c.bf16 %v4368, %v4367
        %s4373 = scalar_lea.vmem %s3, 64
        %v4374 = vld [vmem:[%s4373] sm:$0xf]
        %v4375 = vld [vmem:[%s4373 + $0x4] sm:$0xf]
        %v4376 = vld [vmem:[%s4373 + $0x8] sm:$0xf]
        %v4377 = vld [vmem:[%s4373 + $0xc] sm:$0xf]
        %v4382 = vunpack.c.l.b16 %v4374
        %v4383 = vunpack.c.l.b16 %v4375
        %v4384 = vunpack.c.l.b16 %v4376
        %v4385 = vunpack.c.l.b16 %v4377
        %v4386 = vpack.c.b16 %v4383, %v4382
        %v4387 = vpack.c.b16 %v4385, %v4384
        %v4391 = vsel %vm3577, %v4369, 0
        %v4394 = vsel %vm3577, %v4370, 0
        %v4397 = vsel %vm3577, %v4371, 0
        %v4400 = vsel %vm3577, %v4372, 0
        %4402 = vmatpush.bf16.msra.mxu0 0
        %4403 = vmatpush.bf16.msra.mxu0 0
        %4404 = vmatpush.bf16.msra.mxu0 0
        %4405 = vmatpush.bf16.msra.mxu0 0
        %4406 = vmatpush.bf16.msra.mxu0 0
        %4407 = vmatpush.bf16.msra.mxu0 0
        %4408 = vmatpush.bf16.msra.mxu0 %v4387
        %4409 = vmatpush.bf16.msra.mxu0 %v4386
        %4410 = vmatmul.bf16.gmra.mxu0 %v4391
        %v4411 = vpop.f32.mrf.mxu0
        %v4412 = vadd.f32 0.0, %v4411
        %v4413 = vpop.f32.mrf.mxu0
        %v4414 = vadd.f32 0.0, %v4413
        %4415 = vmatmul.bf16.gmra.mxu0 %v4394
        %v4416 = vpop.f32.mrf.mxu0
        %v4417 = vadd.f32 0.0, %v4416
        %v4418 = vpop.f32.mrf.mxu0
        %v4419 = vadd.f32 0.0, %v4418
        %4420 = vmatmul.bf16.gmra.mxu0 %v4397
        %v4421 = vpop.f32.mrf.mxu0
        %v4422 = vadd.f32 0.0, %v4421
        %v4423 = vpop.f32.mrf.mxu0
        %v4424 = vadd.f32 0.0, %v4423
        %4425 = vmatmul.bf16.gmra.mxu0 %v4400
        %v4426 = vpop.f32.mrf.mxu0
        %v4427 = vadd.f32 0.0, %v4426
        %v4428 = vpop.f32.mrf.mxu0
        %v4429 = vadd.f32 0.0, %v4428
        %4430 = vdwg.mxu0
        %v4431 = vadd.f32 %v4353, %v4412
        %v4432 = vadd.f32 %v4354, %v4414
        %v4433 = vadd.f32 %v4355, %v4417
        %v4434 = vadd.f32 %v4356, %v4419
        %v4435 = vadd.f32 %v4357, %v4422
        %v4436 = vadd.f32 %v4358, %v4424
        %v4437 = vadd.f32 %v4359, %v4427
        %v4438 = vadd.f32 %v4360, %v4429
        %v4439 = vld [vmem:[#allocation4 + $0x11] sm:$0xff]
        %v4440 = vld [vmem:[#allocation4 + $0x19] sm:$0xff]
        %v4441 = vld [vmem:[#allocation4 + $0x21] sm:$0xff]
        %v4442 = vld [vmem:[#allocation4 + $0x29] sm:$0xff]
        %v4443 = vld [vmem:[#allocation4 + $0x31] sm:$0xff]
        %v4444 = vld [vmem:[#allocation4 + $0x39] sm:$0xff]
        %v4445 = vld [vmem:[#allocation4 + $0x41] sm:$0xff]
        %v4446 = vld [vmem:[#allocation4 + $0x49] sm:$0xff]
        %v4447 = vsel %vm4189, %v4439, 0.0
        %v4448 = vsel %vm4190, %v4440, 0.0
        %v4449 = vsel %vm4191, %v4441, 0.0
        %v4450 = vsel %vm4192, %v4442, 0.0
        %v4451 = vsel %vm4193, %v4443, 0.0
        %v4452 = vsel %vm4194, %v4444, 0.0
        %v4453 = vsel %vm4195, %v4445, 0.0
        %v4454 = vsel %vm4196, %v4446, 0.0
        %v4455 = vpack.c.bf16 %v4448, %v4447
        %v4456 = vpack.c.bf16 %v4450, %v4449
        %v4457 = vpack.c.bf16 %v4452, %v4451
        %v4458 = vpack.c.bf16 %v4454, %v4453
        %s4459 = scalar_lea.vmem %s3, 80
        %v4460 = vld [vmem:[%s4459] sm:$0xf]
        %v4461 = vld [vmem:[%s4459 + $0x4] sm:$0xf]
        %v4462 = vld [vmem:[%s4459 + $0x8] sm:$0xf]
        %v4463 = vld [vmem:[%s4459 + $0xc] sm:$0xf]
        %v4468 = vunpack.c.l.b16 %v4460
        %v4469 = vunpack.c.l.b16 %v4461
        %v4470 = vunpack.c.l.b16 %v4462
        %v4471 = vunpack.c.l.b16 %v4463
        %v4472 = vpack.c.b16 %v4469, %v4468
        %v4473 = vpack.c.b16 %v4471, %v4470
        %v4477 = vsel %vm3577, %v4455, 0
        %v4480 = vsel %vm3577, %v4456, 0
        %v4483 = vsel %vm3577, %v4457, 0
        %v4486 = vsel %vm3577, %v4458, 0
        %4488 = vmatpush.bf16.msra.mxu0 0
        %4489 = vmatpush.bf16.msra.mxu0 0
        %4490 = vmatpush.bf16.msra.mxu0 0
        %4491 = vmatpush.bf16.msra.mxu0 0
        %4492 = vmatpush.bf16.msra.mxu0 0
        %4493 = vmatpush.bf16.msra.mxu0 0
        %4494 = vmatpush.bf16.msra.mxu0 %v4473
        %4495 = vmatpush.bf16.msra.mxu0 %v4472
        %4496 = vmatmul.bf16.gmra.mxu0 %v4477
        %v4497 = vpop.f32.mrf.mxu0
        %v4498 = vadd.f32 0.0, %v4497
        %v4499 = vpop.f32.mrf.mxu0
        %v4500 = vadd.f32 0.0, %v4499
        %4501 = vmatmul.bf16.gmra.mxu0 %v4480
        %v4502 = vpop.f32.mrf.mxu0
        %v4503 = vadd.f32 0.0, %v4502
        %v4504 = vpop.f32.mrf.mxu0
        %v4505 = vadd.f32 0.0, %v4504
        %4506 = vmatmul.bf16.gmra.mxu0 %v4483
        %v4507 = vpop.f32.mrf.mxu0
        %v4508 = vadd.f32 0.0, %v4507
        %v4509 = vpop.f32.mrf.mxu0
        %v4510 = vadd.f32 0.0, %v4509
        %4511 = vmatmul.bf16.gmra.mxu0 %v4486
        %v4512 = vpop.f32.mrf.mxu0
        %v4513 = vadd.f32 0.0, %v4512
        %v4514 = vpop.f32.mrf.mxu0
        %v4515 = vadd.f32 0.0, %v4514
        %4516 = vdwg.mxu0
        %v4517 = vadd.f32 %v4431, %v4498
        %v4518 = vadd.f32 %v4432, %v4500
        %v4519 = vadd.f32 %v4433, %v4503
        %v4520 = vadd.f32 %v4434, %v4505
        %v4521 = vadd.f32 %v4435, %v4508
        %v4522 = vadd.f32 %v4436, %v4510
        %v4523 = vadd.f32 %v4437, %v4513
        %v4524 = vadd.f32 %v4438, %v4515
        %v4525 = vld [vmem:[#allocation4 + $0x17] sm:$0xff]
        %v4526 = vld [vmem:[#allocation4 + $0x1f] sm:$0xff]
        %v4527 = vld [vmem:[#allocation4 + $0x27] sm:$0xff]
        %v4528 = vld [vmem:[#allocation4 + $0x2f] sm:$0xff]
        %v4529 = vld [vmem:[#allocation4 + $0x37] sm:$0xff]
        %v4530 = vld [vmem:[#allocation4 + $0x3f] sm:$0xff]
        %v4531 = vld [vmem:[#allocation4 + $0x47] sm:$0xff]
        %v4532 = vld [vmem:[#allocation4 + $0x4f] sm:$0xff]
        %v4533 = vsel %vm4034, %v4525, 0.0
        %v4534 = vsel %vm4035, %v4526, 0.0
        %v4535 = vsel %vm4036, %v4527, 0.0
        %v4536 = vsel %vm4037, %v4528, 0.0
        %v4537 = vsel %vm4038, %v4529, 0.0
        %v4538 = vsel %vm4039, %v4530, 0.0
        %v4539 = vsel %vm4040, %v4531, 0.0
        %v4540 = vsel %vm4041, %v4532, 0.0
        %v4541 = vpack.c.bf16 %v4534, %v4533
        %v4542 = vpack.c.bf16 %v4536, %v4535
        %v4543 = vpack.c.bf16 %v4538, %v4537
        %v4544 = vpack.c.bf16 %v4540, %v4539
        %s4545 = scalar_lea.vmem %s3, 96
        %v4546 = vld [vmem:[%s4545] sm:$0xf]
        %v4547 = vld [vmem:[%s4545 + $0x4] sm:$0xf]
        %v4548 = vld [vmem:[%s4545 + $0x8] sm:$0xf]
        %v4549 = vld [vmem:[%s4545 + $0xc] sm:$0xf]
        %v4554 = vunpack.c.l.b16 %v4546
        %v4555 = vunpack.c.l.b16 %v4547
        %v4556 = vunpack.c.l.b16 %v4548
        %v4557 = vunpack.c.l.b16 %v4549
        %v4558 = vpack.c.b16 %v4555, %v4554
        %v4559 = vpack.c.b16 %v4557, %v4556
        %v4563 = vsel %vm3577, %v4541, 0
        %v4566 = vsel %vm3577, %v4542, 0
        %v4569 = vsel %vm3577, %v4543, 0
        %v4572 = vsel %vm3577, %v4544, 0
        %4574 = vmatpush.bf16.msra.mxu0 0
        %4575 = vmatpush.bf16.msra.mxu0 0
        %4576 = vmatpush.bf16.msra.mxu0 0
        %4577 = vmatpush.bf16.msra.mxu0 0
        %4578 = vmatpush.bf16.msra.mxu0 0
        %4579 = vmatpush.bf16.msra.mxu0 0
        %4580 = vmatpush.bf16.msra.mxu0 %v4559
        %4581 = vmatpush.bf16.msra.mxu0 %v4558
        %4582 = vmatmul.bf16.gmra.mxu0 %v4563
        %v4583 = vpop.f32.mrf.mxu0
        %v4584 = vadd.f32 0.0, %v4583
        %v4585 = vpop.f32.mrf.mxu0
        %v4586 = vadd.f32 0.0, %v4585
        %4587 = vmatmul.bf16.gmra.mxu0 %v4566
        %v4588 = vpop.f32.mrf.mxu0
        %v4589 = vadd.f32 0.0, %v4588
        %v4590 = vpop.f32.mrf.mxu0
        %v4591 = vadd.f32 0.0, %v4590
        %4592 = vmatmul.bf16.gmra.mxu0 %v4569
        %v4593 = vpop.f32.mrf.mxu0
        %v4594 = vadd.f32 0.0, %v4593
        %v4595 = vpop.f32.mrf.mxu0
        %v4596 = vadd.f32 0.0, %v4595
        %4597 = vmatmul.bf16.gmra.mxu0 %v4572
        %v4598 = vpop.f32.mrf.mxu0
        %v4599 = vadd.f32 0.0, %v4598
        %v4600 = vpop.f32.mrf.mxu0
        %v4601 = vadd.f32 0.0, %v4600
        %4602 = vdwg.mxu0
        %v4603 = vadd.f32 %v4517, %v4584
        %v4604 = vadd.f32 %v4518, %v4586
        %v4605 = vadd.f32 %v4519, %v4589
        %v4606 = vadd.f32 %v4520, %v4591
        %v4607 = vadd.f32 %v4521, %v4594
        %v4608 = vadd.f32 %v4522, %v4596
        %v4609 = vadd.f32 %v4523, %v4599
        %v4610 = vadd.f32 %v4524, %v4601
        %v4611 = vld [vmem:[#allocation4 + $0x18] sm:$0xff]
        %v4612 = vld [vmem:[#allocation4 + $0x20] sm:$0xff]
        %v4613 = vld [vmem:[#allocation4 + $0x28] sm:$0xff]
        %v4614 = vld [vmem:[#allocation4 + $0x30] sm:$0xff]
        %v4615 = vld [vmem:[#allocation4 + $0x38] sm:$0xff]
        %v4616 = vld [vmem:[#allocation4 + $0x40] sm:$0xff]
        %v4617 = vld [vmem:[#allocation4 + $0x48] sm:$0xff]
        %v4618 = vld [vmem:[#allocation4 + $0x50] sm:$0xff]
        %v4619 = vpack.c.bf16 %v4612, %v4611
        %v4620 = vpack.c.bf16 %v4614, %v4613
        %v4621 = vpack.c.bf16 %v4616, %v4615
        %v4622 = vpack.c.bf16 %v4618, %v4617
        %s4623 = scalar_lea.vmem %s3, 112
        %v4624 = vld [vmem:[%s4623] sm:$0xf]
        %v4625 = vld [vmem:[%s4623 + $0x4] sm:$0xf]
        %v4626 = vld [vmem:[%s4623 + $0x8] sm:$0xf]
        %v4627 = vld [vmem:[%s4623 + $0xc] sm:$0xf]
        %v4632 = vunpack.c.l.b16 %v4624
        %v4633 = vunpack.c.l.b16 %v4625
        %v4634 = vunpack.c.l.b16 %v4626
        %v4635 = vunpack.c.l.b16 %v4627
        %v4636 = vpack.c.b16 %v4633, %v4632
        %v4637 = vpack.c.b16 %v4635, %v4634
        %v4641 = vsel %vm3577, %v4619, 0
        %v4644 = vsel %vm3577, %v4620, 0
        %v4647 = vsel %vm3577, %v4621, 0
        %v4650 = vsel %vm3577, %v4622, 0
        %4652 = vmatpush.bf16.msra.mxu0 0
        %4653 = vmatpush.bf16.msra.mxu0 0
        %4654 = vmatpush.bf16.msra.mxu0 0
        %4655 = vmatpush.bf16.msra.mxu0 0
        %4656 = vmatpush.bf16.msra.mxu0 0
        %4657 = vmatpush.bf16.msra.mxu0 0
        %4658 = vmatpush.bf16.msra.mxu0 %v4637
        %4659 = vmatpush.bf16.msra.mxu0 %v4636
        %4660 = vmatmul.bf16.gmra.mxu0 %v4641
        %v4661 = vpop.f32.mrf.mxu0
        %v4662 = vadd.f32 0.0, %v4661
        %v4663 = vpop.f32.mrf.mxu0
        %v4664 = vadd.f32 0.0, %v4663
        %4665 = vmatmul.bf16.gmra.mxu0 %v4644
        %v4666 = vpop.f32.mrf.mxu0
        %v4667 = vadd.f32 0.0, %v4666
        %v4668 = vpop.f32.mrf.mxu0
        %v4669 = vadd.f32 0.0, %v4668
        %4670 = vmatmul.bf16.gmra.mxu0 %v4647
        %v4671 = vpop.f32.mrf.mxu0
        %v4672 = vadd.f32 0.0, %v4671
        %v4673 = vpop.f32.mrf.mxu0
        %v4674 = vadd.f32 0.0, %v4673
        %4675 = vmatmul.bf16.gmra.mxu0 %v4650
        %v4676 = vpop.f32.mrf.mxu0
        %v4677 = vadd.f32 0.0, %v4676
        %v4678 = vpop.f32.mrf.mxu0
        %v4679 = vadd.f32 0.0, %v4678
        %4680 = vdwg.mxu0
        %v4681 = vadd.f32 %v4603, %v4662
        %v4682 = vadd.f32 %v4604, %v4664
        %v4683 = vadd.f32 %v4605, %v4667
        %v4684 = vadd.f32 %v4606, %v4669
        %v4685 = vadd.f32 %v4607, %v4672
        %v4686 = vadd.f32 %v4608, %v4674
        %v4687 = vadd.f32 %v4609, %v4677
        %v4688 = vadd.f32 %v4610, %v4679
        %v4689 = vld [vmem:[#allocation4 + $0x19] sm:$0xff]
        %v4690 = vld [vmem:[#allocation4 + $0x21] sm:$0xff]
        %v4691 = vld [vmem:[#allocation4 + $0x29] sm:$0xff]
        %v4692 = vld [vmem:[#allocation4 + $0x31] sm:$0xff]
        %v4693 = vld [vmem:[#allocation4 + $0x39] sm:$0xff]
        %v4694 = vld [vmem:[#allocation4 + $0x41] sm:$0xff]
        %v4695 = vld [vmem:[#allocation4 + $0x49] sm:$0xff]
        %v4696 = vld [vmem:[#allocation4 + $0x51] sm:$0xff]
        %v4697 = vsel %vm4189, %v4689, 0.0
        %v4698 = vsel %vm4190, %v4690, 0.0
        %v4699 = vsel %vm4191, %v4691, 0.0
        %v4700 = vsel %vm4192, %v4692, 0.0
        %v4701 = vsel %vm4193, %v4693, 0.0
        %v4702 = vsel %vm4194, %v4694, 0.0
        %v4703 = vsel %vm4195, %v4695, 0.0
        %v4704 = vsel %vm4196, %v4696, 0.0
        %v4705 = vpack.c.bf16 %v4698, %v4697
        %v4706 = vpack.c.bf16 %v4700, %v4699
        %v4707 = vpack.c.bf16 %v4702, %v4701
        %v4708 = vpack.c.bf16 %v4704, %v4703
        %s4709 = scalar_lea.vmem %s3, 128
        %v4710 = vld [vmem:[%s4709] sm:$0xf]
        %v4711 = vld [vmem:[%s4709 + $0x4] sm:$0xf]
        %v4712 = vld [vmem:[%s4709 + $0x8] sm:$0xf]
        %v4713 = vld [vmem:[%s4709 + $0xc] sm:$0xf]
        %v4718 = vunpack.c.l.b16 %v4710
        %v4719 = vunpack.c.l.b16 %v4711
        %v4720 = vunpack.c.l.b16 %v4712
        %v4721 = vunpack.c.l.b16 %v4713
        %v4722 = vpack.c.b16 %v4719, %v4718
        %v4723 = vpack.c.b16 %v4721, %v4720
        %v4727 = vsel %vm3577, %v4705, 0
        %v4730 = vsel %vm3577, %v4706, 0
        %v4733 = vsel %vm3577, %v4707, 0
        %v4736 = vsel %vm3577, %v4708, 0
        %4738 = vmatpush.bf16.msra.mxu0 0
        %4739 = vmatpush.bf16.msra.mxu0 0
        %4740 = vmatpush.bf16.msra.mxu0 0
        %4741 = vmatpush.bf16.msra.mxu0 0
        %4742 = vmatpush.bf16.msra.mxu0 0
        %4743 = vmatpush.bf16.msra.mxu0 0
        %4744 = vmatpush.bf16.msra.mxu0 %v4723
        %4745 = vmatpush.bf16.msra.mxu0 %v4722
        %4746 = vmatmul.bf16.gmra.mxu0 %v4727
        %v4747 = vpop.f32.mrf.mxu0
        %v4748 = vadd.f32 0.0, %v4747
        %v4749 = vpop.f32.mrf.mxu0
        %v4750 = vadd.f32 0.0, %v4749
        %4751 = vmatmul.bf16.gmra.mxu0 %v4730
        %v4752 = vpop.f32.mrf.mxu0
        %v4753 = vadd.f32 0.0, %v4752
        %v4754 = vpop.f32.mrf.mxu0
        %v4755 = vadd.f32 0.0, %v4754
        %4756 = vmatmul.bf16.gmra.mxu0 %v4733
        %v4757 = vpop.f32.mrf.mxu0
        %v4758 = vadd.f32 0.0, %v4757
        %v4759 = vpop.f32.mrf.mxu0
        %v4760 = vadd.f32 0.0, %v4759
        %4761 = vmatmul.bf16.gmra.mxu0 %v4736
        %v4762 = vpop.f32.mrf.mxu0
        %v4763 = vadd.f32 0.0, %v4762
        %v4764 = vpop.f32.mrf.mxu0
        %v4765 = vadd.f32 0.0, %v4764
        %4766 = vdwg.mxu0
        %v4767 = vadd.f32 %v4681, %v4748
        %v4768 = vadd.f32 %v4682, %v4750
        %v4769 = vadd.f32 %v4683, %v4753
        %v4770 = vadd.f32 %v4684, %v4755
        %v4771 = vadd.f32 %v4685, %v4758
        %v4772 = vadd.f32 %v4686, %v4760
        %v4773 = vadd.f32 %v4687, %v4763
        %v4774 = vadd.f32 %v4688, %v4765
        %v4775 = vld [vmem:[%s4] sm:$0x1]
        %v4777 = vperm.slane %v4775, 0
        %v4779 = vadd.f32 %v4767, %v4777
        %v4780 = vadd.f32 %v4768, %v4777
        %v4781 = vadd.f32 %v4769, %v4777
        %v4782 = vadd.f32 %v4770, %v4777
        %v4783 = vadd.f32 %v4771, %v4777
        %v4784 = vadd.f32 %v4772, %v4777
        %v4785 = vadd.f32 %v4773, %v4777
        %v4786 = vadd.f32 %v4774, %v4777
        %v4787 = vmax.f32 %v4779, 0.0
        %v4788 = vmax.f32 %v4780, 0.0
        %v4789 = vmax.f32 %v4781, 0.0
        %v4790 = vmax.f32 %v4782, 0.0
        %v4791 = vmax.f32 %v4783, 0.0
        %v4792 = vmax.f32 %v4784, 0.0
        %v4793 = vmax.f32 %v4785, 0.0
        %v4794 = vmax.f32 %v4786, 0.0
        %vm4795 = vcmask 523264
        %4796 = vst.msk [vmem:[#allocation5] sm:$0xff] %vm4795, 0.0
        %4797 = vst.msk [vmem:[#allocation5 + $0x8] sm:$0xff] %vm4795, 0.0
        %4798 = vst.msk [vmem:[#allocation5 + $0x10] sm:$0xff] %vm4795, 0.0
        %4799 = vst.msk [vmem:[#allocation5 + $0x18] sm:$0xff] %vm4795, 0.0
        %4800 = vst.msk [vmem:[#allocation5 + $0x20] sm:$0xff] %vm4795, 0.0
        %4801 = vst.msk [vmem:[#allocation5 + $0x28] sm:$0xff] %vm4795, 0.0
        %4802 = vst.msk [vmem:[#allocation5 + $0x30] sm:$0xff] %vm4795, 0.0
        %4803 = vst.msk [vmem:[#allocation5 + $0x38] sm:$0xff] %vm4795, 0.0
        %4804 = vst.msk [vmem:[#allocation5 + $0x40] sm:$0xff] %vm4795, 0.0
        %4805 = vst.msk [vmem:[#allocation5 + $0x48] sm:$0xff] %vm4795, 0.0
        %4806 = vst.msk [vmem:[#allocation5 + $0x50] sm:$0xff] %vm4795, 0.0
        %4807 = vst.msk [vmem:[#allocation5 + $0x58] sm:$0xff] %vm4795, 0.0
        %4808 = vst.msk [vmem:[#allocation5 + $0x10] sm:$0xff] %vm4795, %v4787
        %4809 = vst.msk [vmem:[#allocation5 + $0x18] sm:$0xff] %vm4795, %v4788
        %4810 = vst.msk [vmem:[#allocation5 + $0x20] sm:$0xff] %vm4795, %v4789
        %4811 = vst.msk [vmem:[#allocation5 + $0x28] sm:$0xff] %vm4795, %v4790
        %4812 = vst.msk [vmem:[#allocation5 + $0x30] sm:$0xff] %vm4795, %v4791
        %4813 = vst.msk [vmem:[#allocation5 + $0x38] sm:$0xff] %vm4795, %v4792
        %4814 = vst.msk [vmem:[#allocation5 + $0x40] sm:$0xff] %vm4795, %v4793
        %4815 = vst.msk [vmem:[#allocation5 + $0x48] sm:$0xff] %vm4795, %v4794
        %v4816 = vld [vmem:[#allocation5 + $0x10] sm:$0xff]
        %v4817 = vld [vmem:[#allocation5 + $0x18] sm:$0xff]
        %v4818 = vld [vmem:[#allocation5 + $0x20] sm:$0xff]
        %v4819 = vld [vmem:[#allocation5 + $0x28] sm:$0xff]
        %v4820 = vld [vmem:[#allocation5 + $0x30] sm:$0xff]
        %v4821 = vld [vmem:[#allocation5 + $0x38] sm:$0xff]
        %v4822 = vld [vmem:[#allocation5 + $0x40] sm:$0xff]
        %v4823 = vld [vmem:[#allocation5 + $0x48] sm:$0xff]
        %v4824 = vld [vmem:[#allocation5 + $0x11] sm:$0xff]
        %v4825 = vld [vmem:[#allocation5 + $0x19] sm:$0xff]
        %v4826 = vld [vmem:[#allocation5 + $0x21] sm:$0xff]
        %v4827 = vld [vmem:[#allocation5 + $0x29] sm:$0xff]
        %v4828 = vld [vmem:[#allocation5 + $0x31] sm:$0xff]
        %v4829 = vld [vmem:[#allocation5 + $0x39] sm:$0xff]
        %v4830 = vld [vmem:[#allocation5 + $0x41] sm:$0xff]
        %v4831 = vld [vmem:[#allocation5 + $0x49] sm:$0xff]
        %v4832 = vmax.f32 %v4816, %v4824
        %v4833 = vmax.f32 %v4817, %v4825
        %v4834 = vmax.f32 %v4818, %v4826
        %v4835 = vmax.f32 %v4819, %v4827
        %v4836 = vmax.f32 %v4820, %v4828
        %v4837 = vmax.f32 %v4821, %v4829
        %v4838 = vmax.f32 %v4822, %v4830
        %v4839 = vmax.f32 %v4823, %v4831
        %v4840 = vld [vmem:[#allocation5 + $0x50] sm:$0xff]
        %v4841 = vmax.f32 %v4832, %v4817
        %v4842 = vmax.f32 %v4833, %v4818
        %v4843 = vmax.f32 %v4834, %v4819
        %v4844 = vmax.f32 %v4835, %v4820
        %v4845 = vmax.f32 %v4836, %v4821
        %v4846 = vmax.f32 %v4837, %v4822
        %v4847 = vmax.f32 %v4838, %v4823
        %v4848 = vmax.f32 %v4839, %v4840
        %v4849 = vld [vmem:[#allocation5 + $0x51] sm:$0xff]
        %v4850 = vmax.f32 %v4841, %v4825
        %v4851 = vmax.f32 %v4842, %v4826
        %v4852 = vmax.f32 %v4843, %v4827
        %v4853 = vmax.f32 %v4844, %v4828
        %v4854 = vmax.f32 %v4845, %v4829
        %v4855 = vmax.f32 %v4846, %v4830
        %v4856 = vmax.f32 %v4847, %v4831
        %v4857 = vmax.f32 %v4848, %v4849
        %v4858 = vld [vmem:[%s8] sm:$0xff]
        %v4859 = vld [vmem:[%s8 + $0x8] sm:$0xff]
        %v4861 = vsel %vm4795, %v4858, 0
        %v4864 = vsel %vm4795, %v4859, 0
        %4866 = vmatpush.msra.mxu0 0.0
        %4867 = vmatpush.msra.mxu0 0.0
        %4868 = vmatpush.msra.mxu0 0.0
        %4869 = vmatpush.msra.mxu0 0.0
        %4870 = vmatpush.msra.mxu0 0.0
        %4871 = vmatpush.msra.mxu0 0.0
        %4872 = vmatpush.msra.mxu0 0.0
        %4873 = vmatpush.msra.mxu0 0.0
        %4874 = vmatpush.msra.mxu0 %v4857
        %4875 = vmatpush.msra.mxu0 %v4856
        %4876 = vmatpush.msra.mxu0 %v4855
        %4877 = vmatpush.msra.mxu0 %v4854
        %4878 = vmatpush.msra.mxu0 %v4853
        %4879 = vmatpush.msra.mxu0 %v4852
        %4880 = vmatpush.msra.mxu0 %v4851
        %4881 = vmatpush.msra.mxu0 %v4850
        %4882 = vmatmul.f32.gmra.mxu0 %v4861
        %v4883 = vpop.f32.mrf.mxu0
        %v4884 = vadd.f32 0.0, %v4883
        %4885 = vmatmul.f32.gmra.mxu0 %v4864
        %v4886 = vpop.f32.mrf.mxu0
        %v4887 = vadd.f32 0.0, %v4886
        %4888 = vdwg.mxu0
        %4889 = vst.msk [vmem:[#allocation6] sm:$0xff] %vm4795, 0.0
        %4890 = vst.msk [vmem:[#allocation6 + $0x8] sm:$0xff] %vm4795, 0.0
        %4891 = vst.msk [vmem:[#allocation6 + $0x10] sm:$0xff] %vm4795, 0.0
        %4892 = vst.msk [vmem:[#allocation6 + $0x18] sm:$0xff] %vm4795, 0.0
        %4893 = vst.msk [vmem:[#allocation6 + $0x8] sm:$0xff] %vm4795, %v4884
        %4894 = vst.msk [vmem:[#allocation6 + $0x10] sm:$0xff] %vm4795, %v4887
        %vm4895 = vcmp.lt.s32.totalorder %v489, 0
        %v4896 = vsub.s32 0, %v489
        %v4897 = vsel %vm4895, %v4896, %v489
        %v4898 = vshrl.u32 %v4897, 2
        %v4899 = vand.u32 %v4897, 3
        %v4900 = vsub.s32 0, %v4899
        %v4901 = vsel %vm4895, %v4900, %v4899
        %vm4902 = vcmp.lt.s32.totalorder %v490, 0
        %v4903 = vsub.s32 0, %v490
        %v4904 = vsel %vm4902, %v4903, %v490
        %v4905 = vshrl.u32 %v4904, 2
        %v4906 = vand.u32 %v4904, 3
        %v4907 = vsub.s32 0, %v4906
        %v4908 = vsel %vm4902, %v4907, %v4906
        %vm4909 = vcmp.ne.s32.totalorder %v4901, 0
        %vm4910 = vcmp.ne.s32.totalorder %v4908, 0
        %vm4911 = vcmp.lt.s32.totalorder %v4901, 0
        %vm4912 = vcmp.lt.s32.totalorder %v4908, 0
        %vm4913 = vmand %vm4911, %vm4909
        %vm4914 = vmand %vm4912, %vm4910
        %v4915 = vadd.s32 %v4901, 4
        %v4916 = vadd.s32 %v4908, 4
        %v4917 = vsel %vm4913, %v4915, %v4901
        %v4918 = vsel %vm4914, %v4916, %v4908
        %v4919 = vld [vmem:[#allocation6 + $0x3] sm:$0xff]
        %v4920 = vld [vmem:[#allocation6 + $0xb] sm:$0xff]
        %vm4921 = vcmp.ge.s32.totalorder %v4917, 1
        %vm4922 = vcmp.ge.s32.totalorder %v4918, 1
        %v4923 = vsel %vm4921, %v4919, 0.0
        %v4924 = vsel %vm4922, %v4920, 0.0
        %v4925 = vpack.c.bf16 %v4924, %v4923
        %v4926 = vld [vmem:[%s5] sm:$0xf]
        %v4927 = vld [vmem:[%s5 + $0x4] sm:$0xf]
        %v4928 = vld [vmem:[%s5 + $0x8] sm:$0xf]
        %v4929 = vld [vmem:[%s5 + $0xc] sm:$0xf]
        %v4930 = vld [vmem:[%s5 + $0x10] sm:$0xf]
        %v4931 = vld [vmem:[%s5 + $0x14] sm:$0xf]
        %v4932 = vld [vmem:[%s5 + $0x18] sm:$0xf]
        %v4933 = vld [vmem:[%s5 + $0x1c] sm:$0xf]
        %v4934 = vld [vmem:[#allocation6 + $0x4] sm:$0xff]
        %v4935 = vld [vmem:[#allocation6 + $0xc] sm:$0xff]
        %v4936 = vpack.c.bf16 %v4935, %v4934
        %s4937 = scalar_lea.vmem %s5, 32
        %v4938 = vld [vmem:[%s4937] sm:$0xf]
        %v4939 = vld [vmem:[%s4937 + $0x4] sm:$0xf]
        %v4940 = vld [vmem:[%s4937 + $0x8] sm:$0xf]
        %v4941 = vld [vmem:[%s4937 + $0xc] sm:$0xf]
        %v4942 = vld [vmem:[%s4937 + $0x10] sm:$0xf]
        %v4943 = vld [vmem:[%s4937 + $0x14] sm:$0xf]
        %v4944 = vld [vmem:[%s4937 + $0x18] sm:$0xf]
        %v4945 = vld [vmem:[%s4937 + $0x1c] sm:$0xf]
        %v4954 = vunpack.c.l.b16 %v4938
        %v4955 = vunpack.c.l.b16 %v4939
        %v4956 = vunpack.c.l.b16 %v4940
        %v4957 = vunpack.c.l.b16 %v4941
        %v4958 = vunpack.c.l.b16 %v4942
        %v4959 = vunpack.c.l.b16 %v4943
        %v4960 = vunpack.c.l.b16 %v4944
        %v4961 = vunpack.c.l.b16 %v4945
        %v4962 = vpack.c.b16 %v4955, %v4954
        %v4963 = vpack.c.b16 %v4957, %v4956
        %v4964 = vpack.c.b16 %v4959, %v4958
        %v4965 = vpack.c.b16 %v4961, %v4960
        %v4971 = vsel %vm4795, %v4936, 0
        %4973 = vmatpush.bf16.msra.mxu0 0
        %4974 = vmatpush.bf16.msra.mxu0 0
        %4975 = vmatpush.bf16.msra.mxu0 0
        %4976 = vmatpush.bf16.msra.mxu0 0
        %4977 = vmatpush.bf16.msra.mxu0 %v4965
        %4978 = vmatpush.bf16.msra.mxu0 %v4964
        %4979 = vmatpush.bf16.msra.mxu0 %v4963
        %4980 = vmatpush.bf16.msra.mxu0 %v4962
        %4981 = vmatmul.bf16.gmra.mxu0 %v4971
        %v4982 = vpop.f32.mrf.mxu0
        %v4983 = vadd.f32 0.0, %v4982
        %v4984 = vpop.f32.mrf.mxu0
        %v4985 = vadd.f32 0.0, %v4984
        %4986 = vdwg.mxu0
        %v4995 = vunpack.c.l.b16 %v4926
        %v4996 = vunpack.c.l.b16 %v4927
        %v4997 = vunpack.c.l.b16 %v4928
        %v4998 = vunpack.c.l.b16 %v4929
        %v4999 = vunpack.c.l.b16 %v4930
        %v5000 = vunpack.c.l.b16 %v4931
        %v5001 = vunpack.c.l.b16 %v4932
        %v5002 = vunpack.c.l.b16 %v4933
        %v5003 = vpack.c.b16 %v4996, %v4995
        %v5004 = vpack.c.b16 %v4998, %v4997
        %v5005 = vpack.c.b16 %v5000, %v4999
        %v5006 = vpack.c.b16 %v5002, %v5001
        %v5012 = vsel %vm4795, %v4925, 0
        %5014 = vmatpush.bf16.msra.mxu0 0
        %5015 = vmatpush.bf16.msra.mxu0 0
        %5016 = vmatpush.bf16.msra.mxu0 0
        %5017 = vmatpush.bf16.msra.mxu0 0
        %5018 = vmatpush.bf16.msra.mxu0 %v5006
        %5019 = vmatpush.bf16.msra.mxu0 %v5005
        %5020 = vmatpush.bf16.msra.mxu0 %v5004
        %5021 = vmatpush.bf16.msra.mxu0 %v5003
        %5022 = vmatmul.bf16.gmra.mxu0 %v5012
        %v5023 = vpop.f32.mrf.mxu0
        %v5024 = vadd.f32 %v4983, %v5023
        %v5025 = vpop.f32.mrf.mxu0
        %v5026 = vadd.f32 %v4985, %v5025
        %5027 = vdwg.mxu0
        %v5028 = vld [vmem:[#allocation6 + $0x5] sm:$0xff]
        %v5029 = vld [vmem:[#allocation6 + $0xd] sm:$0xff]
        %vm5030 = vcmp.le.s32.totalorder %v4917, 2
        %vm5031 = vcmp.le.s32.totalorder %v4918, 2
        %v5032 = vsel %vm5030, %v5028, 0.0
        %v5033 = vsel %vm5031, %v5029, 0.0
        %v5034 = vpack.c.bf16 %v5033, %v5032
        %s5035 = scalar_lea.vmem %s5, 64
        %v5036 = vld [vmem:[%s5035] sm:$0xf]
        %v5037 = vld [vmem:[%s5035 + $0x4] sm:$0xf]
        %v5038 = vld [vmem:[%s5035 + $0x8] sm:$0xf]
        %v5039 = vld [vmem:[%s5035 + $0xc] sm:$0xf]
        %v5040 = vld [vmem:[%s5035 + $0x10] sm:$0xf]
        %v5041 = vld [vmem:[%s5035 + $0x14] sm:$0xf]
        %v5042 = vld [vmem:[%s5035 + $0x18] sm:$0xf]
        %v5043 = vld [vmem:[%s5035 + $0x1c] sm:$0xf]
        %v5052 = vunpack.c.l.b16 %v5036
        %v5053 = vunpack.c.l.b16 %v5037
        %v5054 = vunpack.c.l.b16 %v5038
        %v5055 = vunpack.c.l.b16 %v5039
        %v5056 = vunpack.c.l.b16 %v5040
        %v5057 = vunpack.c.l.b16 %v5041
        %v5058 = vunpack.c.l.b16 %v5042
        %v5059 = vunpack.c.l.b16 %v5043
        %v5060 = vpack.c.b16 %v5053, %v5052
        %v5061 = vpack.c.b16 %v5055, %v5054
        %v5062 = vpack.c.b16 %v5057, %v5056
        %v5063 = vpack.c.b16 %v5059, %v5058
        %v5069 = vsel %vm4795, %v5034, 0
        %5071 = vmatpush.bf16.msra.mxu0 0
        %5072 = vmatpush.bf16.msra.mxu0 0
        %5073 = vmatpush.bf16.msra.mxu0 0
        %5074 = vmatpush.bf16.msra.mxu0 0
        %5075 = vmatpush.bf16.msra.mxu0 %v5063
        %5076 = vmatpush.bf16.msra.mxu0 %v5062
        %5077 = vmatpush.bf16.msra.mxu0 %v5061
        %5078 = vmatpush.bf16.msra.mxu0 %v5060
        %5079 = vmatmul.bf16.gmra.mxu0 %v5069
        %v5080 = vpop.f32.mrf.mxu0
        %v5081 = vadd.f32 0.0, %v5080
        %v5082 = vpop.f32.mrf.mxu0
        %v5083 = vadd.f32 0.0, %v5082
        %5084 = vdwg.mxu0
        %v5085 = vadd.f32 %v5024, %v5081
        %v5086 = vadd.f32 %v5026, %v5083
        %v5087 = vld [vmem:[#allocation6 + $0x7] sm:$0xff]
        %v5088 = vld [vmem:[#allocation6 + $0xf] sm:$0xff]
        %v5089 = vsel %vm4921, %v5087, 0.0
        %v5090 = vsel %vm4922, %v5088, 0.0
        %v5091 = vpack.c.bf16 %v5090, %v5089
        %s5092 = scalar_lea.vmem %s5, 96
        %v5093 = vld [vmem:[%s5092] sm:$0xf]
        %v5094 = vld [vmem:[%s5092 + $0x4] sm:$0xf]
        %v5095 = vld [vmem:[%s5092 + $0x8] sm:$0xf]
        %v5096 = vld [vmem:[%s5092 + $0xc] sm:$0xf]
        %v5097 = vld [vmem:[%s5092 + $0x10] sm:$0xf]
        %v5098 = vld [vmem:[%s5092 + $0x14] sm:$0xf]
        %v5099 = vld [vmem:[%s5092 + $0x18] sm:$0xf]
        %v5100 = vld [vmem:[%s5092 + $0x1c] sm:$0xf]
        %v5109 = vunpack.c.l.b16 %v5093
        %v5110 = vunpack.c.l.b16 %v5094
        %v5111 = vunpack.c.l.b16 %v5095
        %v5112 = vunpack.c.l.b16 %v5096
        %v5113 = vunpack.c.l.b16 %v5097
        %v5114 = vunpack.c.l.b16 %v5098
        %v5115 = vunpack.c.l.b16 %v5099
        %v5116 = vunpack.c.l.b16 %v5100
        %v5117 = vpack.c.b16 %v5110, %v5109
        %v5118 = vpack.c.b16 %v5112, %v5111
        %v5119 = vpack.c.b16 %v5114, %v5113
        %v5120 = vpack.c.b16 %v5116, %v5115
        %v5126 = vsel %vm4795, %v5091, 0
        %5128 = vmatpush.bf16.msra.mxu0 0
        %5129 = vmatpush.bf16.msra.mxu0 0
        %5130 = vmatpush.bf16.msra.mxu0 0
        %5131 = vmatpush.bf16.msra.mxu0 0
        %5132 = vmatpush.bf16.msra.mxu0 %v5120
        %5133 = vmatpush.bf16.msra.mxu0 %v5119
        %5134 = vmatpush.bf16.msra.mxu0 %v5118
        %5135 = vmatpush.bf16.msra.mxu0 %v5117
        %5136 = vmatmul.bf16.gmra.mxu0 %v5126
        %v5137 = vpop.f32.mrf.mxu0
        %v5138 = vadd.f32 0.0, %v5137
        %v5139 = vpop.f32.mrf.mxu0
        %v5140 = vadd.f32 0.0, %v5139
        %5141 = vdwg.mxu0
        %v5142 = vadd.f32 %v5085, %v5138
        %v5143 = vadd.f32 %v5086, %v5140
        %v5144 = vld [vmem:[#allocation6 + $0x8] sm:$0xff]
        %v5145 = vld [vmem:[#allocation6 + $0x10] sm:$0xff]
        %v5146 = vpack.c.bf16 %v5145, %v5144
        %s5147 = scalar_lea.vmem %s5, 128
        %v5148 = vld [vmem:[%s5147] sm:$0xf]
        %v5149 = vld [vmem:[%s5147 + $0x4] sm:$0xf]
        %v5150 = vld [vmem:[%s5147 + $0x8] sm:$0xf]
        %v5151 = vld [vmem:[%s5147 + $0xc] sm:$0xf]
        %v5152 = vld [vmem:[%s5147 + $0x10] sm:$0xf]
        %v5153 = vld [vmem:[%s5147 + $0x14] sm:$0xf]
        %v5154 = vld [vmem:[%s5147 + $0x18] sm:$0xf]
        %v5155 = vld [vmem:[%s5147 + $0x1c] sm:$0xf]
        %v5164 = vunpack.c.l.b16 %v5148
        %v5165 = vunpack.c.l.b16 %v5149
        %v5166 = vunpack.c.l.b16 %v5150
        %v5167 = vunpack.c.l.b16 %v5151
        %v5168 = vunpack.c.l.b16 %v5152
        %v5169 = vunpack.c.l.b16 %v5153
        %v5170 = vunpack.c.l.b16 %v5154
        %v5171 = vunpack.c.l.b16 %v5155
        %v5172 = vpack.c.b16 %v5165, %v5164
        %v5173 = vpack.c.b16 %v5167, %v5166
        %v5174 = vpack.c.b16 %v5169, %v5168
        %v5175 = vpack.c.b16 %v5171, %v5170
        %v5181 = vsel %vm4795, %v5146, 0
        %5183 = vmatpush.bf16.msra.mxu0 0
        %5184 = vmatpush.bf16.msra.mxu0 0
        %5185 = vmatpush.bf16.msra.mxu0 0
        %5186 = vmatpush.bf16.msra.mxu0 0
        %5187 = vmatpush.bf16.msra.mxu0 %v5175
        %5188 = vmatpush.bf16.msra.mxu0 %v5174
        %5189 = vmatpush.bf16.msra.mxu0 %v5173
        %5190 = vmatpush.bf16.msra.mxu0 %v5172
        %5191 = vmatmul.bf16.gmra.mxu0 %v5181
        %v5192 = vpop.f32.mrf.mxu0
        %v5193 = vadd.f32 0.0, %v5192
        %v5194 = vpop.f32.mrf.mxu0
        %v5195 = vadd.f32 0.0, %v5194
        %5196 = vdwg.mxu0
        %v5197 = vadd.f32 %v5142, %v5193
        %v5198 = vadd.f32 %v5143, %v5195
        %v5199 = vld [vmem:[#allocation6 + $0x9] sm:$0xff]
        %v5200 = vld [vmem:[#allocation6 + $0x11] sm:$0xff]
        %v5201 = vsel %vm5030, %v5199, 0.0
        %v5202 = vsel %vm5031, %v5200, 0.0
        %v5203 = vpack.c.bf16 %v5202, %v5201
        %s5204 = scalar_lea.vmem %s5, 160
        %v5205 = vld [vmem:[%s5204] sm:$0xf]
        %v5206 = vld [vmem:[%s5204 + $0x4] sm:$0xf]
        %v5207 = vld [vmem:[%s5204 + $0x8] sm:$0xf]
        %v5208 = vld [vmem:[%s5204 + $0xc] sm:$0xf]
        %v5209 = vld [vmem:[%s5204 + $0x10] sm:$0xf]
        %v5210 = vld [vmem:[%s5204 + $0x14] sm:$0xf]
        %v5211 = vld [vmem:[%s5204 + $0x18] sm:$0xf]
        %v5212 = vld [vmem:[%s5204 + $0x1c] sm:$0xf]
        %v5221 = vunpack.c.l.b16 %v5205
        %v5222 = vunpack.c.l.b16 %v5206
        %v5223 = vunpack.c.l.b16 %v5207
        %v5224 = vunpack.c.l.b16 %v5208
        %v5225 = vunpack.c.l.b16 %v5209
        %v5226 = vunpack.c.l.b16 %v5210
        %v5227 = vunpack.c.l.b16 %v5211
        %v5228 = vunpack.c.l.b16 %v5212
        %v5229 = vpack.c.b16 %v5222, %v5221
        %v5230 = vpack.c.b16 %v5224, %v5223
        %v5231 = vpack.c.b16 %v5226, %v5225
        %v5232 = vpack.c.b16 %v5228, %v5227
        %v5238 = vsel %vm4795, %v5203, 0
        %5240 = vmatpush.bf16.msra.mxu0 0
        %5241 = vmatpush.bf16.msra.mxu0 0
        %5242 = vmatpush.bf16.msra.mxu0 0
        %5243 = vmatpush.bf16.msra.mxu0 0
        %5244 = vmatpush.bf16.msra.mxu0 %v5232
        %5245 = vmatpush.bf16.msra.mxu0 %v5231
        %5246 = vmatpush.bf16.msra.mxu0 %v5230
        %5247 = vmatpush.bf16.msra.mxu0 %v5229
        %5248 = vmatmul.bf16.gmra.mxu0 %v5238
        %v5249 = vpop.f32.mrf.mxu0
        %v5250 = vadd.f32 0.0, %v5249
        %v5251 = vpop.f32.mrf.mxu0
        %v5252 = vadd.f32 0.0, %v5251
        %5253 = vdwg.mxu0
        %v5254 = vadd.f32 %v5197, %v5250
        %v5255 = vadd.f32 %v5198, %v5252
        %v5256 = vld [vmem:[#allocation6 + $0xb] sm:$0xff]
        %v5257 = vld [vmem:[#allocation6 + $0x13] sm:$0xff]
        %v5258 = vsel %vm4921, %v5256, 0.0
        %v5259 = vsel %vm4922, %v5257, 0.0
        %v5260 = vpack.c.bf16 %v5259, %v5258
        %s5261 = scalar_lea.vmem %s5, 192
        %v5262 = vld [vmem:[%s5261] sm:$0xf]
        %v5263 = vld [vmem:[%s5261 + $0x4] sm:$0xf]
        %v5264 = vld [vmem:[%s5261 + $0x8] sm:$0xf]
        %v5265 = vld [vmem:[%s5261 + $0xc] sm:$0xf]
        %v5266 = vld [vmem:[%s5261 + $0x10] sm:$0xf]
        %v5267 = vld [vmem:[%s5261 + $0x14] sm:$0xf]
        %v5268 = vld [vmem:[%s5261 + $0x18] sm:$0xf]
        %v5269 = vld [vmem:[%s5261 + $0x1c] sm:$0xf]
        %v5278 = vunpack.c.l.b16 %v5262
        %v5279 = vunpack.c.l.b16 %v5263
        %v5280 = vunpack.c.l.b16 %v5264
        %v5281 = vunpack.c.l.b16 %v5265
        %v5282 = vunpack.c.l.b16 %v5266
        %v5283 = vunpack.c.l.b16 %v5267
        %v5284 = vunpack.c.l.b16 %v5268
        %v5285 = vunpack.c.l.b16 %v5269
        %v5286 = vpack.c.b16 %v5279, %v5278
        %v5287 = vpack.c.b16 %v5281, %v5280
        %v5288 = vpack.c.b16 %v5283, %v5282
        %v5289 = vpack.c.b16 %v5285, %v5284
        %v5295 = vsel %vm4795, %v5260, 0
        %5297 = vmatpush.bf16.msra.mxu0 0
        %5298 = vmatpush.bf16.msra.mxu0 0
        %5299 = vmatpush.bf16.msra.mxu0 0
        %5300 = vmatpush.bf16.msra.mxu0 0
        %5301 = vmatpush.bf16.msra.mxu0 %v5289
        %5302 = vmatpush.bf16.msra.mxu0 %v5288
        %5303 = vmatpush.bf16.msra.mxu0 %v5287
        %5304 = vmatpush.bf16.msra.mxu0 %v5286
        %5305 = vmatmul.bf16.gmra.mxu0 %v5295
        %v5306 = vpop.f32.mrf.mxu0
        %v5307 = vadd.f32 0.0, %v5306
        %v5308 = vpop.f32.mrf.mxu0
        %v5309 = vadd.f32 0.0, %v5308
        %5310 = vdwg.mxu0
        %v5311 = vadd.f32 %v5254, %v5307
        %v5312 = vadd.f32 %v5255, %v5309
        %v5313 = vld [vmem:[#allocation6 + $0xc] sm:$0xff]
        %v5314 = vld [vmem:[#allocation6 + $0x14] sm:$0xff]
        %v5315 = vpack.c.bf16 %v5314, %v5313
        %s5316 = scalar_lea.vmem %s5, 224
        %v5317 = vld [vmem:[%s5316] sm:$0xf]
        %v5318 = vld [vmem:[%s5316 + $0x4] sm:$0xf]
        %v5319 = vld [vmem:[%s5316 + $0x8] sm:$0xf]
        %v5320 = vld [vmem:[%s5316 + $0xc] sm:$0xf]
        %v5321 = vld [vmem:[%s5316 + $0x10] sm:$0xf]
        %v5322 = vld [vmem:[%s5316 + $0x14] sm:$0xf]
        %v5323 = vld [vmem:[%s5316 + $0x18] sm:$0xf]
        %v5324 = vld [vmem:[%s5316 + $0x1c] sm:$0xf]
        %v5333 = vunpack.c.l.b16 %v5317
        %v5334 = vunpack.c.l.b16 %v5318
        %v5335 = vunpack.c.l.b16 %v5319
        %v5336 = vunpack.c.l.b16 %v5320
        %v5337 = vunpack.c.l.b16 %v5321
        %v5338 = vunpack.c.l.b16 %v5322
        %v5339 = vunpack.c.l.b16 %v5323
        %v5340 = vunpack.c.l.b16 %v5324
        %v5341 = vpack.c.b16 %v5334, %v5333
        %v5342 = vpack.c.b16 %v5336, %v5335
        %v5343 = vpack.c.b16 %v5338, %v5337
        %v5344 = vpack.c.b16 %v5340, %v5339
        %v5350 = vsel %vm4795, %v5315, 0
        %5352 = vmatpush.bf16.msra.mxu0 0
        %5353 = vmatpush.bf16.msra.mxu0 0
        %5354 = vmatpush.bf16.msra.mxu0 0
        %5355 = vmatpush.bf16.msra.mxu0 0
        %5356 = vmatpush.bf16.msra.mxu0 %v5344
        %5357 = vmatpush.bf16.msra.mxu0 %v5343
        %5358 = vmatpush.bf16.msra.mxu0 %v5342
        %5359 = vmatpush.bf16.msra.mxu0 %v5341
        %5360 = vmatmul.bf16.gmra.mxu0 %v5350
        %v5361 = vpop.f32.mrf.mxu0
        %v5362 = vadd.f32 0.0, %v5361
        %v5363 = vpop.f32.mrf.mxu0
        %v5364 = vadd.f32 0.0, %v5363
        %5365 = vdwg.mxu0
        %v5366 = vadd.f32 %v5311, %v5362
        %v5367 = vadd.f32 %v5312, %v5364
        %v5368 = vld [vmem:[#allocation6 + $0xd] sm:$0xff]
        %v5369 = vld [vmem:[#allocation6 + $0x15] sm:$0xff]
        %v5370 = vsel %vm5030, %v5368, 0.0
        %v5371 = vsel %vm5031, %v5369, 0.0
        %v5372 = vpack.c.bf16 %v5371, %v5370
        %s5373 = scalar_lea.vmem %s5, 256
        %v5374 = vld [vmem:[%s5373] sm:$0xf]
        %v5375 = vld [vmem:[%s5373 + $0x4] sm:$0xf]
        %v5376 = vld [vmem:[%s5373 + $0x8] sm:$0xf]
        %v5377 = vld [vmem:[%s5373 + $0xc] sm:$0xf]
        %v5378 = vld [vmem:[%s5373 + $0x10] sm:$0xf]
        %v5379 = vld [vmem:[%s5373 + $0x14] sm:$0xf]
        %v5380 = vld [vmem:[%s5373 + $0x18] sm:$0xf]
        %v5381 = vld [vmem:[%s5373 + $0x1c] sm:$0xf]
        %v5390 = vunpack.c.l.b16 %v5374
        %v5391 = vunpack.c.l.b16 %v5375
        %v5392 = vunpack.c.l.b16 %v5376
        %v5393 = vunpack.c.l.b16 %v5377
        %v5394 = vunpack.c.l.b16 %v5378
        %v5395 = vunpack.c.l.b16 %v5379
        %v5396 = vunpack.c.l.b16 %v5380
        %v5397 = vunpack.c.l.b16 %v5381
        %v5398 = vpack.c.b16 %v5391, %v5390
        %v5399 = vpack.c.b16 %v5393, %v5392
        %v5400 = vpack.c.b16 %v5395, %v5394
        %v5401 = vpack.c.b16 %v5397, %v5396
        %v5407 = vsel %vm4795, %v5372, 0
        %5409 = vmatpush.bf16.msra.mxu0 0
        %5410 = vmatpush.bf16.msra.mxu0 0
        %5411 = vmatpush.bf16.msra.mxu0 0
        %5412 = vmatpush.bf16.msra.mxu0 0
        %5413 = vmatpush.bf16.msra.mxu0 %v5401
        %5414 = vmatpush.bf16.msra.mxu0 %v5400
        %5415 = vmatpush.bf16.msra.mxu0 %v5399
        %5416 = vmatpush.bf16.msra.mxu0 %v5398
        %5417 = vmatmul.bf16.gmra.mxu0 %v5407
        %v5418 = vpop.f32.mrf.mxu0
        %v5419 = vadd.f32 0.0, %v5418
        %v5420 = vpop.f32.mrf.mxu0
        %v5421 = vadd.f32 0.0, %v5420
        %5422 = vdwg.mxu0
        %v5423 = vadd.f32 %v5366, %v5419
        %v5424 = vadd.f32 %v5367, %v5421
        %v5425 = vld [vmem:[%s6] sm:$0x1]
        %v5427 = vperm.slane %v5425, 0
        %v5429 = vadd.f32 %v5423, %v5427
        %v5430 = vadd.f32 %v5424, %v5427
        %v5431 = vmax.f32 %v5429, 0.0
        %v5432 = vmax.f32 %v5430, 0.0
        %v5433 = vadd.f32 %v5431, %v5432
        %v5434 = vrot.slane %v5433, 4
        %v5435 = vadd.f32 %v5433, %v5434
        %v5436 = vrot.slane %v5435, 2
        %v5437 = vadd.f32 %v5435, %v5436
        %v5438 = vrot.slane %v5437, 1
        %v5439 = vadd.f32 %v5437, %v5438
        %v5440 = vmul.f32 %v5439, 0.0625
        %v5441 = vld [vmem:[%s9] sm:$0xff]
        %v5442 = vld [vmem:[%s9 + $0x8] sm:$0xff]
        %v5443 = vld [vmem:[%s9 + $0x10] sm:$0xff]
        %v5444 = vld [vmem:[%s9 + $0x18] sm:$0xff]
        %v5445 = vld [vmem:[%s9 + $0x20] sm:$0xff]
        %v5446 = vld [vmem:[%s9 + $0x28] sm:$0xff]
        %v5447 = vld [vmem:[%s9 + $0x30] sm:$0xff]
        %v5448 = vld [vmem:[%s9 + $0x38] sm:$0xff]
        %v5449 = vld [vmem:[%s9 + $0x40] sm:$0xff]
        %v5450 = vld [vmem:[%s9 + $0x48] sm:$0xff]
        %v5451 = vld [vmem:[%s9 + $0x50] sm:$0xff]
        %v5452 = vld [vmem:[%s9 + $0x58] sm:$0xff]
        %v5453 = vld [vmem:[%s9 + $0x60] sm:$0xff]
        %v5454 = vld [vmem:[%s9 + $0x68] sm:$0xff]
        %v5455 = vld [vmem:[%s9 + $0x70] sm:$0xff]
        %v5456 = vld [vmem:[%s9 + $0x78] sm:$0xff]
        %v5457 = vld [vmem:[%s10] sm:$0x1]
        %5458 = vmatpush.msra.mxu0 %v5456
        %5459 = vmatpush.msra.mxu0 %v5455
        %5460 = vmatpush.msra.mxu0 %v5454
        %5461 = vmatpush.msra.mxu0 %v5453
        %5462 = vmatpush.msra.mxu0 %v5452
        %5463 = vmatpush.msra.mxu0 %v5451
        %5464 = vmatpush.msra.mxu0 %v5450
        %5465 = vmatpush.msra.mxu0 %v5449
        %5466 = vmatpush.msra.mxu0 %v5448
        %5467 = vmatpush.msra.mxu0 %v5447
        %5468 = vmatpush.msra.mxu0 %v5446
        %5469 = vmatpush.msra.mxu0 %v5445
        %5470 = vmatpush.msra.mxu0 %v5444
        %5471 = vmatpush.msra.mxu0 %v5443
        %5472 = vmatpush.msra.mxu0 %v5442
        %5473 = vmatpush.msra.mxu0 %v5441
        %5474 = vmatmul.f32.gmra.mxu0 %v5440
        %v5475 = vpop.f32.mrf.mxu0
        %v5476 = vadd.f32 %v5457, %v5475
        %5477 = vdwg.mxu0
        %v5478 = vmul.f32 %v5476, %v5476
        %vm5479 = vcmask 516096
        %v5480 = vsel %vm5479, %v5478, 0.0
        %5481 = vadd.xlane.f32.xlu0 %v5480
        %v5482 = vpop.xlane.xlu0 %5481
        %v5483 = vrsqrt.pop %v5482
        %v5484 = vmul.f32 %v5483, %v5482
        %v5485 = vmul.f32 %v5484, %v5483
        %v5486 = vmul.f32 0.5, %v5485
        %v5487 = vsub.f32 1.5, %v5486
        %v5488 = vmul.f32 %v5483, %v5487
        %v5489 = vmul.f32 %v5482, %v5488
        %vm5490 = vcmp.eq.f32.partialorder %v5482, inf
        %v5491 = vsel %vm5490, %v5482, %v5489
        %vm5492 = vcmp.eq.f32.partialorder %v5482, 0.0
        %v5493 = vand.u32 %v5482, 2147483648
        %v5494 = vsel %vm5492, %v5493, %v5491
        %v5495 = vmax.f32 %v5494, 1e-12
        %v5496 = vrcp.pop %v5495
        %v5497 = vmul.f32 %v5495, %v5496
        %v5498 = vsub.f32 1.0, %v5497
        %v5499 = vmul.f32 %v5496, %v5498
        %v5500 = vadd.f32 %v5496, %v5499
        %vm5501 = vweird.f32 %v5495
        %vm5502 = vweird.f32 %v5496
        %vm5503 = vmor %vm5501, %vm5502
        %v5504 = vsel %vm5503, %v5496, %v5500
        %v5505 = vand.u32 2147483647, %v5495
        %vm5506 = vcmp.eq.f32.partialorder %v5505, 8.507059e+37
        %v5507 = vand.u32 %v5495, 2147483648
        %v5508 = vor.u32 1.1754944e-38, %v5507
        %v5509 = vsel %vm5506, %v5508, %v5504
        %v5510 = vmul.f32 %v5476, %v5509
        %5511 = vst.msk [vmem:[%s378] sm:$0x1] %vm5479, %v5510
        %s5512 = sand.u32 %s269, 1
        %s5513 = scalar_lea.sflag [#allocation8], %s5512
        %s5514 = sand.u32 %s269, 1
        %s5515 = scalar_lea.vmem [#allocation7], %s5514
        // Predicated region
        $region65: #{mfcc_embedding_forward.1} parent=63 // pred_check
          %p5516 = pneg %p279
        $region66: #{mfcc_embedding_forward.1} parent=63 // pred_check_branch
          %5518 = sbr.rel (%p5516) target = $region68
        $region67: #{mfcc_embedding_forward.1} parent=63 // pred_region
          %5520 = vsyncadd %s5513, 0
          %s5521 = scalar_lea.hbm %s11, %s25
          %s5523 = sshll.u32 %s5515, 4
          %s5524 = int_to_ptr.vmem [resolvable:$true] %s5523
          %s5525 = sshll.u32 %s5521, 4
          %s5526 = int_to_ptr.hbm [resolvable:$true] %s5525
          %5528 = dma.vmem_to_hbm [thread:$0]  %s5524, 16, %s5526, %s5513
        $region68: #{mfcc_embedding_forward.1} parent=63 // pred_fallthru
          _
      $region64: #{mfcc_embedding_forward.1} parent=5 // pred_fallthru
        _
      %p5529 = scmp.le.s32.totalorder 2, %s20
      // Predicated region
      $region69: #{mfcc_embedding_forward.1} parent=5 // pred_check
        %p5530 = pneg %p5529
      $region70: #{mfcc_embedding_forward.1} parent=5 // pred_check_branch
        %5532 = sbr.rel (%p5530) target = $region72
      $region71: #{mfcc_embedding_forward.1} parent=5 // pred_region
        %s5533 = ssub.s32 %s20, 2
        // Predicated region
        $region73: #{mfcc_embedding_forward.1} parent=71 // pred_check
          %p5534 = pneg %p285
        $region74: #{mfcc_embedding_forward.1} parent=71 // pred_check_branch
          %5536 = sbr.rel (%p5534) target = $region76
        $region75: #{mfcc_embedding_forward.1} parent=71 // pred_region
          %s5537 = sand.u32 %s270, 1
          %s5538 = scalar_lea.sflag [#allocation8], %s5537
          %s5539 = sand.u32 %s270, 1
          %s5540 = scalar_lea.vmem [#allocation7], %s5539
          %5542 = dma.done %s5538, 16
        $region76: #{mfcc_embedding_forward.1} parent=71 // pred_fallthru
          _
      $region72: #{mfcc_embedding_forward.1} parent=5 // pred_fallthru
        _
    $region6: #{mfcc_embedding_forward.1} parent=1 // loop_footer
      %s24 = sadd.s32 1, %s20
    $region7: #{mfcc_embedding_forward.1} parent=1 // loop_footer_branch
      %19 = sbr.rel target = $region3
    $region8: #{mfcc_embedding_forward.1} parent=1 // loop_exit
      _
    %5543 = vsyncpa [#allocation8], 1
    %s5544 = scalar_lea.sflag [#allocation8], 1
    %5545 = vsyncpa %s5544, 1

</llo_original>
